<compile_context>
chip_gen: v6e
topology: v6e:2x2x1
jax: 0.10.0
libtpu: 0.0.40
codegen_flags: <defaults>
</compile_context>

<pallas_src>
import functools
import math
import numpy as np
import jax
import jax.numpy as jnp
from jax.experimental import pallas as pl
from jax.experimental.pallas import tpu as pltpu

# --------------------------- config (scaled-down) -----------------------------
BATCH = 2
IN_C = 64            # scaled stand-in for 512
OUT_C = 64           # scaled stand-in for 512
SPATIAL = 16         # power of two -> num_pools = log2(spatial) = 4 convs
CP = 128             # padded channel width (lane-dense last dim)
NEG_SLOPE = 0.01     # nn.LeakyReLU() default negative_slope
TM_CAP = 256


def _round_up(x, m):
    return ((x + m - 1) // m) * m


# ------------------------------ Pallas kernel ---------------------------------
def _mm_fused_kernel(a_ref, w_ref, b_ref, o_ref, *, neg_slope):
    """o = act(A @ W + b); A, W are bf16, accumulation + epilogue in f32."""
    acc = jnp.dot(a_ref[...], w_ref[...], preferred_element_type=jnp.float32)
    z = acc + b_ref[...]
    if neg_slope is not None:                       # static (trace-time) switch
        z = jnp.where(z >= 0.0, z, z * neg_slope)
    o_ref[...] = z.astype(o_ref.dtype)


def fused_matmul(a, w, b, *, neg_slope=None, out_dtype=jnp.bfloat16):
    """a:[M,K] (bf16) @ w:[K,N] (bf16) + b:[N] (f32), optional fused LeakyReLU.

    N must be a multiple of 128 (lane-dense output). Row tile adapts to M.
    """
    m, k = a.shape
    n = w.shape[1]
    tm = min(_round_up(m, 16), TM_CAP)              # adaptive row tile
    mp = _round_up(m, tm)
    if mp != m:
        a = jnp.pad(a, ((0, mp - m), (0, 0)))
    out = pl.pallas_call(
        functools.partial(_mm_fused_kernel, neg_slope=neg_slope),
        out_shape=jax.ShapeDtypeStruct((mp, n), out_dtype),
        grid=(mp // tm,),
        in_specs=[pl.BlockSpec((tm, k), lambda i: (i, 0)),
                  pl.BlockSpec((k, n), lambda i: (0, 0)),
                  pl.BlockSpec((1, n), lambda i: (0, 0))],
        out_specs=pl.BlockSpec((tm, n), lambda i: (i, 0)),
        compiler_params=pltpu.CompilerParams(dimension_semantics=("parallel",)),
    )(a, w, b.reshape(1, n))
    return out[:m]


# ------------------------------- XLA glue --------------------------------------
def extract_patches_s2(x):
    """x: NHWC (C = CP, bf16) -> im2col for 3x3 / stride 2 / pad 1.

    Returns ([B*Ho*Wo, 9*CP] bf16, (B, Ho, Wo)). Tap-major, channel-minor column
    ordering (matches the packed weight layout below).
    """
    bsz, h, w, c = x.shape
    xp = jnp.pad(x, ((0, 0), (1, 1), (1, 1), (0, 0)))
    ho = (h + 2 - 3) // 2 + 1
    wo = (w + 2 - 3) // 2 + 1
    cols = []
    for dy in range(3):
        for dx in range(3):
            cols.append(xp[:, dy:dy + 2 * (ho - 1) + 1:2,
                           dx:dx + 2 * (wo - 1) + 1:2, :])
    patches = jnp.concatenate(cols, axis=-1)        # [B, Ho, Wo, 9*CP]
    return patches.reshape(bsz * ho * wo, 9 * c), (bsz, ho, wo)


# ------------------------------- parameters ------------------------------------
def build_params(key, in_c, out_c, spatial):
    """Build GradualStyleBlock params, pre-packed / pre-padded for the kernels."""
    num_pools = int(np.log2(spatial))
    state = [key]

    def nk():
        state[0], sub = jax.random.split(state[0])
        return sub

    convs = []
    prev_c = in_c
    for _ in range(num_pools):
        wt = jax.random.normal(nk(), (out_c, prev_c, 3, 3), jnp.float32) / np.sqrt(prev_c * 9)
        bs = jax.random.normal(nk(), (out_c,), jnp.float32) * 0.01
        # (out,in,kh,kw) -> (kh,kw,in,out), zero-pad channels to CP, flatten taps.
        w4 = jnp.transpose(wt, (2, 3, 1, 0))
        w4 = jnp.pad(w4, ((0, 0), (0, 0), (0, CP - prev_c), (0, CP - out_c)))
        convs.append({'w': w4.reshape(9 * CP, CP).astype(jnp.bfloat16),
                      'b': jnp.pad(bs, (0, CP - out_c)).astype(jnp.float32)})
        prev_c = out_c

    # EqualLinear(out_c, out_c, lr_mul=1): weight = randn(out,in)/lr_mul,
    # effective W = (weight * (1/sqrt(in_dim)) * lr_mul).T, bias = zeros * lr_mul.
    lr_mul = 1.0
    lw = jax.random.normal(nk(), (out_c, out_c), jnp.float32) / lr_mul
    scale = (1.0 / math.sqrt(out_c)) * lr_mul
    lw_eff = (lw * scale).T                                      # scale folded (hoisted)
    lin_w = jnp.pad(lw_eff, ((0, CP - out_c), (0, CP - out_c))).astype(jnp.bfloat16)
    lin_b = jnp.pad(jnp.zeros((out_c,), jnp.float32) * lr_mul, (0, CP - out_c))
    return {'convs': convs, 'lin_w': lin_w, 'lin_b': lin_b}


# --------------------------------- forward -------------------------------------
def gradual_style_block_forward(params, x_nchw):
    """x_nchw: [B, in_c, H, W] -> [B, out_c]   (== GradualStyleBlock.forward)."""
    x = jnp.transpose(x_nchw, (0, 2, 3, 1)).astype(jnp.float32)          # NHWC
    x = jnp.pad(x, ((0, 0), (0, 0), (0, 0), (0, CP - IN_C))).astype(jnp.bfloat16)

    # convs: Conv2d(3x3, stride 2, pad 1) + LeakyReLU, fused per layer.
    for cv in params['convs']:
        patches, (bsz, ho, wo) = extract_patches_s2(x)
        y = fused_matmul(patches, cv['w'], cv['b'],
                         neg_slope=NEG_SLOPE, out_dtype=jnp.bfloat16)
        x = y.reshape(bsz, ho, wo, CP)

    # spatial is 1x1 here -> equals PyTorch x.view(-1, out_c) (padded channels are 0)
    feat = x.reshape(-1, CP)
    out = fused_matmul(feat, params['lin_w'], params['lin_b'],
                       neg_slope=None, out_dtype=jnp.float32)            # EqualLinear
    return out[:, :OUT_C]


# ----------------------------------- main ---------------------------------------
if __name__ == "__main__":
    root = jax.random.PRNGKey(0)
    pkey, xkey = jax.random.split(root)
    params = build_params(pkey, IN_C, OUT_C, SPATIAL)
    x = jax.random.normal(xkey, (BATCH, IN_C, SPATIAL, SPATIAL), jnp.float32)

    fwd = jax.jit(gradual_style_block_forward)
    out = fwd(params, x)
    jax.block_until_ready(out)

    assert out.shape == (BATCH, OUT_C)
    assert bool(jnp.all(jnp.isfinite(out)))
    print("KERNEL_OK")
</pallas_src>

<mosaic_0001>
module attributes {stable_mosaic.version = 11 : i64} {
  func.func @_mm_fused_kernel(%arg0: i32, %arg1: memref<128x1152xbf16, #tpu.memory_space<vmem>>, %arg2: memref<1152x128xbf16, #tpu.memory_space<vmem>>, %arg3: memref<1x128xf32, #tpu.memory_space<vmem>>, %arg4: memref<128x128xbf16, #tpu.memory_space<vmem>>) attributes {dimension_semantics = [#tpu.dimension_semantics<parallel>], iteration_bounds = array<i64: 1>, scalar_prefetch = 0 : i64, scratch_operands = 0 : i64, tpu.core_type = #tpu.core_type<tc>, window_params = [{transform_indices = @transform_0, window_bounds = array<i64: 128, 1152>}, {pipeline_mode = #tpu.pipeline_mode<synchronous>, transform_indices = @transform_1, window_bounds = array<i64: 1152, 128>}, {pipeline_mode = #tpu.pipeline_mode<synchronous>, transform_indices = @transform_2, window_bounds = array<i64: 1, 128>}, {transform_indices = @transform_3, window_bounds = array<i64: 128, 128>}]} {
    %c0 = arith.constant 0 : index
    %c0_0 = arith.constant 0 : index
    %0 = vector.load %arg1[%c0, %c0_0] : memref<128x1152xbf16, #tpu.memory_space<vmem>>, vector<128x1152xbf16>
    %c0_1 = arith.constant 0 : index
    %c0_2 = arith.constant 0 : index
    %1 = vector.load %arg2[%c0_1, %c0_2] : memref<1152x128xbf16, #tpu.memory_space<vmem>>, vector<1152x128xbf16>
    %cst = arith.constant dense<0.000000e+00> : vector<128x128xf32>
    %2 = tpu.matmul %0, %1, %cst {dimension_numbers = #tpu.dot_dimension_numbers<[1], [0], [0], [1], [0, 0, 1, 1], [], []>} : vector<128x1152xbf16>, vector<1152x128xbf16>, vector<128x128xf32> -> vector<128x128xf32>
    %c0_3 = arith.constant 0 : index
    %c0_4 = arith.constant 0 : index
    %3 = vector.load %arg3[%c0_3, %c0_4] : memref<1x128xf32, #tpu.memory_space<vmem>>, vector<1x128xf32>
    %4 = vector.broadcast %3 : vector<1x128xf32> to vector<128x128xf32>
    %5 = arith.addf %2, %4 : vector<128x128xf32>
    %cst_5 = arith.constant 0.000000e+00 : f32
    %6 = vector.broadcast %cst_5 : f32 to vector<128x128xf32>
    %7 = arith.cmpf oge, %5, %6 : vector<128x128xf32>
    %cst_6 = arith.constant 0.00999999977 : f32
    %8 = vector.broadcast %cst_6 : f32 to vector<128x128xf32>
    %9 = arith.mulf %5, %8 : vector<128x128xf32>
    %10 = arith.select %7, %5, %9 : vector<128x128xi1>, vector<128x128xf32>
    %11 = arith.truncf %10 : vector<128x128xf32> to vector<128x128xbf16>
    %c0_7 = arith.constant 0 : index
    %c0_8 = arith.constant 0 : index
    %12 = vector.load %arg4[%c0_7, %c0_8] : memref<128x128xbf16, #tpu.memory_space<vmem>>, vector<128x128xbf16>
    tpu.vector_store %arg4[%c0_7, %c0_8], %11 {strides = array<i32>} : memref<128x128xbf16, #tpu.memory_space<vmem>>, vector<128x128xbf16>,
    return
  }
  func.func @transform_0(%arg0: i32) -> (i32, i32) {
    %c0_i32 = arith.constant 0 : i32
    %c0_i32_0 = arith.constant 0 : i32
    return %arg0, %c0_i32 : i32, i32
  }
  func.func @transform_1(%arg0: i32) -> (i32, i32) {
    %c0_i32 = arith.constant 0 : i32
    %c0_i32_0 = arith.constant 0 : i32
    %c0_i32_1 = arith.constant 0 : i32
    return %c0_i32, %c0_i32_0 : i32, i32
  }
  func.func @transform_2(%arg0: i32) -> (i32, i32) {
    %c0_i32 = arith.constant 0 : i32
    %c0_i32_0 = arith.constant 0 : i32
    %c0_i32_1 = arith.constant 0 : i32
    return %c0_i32, %c0_i32_0 : i32, i32
  }
  func.func @transform_3(%arg0: i32) -> (i32, i32) {
    %c0_i32 = arith.constant 0 : i32
    %c0_i32_0 = arith.constant 0 : i32
    return %arg0, %c0_i32 : i32, i32
  }
}

module attributes {stable_mosaic.version = 11 : i64} {
  func.func @_mm_fused_kernel(%arg0: i32, %arg1: memref<32x1152xbf16, #tpu.memory_space<vmem>>, %arg2: memref<1152x128xbf16, #tpu.memory_space<vmem>>, %arg3: memref<1x128xf32, #tpu.memory_space<vmem>>, %arg4: memref<32x128xbf16, #tpu.memory_space<vmem>>) attributes {dimension_semantics = [#tpu.dimension_semantics<parallel>], iteration_bounds = array<i64: 1>, scalar_prefetch = 0 : i64, scratch_operands = 0 : i64, tpu.core_type = #tpu.core_type<tc>, window_params = [{transform_indices = @transform_0, window_bounds = array<i64: 32, 1152>}, {pipeline_mode = #tpu.pipeline_mode<synchronous>, transform_indices = @transform_1, window_bounds = array<i64: 1152, 128>}, {pipeline_mode = #tpu.pipeline_mode<synchronous>, transform_indices = @transform_2, window_bounds = array<i64: 1, 128>}, {transform_indices = @transform_3, window_bounds = array<i64: 32, 128>}]} {
    %c0 = arith.constant 0 : index
    %c0_0 = arith.constant 0 : index
    %0 = vector.load %arg1[%c0, %c0_0] : memref<32x1152xbf16, #tpu.memory_space<vmem>>, vector<32x1152xbf16>
    %c0_1 = arith.constant 0 : index
    %c0_2 = arith.constant 0 : index
    %1 = vector.load %arg2[%c0_1, %c0_2] : memref<1152x128xbf16, #tpu.memory_space<vmem>>, vector<1152x128xbf16>
    %cst = arith.constant dense<0.000000e+00> : vector<32x128xf32>
    %2 = tpu.matmul %0, %1, %cst {dimension_numbers = #tpu.dot_dimension_numbers<[1], [0], [0], [1], [0, 0, 1, 1], [], []>} : vector<32x1152xbf16>, vector<1152x128xbf16>, vector<32x128xf32> -> vector<32x128xf32>
    %c0_3 = arith.constant 0 : index
    %c0_4 = arith.constant 0 : index
    %3 = vector.load %arg3[%c0_3, %c0_4] : memref<1x128xf32, #tpu.memory_space<vmem>>, vector<1x128xf32>
    %4 = vector.broadcast %3 : vector<1x128xf32> to vector<32x128xf32>
    %5 = arith.addf %2, %4 : vector<32x128xf32>
    %cst_5 = arith.constant 0.000000e+00 : f32
    %6 = vector.broadcast %cst_5 : f32 to vector<32x128xf32>
    %7 = arith.cmpf oge, %5, %6 : vector<32x128xf32>
    %cst_6 = arith.constant 0.00999999977 : f32
    %8 = vector.broadcast %cst_6 : f32 to vector<32x128xf32>
    %9 = arith.mulf %5, %8 : vector<32x128xf32>
    %10 = arith.select %7, %5, %9 : vector<32x128xi1>, vector<32x128xf32>
    %11 = arith.truncf %10 : vector<32x128xf32> to vector<32x128xbf16>
    %c0_7 = arith.constant 0 : index
    %c0_8 = arith.constant 0 : index
    %12 = vector.load %arg4[%c0_7, %c0_8] : memref<32x128xbf16, #tpu.memory_space<vmem>>, vector<32x128xbf16>
    tpu.vector_store %arg4[%c0_7, %c0_8], %11 {strides = array<i32>} : memref<32x128xbf16, #tpu.memory_space<vmem>>, vector<32x128xbf16>,
    return
  }
  func.func @transform_0(%arg0: i32) -> (i32, i32) {
    %c0_i32 = arith.constant 0 : i32
    %c0_i32_0 = arith.constant 0 : i32
    return %arg0, %c0_i32 : i32, i32
  }
  func.func @transform_1(%arg0: i32) -> (i32, i32) {
    %c0_i32 = arith.constant 0 : i32
    %c0_i32_0 = arith.constant 0 : i32
    %c0_i32_1 = arith.constant 0 : i32
    return %c0_i32, %c0_i32_0 : i32, i32
  }
  func.func @transform_2(%arg0: i32) -> (i32, i32) {
    %c0_i32 = arith.constant 0 : i32
    %c0_i32_0 = arith.constant 0 : i32
    %c0_i32_1 = arith.constant 0 : i32
    return %c0_i32, %c0_i32_0 : i32, i32
  }
  func.func @transform_3(%arg0: i32) -> (i32, i32) {
    %c0_i32 = arith.constant 0 : i32
    %c0_i32_0 = arith.constant 0 : i32
    return %arg0, %c0_i32 : i32, i32
  }
}

module attributes {stable_mosaic.version = 11 : i64} {
  func.func @_mm_fused_kernel(%arg0: i32, %arg1: memref<16x1152xbf16, #tpu.memory_space<vmem>>, %arg2: memref<1152x128xbf16, #tpu.memory_space<vmem>>, %arg3: memref<1x128xf32, #tpu.memory_space<vmem>>, %arg4: memref<16x128xbf16, #tpu.memory_space<vmem>>) attributes {dimension_semantics = [#tpu.dimension_semantics<parallel>], iteration_bounds = array<i64: 1>, scalar_prefetch = 0 : i64, scratch_operands = 0 : i64, tpu.core_type = #tpu.core_type<tc>, window_params = [{transform_indices = @transform_0, window_bounds = array<i64: 16, 1152>}, {pipeline_mode = #tpu.pipeline_mode<synchronous>, transform_indices = @transform_1, window_bounds = array<i64: 1152, 128>}, {pipeline_mode = #tpu.pipeline_mode<synchronous>, transform_indices = @transform_2, window_bounds = array<i64: 1, 128>}, {transform_indices = @transform_3, window_bounds = array<i64: 16, 128>}]} {
    %c0 = arith.constant 0 : index
    %c0_0 = arith.constant 0 : index
    %0 = vector.load %arg1[%c0, %c0_0] : memref<16x1152xbf16, #tpu.memory_space<vmem>>, vector<16x1152xbf16>
    %c0_1 = arith.constant 0 : index
    %c0_2 = arith.constant 0 : index
    %1 = vector.load %arg2[%c0_1, %c0_2] : memref<1152x128xbf16, #tpu.memory_space<vmem>>, vector<1152x128xbf16>
    %cst = arith.constant dense<0.000000e+00> : vector<16x128xf32>
    %2 = tpu.matmul %0, %1, %cst {dimension_numbers = #tpu.dot_dimension_numbers<[1], [0], [0], [1], [0, 0, 1, 1], [], []>} : vector<16x1152xbf16>, vector<1152x128xbf16>, vector<16x128xf32> -> vector<16x128xf32>
    %c0_3 = arith.constant 0 : index
    %c0_4 = arith.constant 0 : index
    %3 = vector.load %arg3[%c0_3, %c0_4] : memref<1x128xf32, #tpu.memory_space<vmem>>, vector<1x128xf32>
    %4 = vector.broadcast %3 : vector<1x128xf32> to vector<16x128xf32>
    %5 = arith.addf %2, %4 : vector<16x128xf32>
    %cst_5 = arith.constant 0.000000e+00 : f32
    %6 = vector.broadcast %cst_5 : f32 to vector<16x128xf32>
    %7 = arith.cmpf oge, %5, %6 : vector<16x128xf32>
    %cst_6 = arith.constant 0.00999999977 : f32
    %8 = vector.broadcast %cst_6 : f32 to vector<16x128xf32>
    %9 = arith.mulf %5, %8 : vector<16x128xf32>
    %10 = arith.select %7, %5, %9 : vector<16x128xi1>, vector<16x128xf32>
    %11 = arith.truncf %10 : vector<16x128xf32> to vector<16x128xbf16>
    %c0_7 = arith.constant 0 : index
    %c0_8 = arith.constant 0 : index
    %12 = vector.load %arg4[%c0_7, %c0_8] : memref<16x128xbf16, #tpu.memory_space<vmem>>, vector<16x128xbf16>
    tpu.vector_store %arg4[%c0_7, %c0_8], %11 {strides = array<i32>} : memref<16x128xbf16, #tpu.memory_space<vmem>>, vector<16x128xbf16>,
    return
  }
  func.func @transform_0(%arg0: i32) -> (i32, i32) {
    %c0_i32 = arith.constant 0 : i32
    %c0_i32_0 = arith.constant 0 : i32
    return %arg0, %c0_i32 : i32, i32
  }
  func.func @transform_1(%arg0: i32) -> (i32, i32) {
    %c0_i32 = arith.constant 0 : i32
    %c0_i32_0 = arith.constant 0 : i32
    %c0_i32_1 = arith.constant 0 : i32
    return %c0_i32, %c0_i32_0 : i32, i32
  }
  func.func @transform_2(%arg0: i32) -> (i32, i32) {
    %c0_i32 = arith.constant 0 : i32
    %c0_i32_0 = arith.constant 0 : i32
    %c0_i32_1 = arith.constant 0 : i32
    return %c0_i32, %c0_i32_0 : i32, i32
  }
  func.func @transform_3(%arg0: i32) -> (i32, i32) {
    %c0_i32 = arith.constant 0 : i32
    %c0_i32_0 = arith.constant 0 : i32
    return %arg0, %c0_i32 : i32, i32
  }
}

module attributes {stable_mosaic.version = 11 : i64} {
  func.func @_mm_fused_kernel(%arg0: i32, %arg1: memref<16x128xbf16, #tpu.memory_space<vmem>>, %arg2: memref<128x128xbf16, #tpu.memory_space<vmem>>, %arg3: memref<1x128xf32, #tpu.memory_space<vmem>>, %arg4: memref<16x128xf32, #tpu.memory_space<vmem>>) attributes {dimension_semantics = [#tpu.dimension_semantics<parallel>], iteration_bounds = array<i64: 1>, scalar_prefetch = 0 : i64, scratch_operands = 0 : i64, tpu.core_type = #tpu.core_type<tc>, window_params = [{transform_indices = @transform_0, window_bounds = array<i64: 16, 128>}, {pipeline_mode = #tpu.pipeline_mode<synchronous>, transform_indices = @transform_1, window_bounds = array<i64: 128, 128>}, {pipeline_mode = #tpu.pipeline_mode<synchronous>, transform_indices = @transform_2, window_bounds = array<i64: 1, 128>}, {transform_indices = @transform_3, window_bounds = array<i64: 16, 128>}]} {
    %c0 = arith.constant 0 : index
    %c0_0 = arith.constant 0 : index
    %0 = vector.load %arg1[%c0, %c0_0] : memref<16x128xbf16, #tpu.memory_space<vmem>>, vector<16x128xbf16>
    %c0_1 = arith.constant 0 : index
    %c0_2 = arith.constant 0 : index
    %1 = vector.load %arg2[%c0_1, %c0_2] : memref<128x128xbf16, #tpu.memory_space<vmem>>, vector<128x128xbf16>
    %cst = arith.constant dense<0.000000e+00> : vector<16x128xf32>
    %2 = tpu.matmul %0, %1, %cst {dimension_numbers = #tpu.dot_dimension_numbers<[1], [0], [0], [1], [0, 0, 1, 1], [], []>} : vector<16x128xbf16>, vector<128x128xbf16>, vector<16x128xf32> -> vector<16x128xf32>
    %c0_3 = arith.constant 0 : index
    %c0_4 = arith.constant 0 : index
    %3 = vector.load %arg3[%c0_3, %c0_4] : memref<1x128xf32, #tpu.memory_space<vmem>>, vector<1x128xf32>
    %4 = vector.broadcast %3 : vector<1x128xf32> to vector<16x128xf32>
    %5 = arith.addf %2, %4 : vector<16x128xf32>
    %c0_5 = arith.constant 0 : index
    %c0_6 = arith.constant 0 : index
    %6 = vector.load %arg4[%c0_5, %c0_6] : memref<16x128xf32, #tpu.memory_space<vmem>>, vector<16x128xf32>
    tpu.vector_store %arg4[%c0_5, %c0_6], %5 {strides = array<i32>} : memref<16x128xf32, #tpu.memory_space<vmem>>, vector<16x128xf32>,
    return
  }
  func.func @transform_0(%arg0: i32) -> (i32, i32) {
    %c0_i32 = arith.constant 0 : i32
    %c0_i32_0 = arith.constant 0 : i32
    return %arg0, %c0_i32 : i32, i32
  }
  func.func @transform_1(%arg0: i32) -> (i32, i32) {
    %c0_i32 = arith.constant 0 : i32
    %c0_i32_0 = arith.constant 0 : i32
    %c0_i32_1 = arith.constant 0 : i32
    return %c0_i32, %c0_i32_0 : i32, i32
  }
  func.func @transform_2(%arg0: i32) -> (i32, i32) {
    %c0_i32 = arith.constant 0 : i32
    %c0_i32_0 = arith.constant 0 : i32
    %c0_i32_1 = arith.constant 0 : i32
    return %c0_i32, %c0_i32_0 : i32, i32
  }
  func.func @transform_3(%arg0: i32) -> (i32, i32) {
    %c0_i32 = arith.constant 0 : i32
    %c0_i32_0 = arith.constant 0 : i32
    return %arg0, %c0_i32 : i32, i32
  }
}

</mosaic_0001>

<llo_original>
// kernel: gradual_style_block_forward.6
$region0: #{gradual_style_block_forward.6}
  #allocation0 [shape = 'u32[]', space=smem, size = 0x4, offset = 0x4, fixed_abs, tag = 'smem constant byte address 0x4 - core index']
  #allocation1 [shape = 'u32[144,128]{1,0:T(1,128)}', space=vmem, size = 0x12000, scoped, tag = 'internal scratch']
  %s0 = inlined_call_operand.vmem [shape: bf16[32,1152], index: 0, kind: input, shape index: {}]
  %s1 = inlined_call_operand.vmem [shape: bf16[1152,128], index: 1, kind: input, shape index: {}]
  %s2 = inlined_call_operand.vmem [shape: f32[1,128], index: 2, kind: input, shape index: {}]
  %s3 = inlined_call_operand.vmem [shape: bf16[32,128], index: 3, kind: output, shape index: {}]
  %s4 = sld [smem:[#allocation0]]
  $region22: #{gradual_style_block_forward.6} parent=0
    _
  %s6 = ssub.s32 1, %s4
  %s7 = scalar_select 0, %s6, %s4
  // Predicated region
  $region2: #{gradual_style_block_forward.6} parent=0 // pred_check
    _
  $region3: #{gradual_style_block_forward.6} parent=0 // pred_check_branch
    %9 = sbr.rel (0) target = $region5
  $region4: #{gradual_style_block_forward.6} parent=0 // pred_region
    _
  $region5: #{gradual_style_block_forward.6} parent=0 // pred_fallthru
    _
  // Predicated region
  $region6: #{gradual_style_block_forward.6} parent=0 // pred_check
    _
  $region7: #{gradual_style_block_forward.6} parent=0 // pred_check_branch
    %11 = sbr.rel (0) target = $region9
  $region8: #{gradual_style_block_forward.6} parent=0 // pred_region
    _
  $region9: #{gradual_style_block_forward.6} parent=0 // pred_fallthru
    _
  // Predicated region
  $region10: #{gradual_style_block_forward.6} parent=0 // pred_check
    _
  $region11: #{gradual_style_block_forward.6} parent=0 // pred_check_branch
    %13 = sbr.rel (0) target = $region13
  $region12: #{gradual_style_block_forward.6} parent=0 // pred_region
    _
  $region13: #{gradual_style_block_forward.6} parent=0 // pred_fallthru
    _
  %v15 = vld [vmem:[%s0] sm:$0xff]
  %v16 = vld [vmem:[%s0 + $0x8] sm:$0xff]
  %v17 = vld [vmem:[%s0 + $0x10] sm:$0xff]
  %v18 = vld [vmem:[%s0 + $0x18] sm:$0xff]
  %v19 = vld [vmem:[%s0 + $0x20] sm:$0xf]
  %v20 = vld [vmem:[%s0 + $0x24] sm:$0xff]
  %v21 = vld [vmem:[%s0 + $0x2c] sm:$0xff]
  %v22 = vld [vmem:[%s0 + $0x34] sm:$0xff]
  %v23 = vld [vmem:[%s0 + $0x3c] sm:$0xff]
  %v24 = vld [vmem:[%s0 + $0x44] sm:$0xf]
  %v25 = vld [vmem:[%s0 + $0x48] sm:$0xff]
  %v26 = vld [vmem:[%s0 + $0x50] sm:$0xff]
  %v27 = vld [vmem:[%s0 + $0x58] sm:$0xff]
  %v28 = vld [vmem:[%s0 + $0x60] sm:$0xff]
  %v29 = vld [vmem:[%s0 + $0x68] sm:$0xf]
  %v30 = vld [vmem:[%s0 + $0x6c] sm:$0xff]
  %v31 = vld [vmem:[%s0 + $0x74] sm:$0xff]
  %v32 = vld [vmem:[%s0 + $0x7c] sm:$0xff]
  %v33 = vld [vmem:[%s0 + $0x84] sm:$0xff]
  %v34 = vld [vmem:[%s0 + $0x8c] sm:$0xf]
  %v35 = vld [vmem:[%s1] sm:$0xf]
  %v36 = vld [vmem:[%s1 + $0x4] sm:$0xf]
  %v37 = vld [vmem:[%s1 + $0x8] sm:$0xf]
  %v38 = vld [vmem:[%s1 + $0xc] sm:$0xf]
  %v39 = vld [vmem:[%s1 + $0x10] sm:$0xf]
  %v40 = vld [vmem:[%s1 + $0x14] sm:$0xf]
  %v41 = vld [vmem:[%s1 + $0x18] sm:$0xf]
  %v42 = vld [vmem:[%s1 + $0x1c] sm:$0xf]
  %v43 = vld [vmem:[%s1 + $0x20] sm:$0xf]
  %v44 = vld [vmem:[%s1 + $0x24] sm:$0xf]
  %v45 = vld [vmem:[%s1 + $0x28] sm:$0xf]
  %v46 = vld [vmem:[%s1 + $0x2c] sm:$0xf]
  %v47 = vld [vmem:[%s1 + $0x30] sm:$0xf]
  %v48 = vld [vmem:[%s1 + $0x34] sm:$0xf]
  %v49 = vld [vmem:[%s1 + $0x38] sm:$0xf]
  %v50 = vld [vmem:[%s1 + $0x3c] sm:$0xf]
  %v51 = vld [vmem:[%s1 + $0x40] sm:$0xf]
  %v52 = vld [vmem:[%s1 + $0x44] sm:$0xf]
  %v53 = vld [vmem:[%s1 + $0x48] sm:$0xf]
  %v54 = vld [vmem:[%s1 + $0x4c] sm:$0xf]
  %v55 = vld [vmem:[%s1 + $0x50] sm:$0xf]
  %v56 = vld [vmem:[%s1 + $0x54] sm:$0xf]
  %v57 = vld [vmem:[%s1 + $0x58] sm:$0xf]
  %v58 = vld [vmem:[%s1 + $0x5c] sm:$0xf]
  %v59 = vld [vmem:[%s1 + $0x60] sm:$0xf]
  %v60 = vld [vmem:[%s1 + $0x64] sm:$0xf]
  %v61 = vld [vmem:[%s1 + $0x68] sm:$0xf]
  %v62 = vld [vmem:[%s1 + $0x6c] sm:$0xf]
  %v63 = vld [vmem:[%s1 + $0x70] sm:$0xf]
  %v64 = vld [vmem:[%s1 + $0x74] sm:$0xf]
  %v65 = vld [vmem:[%s1 + $0x78] sm:$0xf]
  %v66 = vld [vmem:[%s1 + $0x7c] sm:$0xf]
  %v67 = vld [vmem:[%s1 + $0x80] sm:$0xf]
  %v68 = vld [vmem:[%s1 + $0x84] sm:$0xf]
  %v69 = vld [vmem:[%s1 + $0x88] sm:$0xf]
  %v70 = vld [vmem:[%s1 + $0x8c] sm:$0xf]
  %v71 = vld [vmem:[%s1 + $0x90] sm:$0xf]
  %v72 = vld [vmem:[%s1 + $0x94] sm:$0xf]
  %v73 = vld [vmem:[%s1 + $0x98] sm:$0xf]
  %v74 = vld [vmem:[%s1 + $0x9c] sm:$0xf]
  %v75 = vld [vmem:[%s1 + $0xa0] sm:$0xf]
  %v76 = vld [vmem:[%s1 + $0xa4] sm:$0xf]
  %v77 = vld [vmem:[%s1 + $0xa8] sm:$0xf]
  %v78 = vld [vmem:[%s1 + $0xac] sm:$0xf]
  %v79 = vld [vmem:[%s1 + $0xb0] sm:$0xf]
  %v80 = vld [vmem:[%s1 + $0xb4] sm:$0xf]
  %v81 = vld [vmem:[%s1 + $0xb8] sm:$0xf]
  %v82 = vld [vmem:[%s1 + $0xbc] sm:$0xf]
  %v83 = vld [vmem:[%s1 + $0xc0] sm:$0xf]
  %v84 = vld [vmem:[%s1 + $0xc4] sm:$0xf]
  %v85 = vld [vmem:[%s1 + $0xc8] sm:$0xf]
  %v86 = vld [vmem:[%s1 + $0xcc] sm:$0xf]
  %v87 = vld [vmem:[%s1 + $0xd0] sm:$0xf]
  %v88 = vld [vmem:[%s1 + $0xd4] sm:$0xf]
  %v89 = vld [vmem:[%s1 + $0xd8] sm:$0xf]
  %v90 = vld [vmem:[%s1 + $0xdc] sm:$0xf]
  %v91 = vld [vmem:[%s1 + $0xe0] sm:$0xf]
  %v92 = vld [vmem:[%s1 + $0xe4] sm:$0xf]
  %v93 = vld [vmem:[%s1 + $0xe8] sm:$0xf]
  %v94 = vld [vmem:[%s1 + $0xec] sm:$0xf]
  %v95 = vld [vmem:[%s1 + $0xf0] sm:$0xf]
  %v96 = vld [vmem:[%s1 + $0xf4] sm:$0xf]
  %v97 = vld [vmem:[%s1 + $0xf8] sm:$0xf]
  %v98 = vld [vmem:[%s1 + $0xfc] sm:$0xf]
  %v99 = vld [vmem:[%s1 + $0x100] sm:$0xf]
  %v100 = vld [vmem:[%s1 + $0x104] sm:$0xf]
  %v101 = vld [vmem:[%s1 + $0x108] sm:$0xf]
  %v102 = vld [vmem:[%s1 + $0x10c] sm:$0xf]
  %v103 = vld [vmem:[%s1 + $0x110] sm:$0xf]
  %v104 = vld [vmem:[%s1 + $0x114] sm:$0xf]
  %v105 = vld [vmem:[%s1 + $0x118] sm:$0xf]
  %v106 = vld [vmem:[%s1 + $0x11c] sm:$0xf]
  %v107 = vld [vmem:[%s1 + $0x120] sm:$0xf]
  %v108 = vld [vmem:[%s1 + $0x124] sm:$0xf]
  %v109 = vld [vmem:[%s1 + $0x128] sm:$0xf]
  %v110 = vld [vmem:[%s1 + $0x12c] sm:$0xf]
  %v111 = vld [vmem:[%s1 + $0x130] sm:$0xf]
  %v112 = vld [vmem:[%s1 + $0x134] sm:$0xf]
  %v113 = vld [vmem:[%s1 + $0x138] sm:$0xf]
  %v114 = vld [vmem:[%s1 + $0x13c] sm:$0xf]
  %v115 = vld [vmem:[%s1 + $0x140] sm:$0xf]
  %v116 = vld [vmem:[%s1 + $0x144] sm:$0xf]
  %v117 = vld [vmem:[%s1 + $0x148] sm:$0xf]
  %v118 = vld [vmem:[%s1 + $0x14c] sm:$0xf]
  %v119 = vld [vmem:[%s1 + $0x150] sm:$0xf]
  %v120 = vld [vmem:[%s1 + $0x154] sm:$0xf]
  %v121 = vld [vmem:[%s1 + $0x158] sm:$0xf]
  %v122 = vld [vmem:[%s1 + $0x15c] sm:$0xf]
  %v123 = vld [vmem:[%s1 + $0x160] sm:$0xf]
  %v124 = vld [vmem:[%s1 + $0x164] sm:$0xf]
  %v125 = vld [vmem:[%s1 + $0x168] sm:$0xf]
  %v126 = vld [vmem:[%s1 + $0x16c] sm:$0xf]
  %v127 = vld [vmem:[%s1 + $0x170] sm:$0xf]
  %v128 = vld [vmem:[%s1 + $0x174] sm:$0xf]
  %v129 = vld [vmem:[%s1 + $0x178] sm:$0xf]
  %v130 = vld [vmem:[%s1 + $0x17c] sm:$0xf]
  %v131 = vld [vmem:[%s1 + $0x180] sm:$0xf]
  %v132 = vld [vmem:[%s1 + $0x184] sm:$0xf]
  %v133 = vld [vmem:[%s1 + $0x188] sm:$0xf]
  %v134 = vld [vmem:[%s1 + $0x18c] sm:$0xf]
  %v135 = vld [vmem:[%s1 + $0x190] sm:$0xf]
  %v136 = vld [vmem:[%s1 + $0x194] sm:$0xf]
  %v137 = vld [vmem:[%s1 + $0x198] sm:$0xf]
  %v138 = vld [vmem:[%s1 + $0x19c] sm:$0xf]
  %v139 = vld [vmem:[%s1 + $0x1a0] sm:$0xf]
  %v140 = vld [vmem:[%s1 + $0x1a4] sm:$0xf]
  %v141 = vld [vmem:[%s1 + $0x1a8] sm:$0xf]
  %v142 = vld [vmem:[%s1 + $0x1ac] sm:$0xf]
  %v143 = vld [vmem:[%s1 + $0x1b0] sm:$0xf]
  %v144 = vld [vmem:[%s1 + $0x1b4] sm:$0xf]
  %v145 = vld [vmem:[%s1 + $0x1b8] sm:$0xf]
  %v146 = vld [vmem:[%s1 + $0x1bc] sm:$0xf]
  %v147 = vld [vmem:[%s1 + $0x1c0] sm:$0xf]
  %v148 = vld [vmem:[%s1 + $0x1c4] sm:$0xf]
  %v149 = vld [vmem:[%s1 + $0x1c8] sm:$0xf]
  %v150 = vld [vmem:[%s1 + $0x1cc] sm:$0xf]
  %v151 = vld [vmem:[%s1 + $0x1d0] sm:$0xf]
  %v152 = vld [vmem:[%s1 + $0x1d4] sm:$0xf]
  %v153 = vld [vmem:[%s1 + $0x1d8] sm:$0xf]
  %v154 = vld [vmem:[%s1 + $0x1dc] sm:$0xf]
  %v155 = vld [vmem:[%s1 + $0x1e0] sm:$0xf]
  %v156 = vld [vmem:[%s1 + $0x1e4] sm:$0xf]
  %v157 = vld [vmem:[%s1 + $0x1e8] sm:$0xf]
  %v158 = vld [vmem:[%s1 + $0x1ec] sm:$0xf]
  %v159 = vld [vmem:[%s1 + $0x1f0] sm:$0xf]
  %v160 = vld [vmem:[%s1 + $0x1f4] sm:$0xf]
  %v161 = vld [vmem:[%s1 + $0x1f8] sm:$0xf]
  %v162 = vld [vmem:[%s1 + $0x1fc] sm:$0xf]
  %v163 = vld [vmem:[%s1 + $0x200] sm:$0xf]
  %v164 = vld [vmem:[%s1 + $0x204] sm:$0xf]
  %v165 = vld [vmem:[%s1 + $0x208] sm:$0xf]
  %v166 = vld [vmem:[%s1 + $0x20c] sm:$0xf]
  %v167 = vld [vmem:[%s1 + $0x210] sm:$0xf]
  %v168 = vld [vmem:[%s1 + $0x214] sm:$0xf]
  %v169 = vld [vmem:[%s1 + $0x218] sm:$0xf]
  %v170 = vld [vmem:[%s1 + $0x21c] sm:$0xf]
  %v171 = vld [vmem:[%s1 + $0x220] sm:$0xf]
  %v172 = vld [vmem:[%s1 + $0x224] sm:$0xf]
  %v173 = vld [vmem:[%s1 + $0x228] sm:$0xf]
  %v174 = vld [vmem:[%s1 + $0x22c] sm:$0xf]
  %v175 = vld [vmem:[%s1 + $0x230] sm:$0xf]
  %v176 = vld [vmem:[%s1 + $0x234] sm:$0xf]
  %v177 = vld [vmem:[%s1 + $0x238] sm:$0xf]
  %v178 = vld [vmem:[%s1 + $0x23c] sm:$0xf]
  %v179 = vld [vmem:[%s2] sm:$0x1]
  %v181 = vlaneseq
  %v182 = vshrl.u32 %v181, 7
  %v183 = vsub.s32 0, %v182
  %v184 = vrot.slane %v179, %v183
  %v206 = vunpack.c.l.b16 %v15
  %v207 = vunpack.c.h.b16 %v15
  %v208 = vunpack.c.l.b16 %v16
  %v209 = vunpack.c.h.b16 %v16
  %v210 = vunpack.c.l.b16 %v17
  %v211 = vunpack.c.h.b16 %v17
  %v212 = vunpack.c.l.b16 %v18
  %v213 = vunpack.c.h.b16 %v18
  %v214 = vunpack.c.l.b16 %v19
  %v215 = vunpack.c.l.b16 %v20
  %v216 = vunpack.c.h.b16 %v20
  %v217 = vunpack.c.l.b16 %v21
  %v218 = vunpack.c.h.b16 %v21
  %v219 = vunpack.c.l.b16 %v22
  %v220 = vunpack.c.h.b16 %v22
  %v221 = vunpack.c.l.b16 %v23
  %v222 = vunpack.c.h.b16 %v23
  %v223 = vunpack.c.l.b16 %v24
  %v224 = vunpack.c.l.b16 %v25
  %v225 = vunpack.c.h.b16 %v25
  %v226 = vunpack.c.l.b16 %v26
  %v227 = vunpack.c.h.b16 %v26
  %v228 = vunpack.c.l.b16 %v27
  %v229 = vunpack.c.h.b16 %v27
  %v230 = vunpack.c.l.b16 %v28
  %v231 = vunpack.c.h.b16 %v28
  %v232 = vunpack.c.l.b16 %v29
  %v233 = vunpack.c.l.b16 %v30
  %v234 = vunpack.c.h.b16 %v30
  %v235 = vunpack.c.l.b16 %v31
  %v236 = vunpack.c.h.b16 %v31
  %v237 = vunpack.c.l.b16 %v32
  %v238 = vunpack.c.h.b16 %v32
  %v239 = vunpack.c.l.b16 %v33
  %v240 = vunpack.c.h.b16 %v33
  %v241 = vunpack.c.l.b16 %v34
  %v242 = vpack.c.b16 %v215, %v206
  %v243 = vpack.c.b16 %v216, %v207
  %v244 = vpack.c.b16 %v217, %v208
  %v245 = vpack.c.b16 %v218, %v209
  %v246 = vpack.c.b16 %v219, %v210
  %v247 = vpack.c.b16 %v220, %v211
  %v248 = vpack.c.b16 %v221, %v212
  %v249 = vpack.c.b16 %v222, %v213
  %v250 = vpack.c.b16 %v223, %v214
  %v251 = vpack.c.b16 %v233, %v224
  %v252 = vpack.c.b16 %v234, %v225
  %v253 = vpack.c.b16 %v235, %v226
  %v254 = vpack.c.b16 %v236, %v227
  %v255 = vpack.c.b16 %v237, %v228
  %v256 = vpack.c.b16 %v238, %v229
  %v257 = vpack.c.b16 %v239, %v230
  %v258 = vpack.c.b16 %v240, %v231
  %v259 = vpack.c.b16 %v241, %v232
  %v422 = vunpack.c.l.b16 %v35
  %v423 = vunpack.c.l.b16 %v36
  %v424 = vunpack.c.l.b16 %v37
  %v425 = vunpack.c.l.b16 %v38
  %v426 = vunpack.c.l.b16 %v39
  %v427 = vunpack.c.l.b16 %v40
  %v428 = vunpack.c.l.b16 %v41
  %v429 = vunpack.c.l.b16 %v42
  %v430 = vunpack.c.l.b16 %v43
  %v431 = vunpack.c.l.b16 %v44
  %v432 = vunpack.c.l.b16 %v45
  %v433 = vunpack.c.l.b16 %v46
  %v434 = vunpack.c.l.b16 %v47
  %v435 = vunpack.c.l.b16 %v48
  %v436 = vunpack.c.l.b16 %v49
  %v437 = vunpack.c.l.b16 %v50
  %v438 = vunpack.c.l.b16 %v51
  %v439 = vunpack.c.l.b16 %v52
  %v440 = vunpack.c.l.b16 %v53
  %v441 = vunpack.c.l.b16 %v54
  %v442 = vunpack.c.l.b16 %v55
  %v443 = vunpack.c.l.b16 %v56
  %v444 = vunpack.c.l.b16 %v57
  %v445 = vunpack.c.l.b16 %v58
  %v446 = vunpack.c.l.b16 %v59
  %v447 = vunpack.c.l.b16 %v60
  %v448 = vunpack.c.l.b16 %v61
  %v449 = vunpack.c.l.b16 %v62
  %v450 = vunpack.c.l.b16 %v63
  %v451 = vunpack.c.l.b16 %v64
  %v452 = vunpack.c.l.b16 %v65
  %v453 = vunpack.c.l.b16 %v66
  %v454 = vunpack.c.l.b16 %v67
  %v455 = vunpack.c.l.b16 %v68
  %v456 = vunpack.c.l.b16 %v69
  %v457 = vunpack.c.l.b16 %v70
  %v458 = vunpack.c.l.b16 %v71
  %v459 = vunpack.c.l.b16 %v72
  %v460 = vunpack.c.l.b16 %v73
  %v461 = vunpack.c.l.b16 %v74
  %v462 = vunpack.c.l.b16 %v75
  %v463 = vunpack.c.l.b16 %v76
  %v464 = vunpack.c.l.b16 %v77
  %v465 = vunpack.c.l.b16 %v78
  %v466 = vunpack.c.l.b16 %v79
  %v467 = vunpack.c.l.b16 %v80
  %v468 = vunpack.c.l.b16 %v81
  %v469 = vunpack.c.l.b16 %v82
  %v470 = vunpack.c.l.b16 %v83
  %v471 = vunpack.c.l.b16 %v84
  %v472 = vunpack.c.l.b16 %v85
  %v473 = vunpack.c.l.b16 %v86
  %v474 = vunpack.c.l.b16 %v87
  %v475 = vunpack.c.l.b16 %v88
  %v476 = vunpack.c.l.b16 %v89
  %v477 = vunpack.c.l.b16 %v90
  %v478 = vunpack.c.l.b16 %v91
  %v479 = vunpack.c.l.b16 %v92
  %v480 = vunpack.c.l.b16 %v93
  %v481 = vunpack.c.l.b16 %v94
  %v482 = vunpack.c.l.b16 %v95
  %v483 = vunpack.c.l.b16 %v96
  %v484 = vunpack.c.l.b16 %v97
  %v485 = vunpack.c.l.b16 %v98
  %v486 = vunpack.c.l.b16 %v99
  %v487 = vunpack.c.l.b16 %v100
  %v488 = vunpack.c.l.b16 %v101
  %v489 = vunpack.c.l.b16 %v102
  %v490 = vunpack.c.l.b16 %v103
  %v491 = vunpack.c.l.b16 %v104
  %v492 = vunpack.c.l.b16 %v105
  %v493 = vunpack.c.l.b16 %v106
  %v494 = vunpack.c.l.b16 %v107
  %v495 = vunpack.c.l.b16 %v108
  %v496 = vunpack.c.l.b16 %v109
  %v497 = vunpack.c.l.b16 %v110
  %v498 = vunpack.c.l.b16 %v111
  %v499 = vunpack.c.l.b16 %v112
  %v500 = vunpack.c.l.b16 %v113
  %v501 = vunpack.c.l.b16 %v114
  %v502 = vunpack.c.l.b16 %v115
  %v503 = vunpack.c.l.b16 %v116
  %v504 = vunpack.c.l.b16 %v117
  %v505 = vunpack.c.l.b16 %v118
  %v506 = vunpack.c.l.b16 %v119
  %v507 = vunpack.c.l.b16 %v120
  %v508 = vunpack.c.l.b16 %v121
  %v509 = vunpack.c.l.b16 %v122
  %v510 = vunpack.c.l.b16 %v123
  %v511 = vunpack.c.l.b16 %v124
  %v512 = vunpack.c.l.b16 %v125
  %v513 = vunpack.c.l.b16 %v126
  %v514 = vunpack.c.l.b16 %v127
  %v515 = vunpack.c.l.b16 %v128
  %v516 = vunpack.c.l.b16 %v129
  %v517 = vunpack.c.l.b16 %v130
  %v518 = vunpack.c.l.b16 %v131
  %v519 = vunpack.c.l.b16 %v132
  %v520 = vunpack.c.l.b16 %v133
  %v521 = vunpack.c.l.b16 %v134
  %v522 = vunpack.c.l.b16 %v135
  %v523 = vunpack.c.l.b16 %v136
  %v524 = vunpack.c.l.b16 %v137
  %v525 = vunpack.c.l.b16 %v138
  %v526 = vunpack.c.l.b16 %v139
  %v527 = vunpack.c.l.b16 %v140
  %v528 = vunpack.c.l.b16 %v141
  %v529 = vunpack.c.l.b16 %v142
  %v530 = vunpack.c.l.b16 %v143
  %v531 = vunpack.c.l.b16 %v144
  %v532 = vunpack.c.l.b16 %v145
  %v533 = vunpack.c.l.b16 %v146
  %v534 = vunpack.c.l.b16 %v147
  %v535 = vunpack.c.l.b16 %v148
  %v536 = vunpack.c.l.b16 %v149
  %v537 = vunpack.c.l.b16 %v150
  %v538 = vunpack.c.l.b16 %v151
  %v539 = vunpack.c.l.b16 %v152
  %v540 = vunpack.c.l.b16 %v153
  %v541 = vunpack.c.l.b16 %v154
  %v542 = vunpack.c.l.b16 %v155
  %v543 = vunpack.c.l.b16 %v156
  %v544 = vunpack.c.l.b16 %v157
  %v545 = vunpack.c.l.b16 %v158
  %v546 = vunpack.c.l.b16 %v159
  %v547 = vunpack.c.l.b16 %v160
  %v548 = vunpack.c.l.b16 %v161
  %v549 = vunpack.c.l.b16 %v162
  %v550 = vunpack.c.l.b16 %v163
  %v551 = vunpack.c.l.b16 %v164
  %v552 = vunpack.c.l.b16 %v165
  %v553 = vunpack.c.l.b16 %v166
  %v554 = vunpack.c.l.b16 %v167
  %v555 = vunpack.c.l.b16 %v168
  %v556 = vunpack.c.l.b16 %v169
  %v557 = vunpack.c.l.b16 %v170
  %v558 = vunpack.c.l.b16 %v171
  %v559 = vunpack.c.l.b16 %v172
  %v560 = vunpack.c.l.b16 %v173
  %v561 = vunpack.c.l.b16 %v174
  %v562 = vunpack.c.l.b16 %v175
  %v563 = vunpack.c.l.b16 %v176
  %v564 = vunpack.c.l.b16 %v177
  %v565 = vunpack.c.l.b16 %v178
  %v566 = vpack.c.b16 %v423, %v422
  %v567 = vpack.c.b16 %v425, %v424
  %v568 = vpack.c.b16 %v427, %v426
  %v569 = vpack.c.b16 %v429, %v428
  %v570 = vpack.c.b16 %v431, %v430
  %v571 = vpack.c.b16 %v433, %v432
  %v572 = vpack.c.b16 %v435, %v434
  %v573 = vpack.c.b16 %v437, %v436
  %v574 = vpack.c.b16 %v439, %v438
  %v575 = vpack.c.b16 %v441, %v440
  %v576 = vpack.c.b16 %v443, %v442
  %v577 = vpack.c.b16 %v445, %v444
  %v578 = vpack.c.b16 %v447, %v446
  %v579 = vpack.c.b16 %v449, %v448
  %v580 = vpack.c.b16 %v451, %v450
  %v581 = vpack.c.b16 %v453, %v452
  %v582 = vpack.c.b16 %v455, %v454
  %v583 = vpack.c.b16 %v457, %v456
  %v584 = vpack.c.b16 %v459, %v458
  %v585 = vpack.c.b16 %v461, %v460
  %v586 = vpack.c.b16 %v463, %v462
  %v587 = vpack.c.b16 %v465, %v464
  %v588 = vpack.c.b16 %v467, %v466
  %v589 = vpack.c.b16 %v469, %v468
  %v590 = vpack.c.b16 %v471, %v470
  %v591 = vpack.c.b16 %v473, %v472
  %v592 = vpack.c.b16 %v475, %v474
  %v593 = vpack.c.b16 %v477, %v476
  %v594 = vpack.c.b16 %v479, %v478
  %v595 = vpack.c.b16 %v481, %v480
  %v596 = vpack.c.b16 %v483, %v482
  %v597 = vpack.c.b16 %v485, %v484
  %v598 = vpack.c.b16 %v487, %v486
  %v599 = vpack.c.b16 %v489, %v488
  %v600 = vpack.c.b16 %v491, %v490
  %v601 = vpack.c.b16 %v493, %v492
  %v602 = vpack.c.b16 %v495, %v494
  %v603 = vpack.c.b16 %v497, %v496
  %v604 = vpack.c.b16 %v499, %v498
  %v605 = vpack.c.b16 %v501, %v500
  %v606 = vpack.c.b16 %v503, %v502
  %v607 = vpack.c.b16 %v505, %v504
  %v608 = vpack.c.b16 %v507, %v506
  %v609 = vpack.c.b16 %v509, %v508
  %v610 = vpack.c.b16 %v511, %v510
  %v611 = vpack.c.b16 %v513, %v512
  %v612 = vpack.c.b16 %v515, %v514
  %v613 = vpack.c.b16 %v517, %v516
  %v614 = vpack.c.b16 %v519, %v518
  %v615 = vpack.c.b16 %v521, %v520
  %v616 = vpack.c.b16 %v523, %v522
  %v617 = vpack.c.b16 %v525, %v524
  %v618 = vpack.c.b16 %v527, %v526
  %v619 = vpack.c.b16 %v529, %v528
  %v620 = vpack.c.b16 %v531, %v530
  %v621 = vpack.c.b16 %v533, %v532
  %v622 = vpack.c.b16 %v535, %v534
  %v623 = vpack.c.b16 %v537, %v536
  %v624 = vpack.c.b16 %v539, %v538
  %v625 = vpack.c.b16 %v541, %v540
  %v626 = vpack.c.b16 %v543, %v542
  %v627 = vpack.c.b16 %v545, %v544
  %v628 = vpack.c.b16 %v547, %v546
  %v629 = vpack.c.b16 %v549, %v548
  %v630 = vpack.c.b16 %v551, %v550
  %v631 = vpack.c.b16 %v553, %v552
  %v632 = vpack.c.b16 %v555, %v554
  %v633 = vpack.c.b16 %v557, %v556
  %v634 = vpack.c.b16 %v559, %v558
  %v635 = vpack.c.b16 %v561, %v560
  %v636 = vpack.c.b16 %v563, %v562
  %v637 = vpack.c.b16 %v565, %v564
  %710 = vmatprep.subr.bf16.mxu0 0
  %711 = vmatpush1.bf16.msra.mxu0 %v573
  %712 = vmatprep.subr.bf16.mxu0 0
  %713 = vmatpush1.bf16.msra.mxu0 %v572
  %714 = vmatprep.subr.bf16.mxu0 0
  %715 = vmatpush1.bf16.msra.mxu0 %v571
  %716 = vmatprep.subr.bf16.mxu0 0
  %717 = vmatpush1.bf16.msra.mxu0 %v570
  %718 = vmatprep.subr.bf16.mxu0 0
  %719 = vmatpush1.bf16.msra.mxu0 %v569
  %720 = vmatprep.subr.bf16.mxu0 0
  %721 = vmatpush1.bf16.msra.mxu0 %v568
  %722 = vmatprep.subr.bf16.mxu0 0
  %723 = vmatpush1.bf16.msra.mxu0 %v567
  %724 = vmatprep.subr.bf16.mxu0 0
  %725 = vmatpush1.bf16.msra.mxu0 %v566
  %726 = vmatprep.subr.bf16.mxu0 0
  %727 = vmatpush2.bf16.msra.mxu0 %v581
  %728 = vmatprep.subr.bf16.mxu0 0
  %729 = vmatpush2.bf16.msra.mxu0 %v580
  %730 = vmatprep.subr.bf16.mxu0 0
  %731 = vmatpush2.bf16.msra.mxu0 %v579
  %732 = vmatprep.subr.bf16.mxu0 0
  %733 = vmatpush2.bf16.msra.mxu0 %v578
  %734 = vmatprep.subr.bf16.mxu0 0
  %735 = vmatpush2.bf16.msra.mxu0 %v577
  %736 = vmatprep.subr.bf16.mxu0 0
  %737 = vmatpush2.bf16.msra.mxu0 %v576
  %738 = vmatprep.subr.bf16.mxu0 0
  %739 = vmatpush2.bf16.msra.mxu0 %v575
  %740 = vmatprep.subr.bf16.mxu0 0
  %741 = vmatpush2.bf16.msra.mxu0 %v574
  %742 = vmatprep.mubr.bf16.mxu0 %v243
  %743 = vmatmul.mubr.bf16.gmra.mxu0 %v242
  %v744 = vpop.f32.mrf.mxu0
  %v745 = vadd.f32 %v184, %v744
  %v746 = vpop.f32.mrf.mxu0
  %v747 = vpop.f32.mrf.mxu0
  %v748 = vadd.f32 %v184, %v747
  %v749 = vpop.f32.mrf.mxu0
  %750 = vmatprep.mubr.bf16.mxu0 %v252
  %751 = vmatmul.mubr.bf16.gmra.mxu0 %v251
  %v752 = vpop.f32.mrf.mxu0
  %v753 = vadd.f32 %v184, %v752
  %v754 = vpop.f32.mrf.mxu0
  %v755 = vpop.f32.mrf.mxu0
  %v756 = vadd.f32 %v184, %v755
  %v757 = vpop.f32.mrf.mxu0
  %758 = vdwg.mxu0
  %759 = vmatprep.subr.bf16.mxu0 0
  %760 = vmatpush1.bf16.msra.mxu0 %v589
  %761 = vmatprep.subr.bf16.mxu0 0
  %762 = vmatpush1.bf16.msra.mxu0 %v588
  %763 = vmatprep.subr.bf16.mxu0 0
  %764 = vmatpush1.bf16.msra.mxu0 %v587
  %765 = vmatprep.subr.bf16.mxu0 0
  %766 = vmatpush1.bf16.msra.mxu0 %v586
  %767 = vmatprep.subr.bf16.mxu0 0
  %768 = vmatpush1.bf16.msra.mxu0 %v585
  %769 = vmatprep.subr.bf16.mxu0 0
  %770 = vmatpush1.bf16.msra.mxu0 %v584
  %771 = vmatprep.subr.bf16.mxu0 0
  %772 = vmatpush1.bf16.msra.mxu0 %v583
  %773 = vmatprep.subr.bf16.mxu0 0
  %774 = vmatpush1.bf16.msra.mxu0 %v582
  %775 = vmatprep.subr.bf16.mxu0 0
  %776 = vmatpush2.bf16.msra.mxu0 %v597
  %777 = vmatprep.subr.bf16.mxu0 0
  %778 = vmatpush2.bf16.msra.mxu0 %v596
  %779 = vmatprep.subr.bf16.mxu0 0
  %780 = vmatpush2.bf16.msra.mxu0 %v595
  %781 = vmatprep.subr.bf16.mxu0 0
  %782 = vmatpush2.bf16.msra.mxu0 %v594
  %783 = vmatprep.subr.bf16.mxu0 0
  %784 = vmatpush2.bf16.msra.mxu0 %v593
  %785 = vmatprep.subr.bf16.mxu0 0
  %786 = vmatpush2.bf16.msra.mxu0 %v592
  %787 = vmatprep.subr.bf16.mxu0 0
  %788 = vmatpush2.bf16.msra.mxu0 %v591
  %789 = vmatprep.subr.bf16.mxu0 0
  %790 = vmatpush2.bf16.msra.mxu0 %v590
  %791 = vmatprep.mubr.bf16.mxu0 %v245
  %792 = vmatmul.mubr.bf16.gmra.mxu0 %v244
  %v793 = vpop.f32.mrf.mxu0
  %v794 = vadd.f32 %v745, %v793
  %v795 = vpop.f32.mrf.mxu0
  %v796 = vpop.f32.mrf.mxu0
  %v797 = vadd.f32 %v748, %v796
  %v798 = vpop.f32.mrf.mxu0
  %799 = vmatprep.mubr.bf16.mxu0 %v254
  %800 = vmatmul.mubr.bf16.gmra.mxu0 %v253
  %v801 = vpop.f32.mrf.mxu0
  %v802 = vadd.f32 %v753, %v801
  %v803 = vpop.f32.mrf.mxu0
  %v804 = vpop.f32.mrf.mxu0
  %v805 = vadd.f32 %v756, %v804
  %v806 = vpop.f32.mrf.mxu0
  %807 = vdwg.mxu0
  %808 = vmatprep.subr.bf16.mxu0 0
  %809 = vmatpush1.bf16.msra.mxu0 %v605
  %810 = vmatprep.subr.bf16.mxu0 0
  %811 = vmatpush1.bf16.msra.mxu0 %v604
  %812 = vmatprep.subr.bf16.mxu0 0
  %813 = vmatpush1.bf16.msra.mxu0 %v603
  %814 = vmatprep.subr.bf16.mxu0 0
  %815 = vmatpush1.bf16.msra.mxu0 %v602
  %816 = vmatprep.subr.bf16.mxu0 0
  %817 = vmatpush1.bf16.msra.mxu0 %v601
  %818 = vmatprep.subr.bf16.mxu0 0
  %819 = vmatpush1.bf16.msra.mxu0 %v600
  %820 = vmatprep.subr.bf16.mxu0 0
  %821 = vmatpush1.bf16.msra.mxu0 %v599
  %822 = vmatprep.subr.bf16.mxu0 0
  %823 = vmatpush1.bf16.msra.mxu0 %v598
  %824 = vmatprep.subr.bf16.mxu0 0
  %825 = vmatpush2.bf16.msra.mxu0 %v613
  %826 = vmatprep.subr.bf16.mxu0 0
  %827 = vmatpush2.bf16.msra.mxu0 %v612
  %828 = vmatprep.subr.bf16.mxu0 0
  %829 = vmatpush2.bf16.msra.mxu0 %v611
  %830 = vmatprep.subr.bf16.mxu0 0
  %831 = vmatpush2.bf16.msra.mxu0 %v610
  %832 = vmatprep.subr.bf16.mxu0 0
  %833 = vmatpush2.bf16.msra.mxu0 %v609
  %834 = vmatprep.subr.bf16.mxu0 0
  %835 = vmatpush2.bf16.msra.mxu0 %v608
  %836 = vmatprep.subr.bf16.mxu0 0
  %837 = vmatpush2.bf16.msra.mxu0 %v607
  %838 = vmatprep.subr.bf16.mxu0 0
  %839 = vmatpush2.bf16.msra.mxu0 %v606
  %840 = vmatprep.mubr.bf16.mxu0 %v247
  %841 = vmatmul.mubr.bf16.gmra.mxu0 %v246
  %v842 = vpop.f32.mrf.mxu0
  %v843 = vadd.f32 %v794, %v842
  %v844 = vpop.f32.mrf.mxu0
  %v845 = vpop.f32.mrf.mxu0
  %v846 = vadd.f32 %v797, %v845
  %v847 = vpop.f32.mrf.mxu0
  %848 = vmatprep.mubr.bf16.mxu0 %v256
  %849 = vmatmul.mubr.bf16.gmra.mxu0 %v255
  %v850 = vpop.f32.mrf.mxu0
  %v851 = vadd.f32 %v802, %v850
  %v852 = vpop.f32.mrf.mxu0
  %v853 = vpop.f32.mrf.mxu0
  %v854 = vadd.f32 %v805, %v853
  %v855 = vpop.f32.mrf.mxu0
  %856 = vdwg.mxu0
  %857 = vmatprep.subr.bf16.mxu0 0
  %858 = vmatpush1.bf16.msra.mxu0 %v621
  %859 = vmatprep.subr.bf16.mxu0 0
  %860 = vmatpush1.bf16.msra.mxu0 %v620
  %861 = vmatprep.subr.bf16.mxu0 0
  %862 = vmatpush1.bf16.msra.mxu0 %v619
  %863 = vmatprep.subr.bf16.mxu0 0
  %864 = vmatpush1.bf16.msra.mxu0 %v618
  %865 = vmatprep.subr.bf16.mxu0 0
  %866 = vmatpush1.bf16.msra.mxu0 %v617
  %867 = vmatprep.subr.bf16.mxu0 0
  %868 = vmatpush1.bf16.msra.mxu0 %v616
  %869 = vmatprep.subr.bf16.mxu0 0
  %870 = vmatpush1.bf16.msra.mxu0 %v615
  %871 = vmatprep.subr.bf16.mxu0 0
  %872 = vmatpush1.bf16.msra.mxu0 %v614
  %873 = vmatprep.subr.bf16.mxu0 0
  %874 = vmatpush2.bf16.msra.mxu0 %v629
  %875 = vmatprep.subr.bf16.mxu0 0
  %876 = vmatpush2.bf16.msra.mxu0 %v628
  %877 = vmatprep.subr.bf16.mxu0 0
  %878 = vmatpush2.bf16.msra.mxu0 %v627
  %879 = vmatprep.subr.bf16.mxu0 0
  %880 = vmatpush2.bf16.msra.mxu0 %v626
  %881 = vmatprep.subr.bf16.mxu0 0
  %882 = vmatpush2.bf16.msra.mxu0 %v625
  %883 = vmatprep.subr.bf16.mxu0 0
  %884 = vmatpush2.bf16.msra.mxu0 %v624
  %885 = vmatprep.subr.bf16.mxu0 0
  %886 = vmatpush2.bf16.msra.mxu0 %v623
  %887 = vmatprep.subr.bf16.mxu0 0
  %888 = vmatpush2.bf16.msra.mxu0 %v622
  %889 = vmatprep.mubr.bf16.mxu0 %v249
  %890 = vmatmul.mubr.bf16.gmra.mxu0 %v248
  %v891 = vpop.f32.mrf.mxu0
  %v892 = vadd.f32 %v843, %v891
  %v893 = vpop.f32.mrf.mxu0
  %v894 = vpop.f32.mrf.mxu0
  %v895 = vadd.f32 %v846, %v894
  %v896 = vpop.f32.mrf.mxu0
  %897 = vmatprep.mubr.bf16.mxu0 %v258
  %898 = vmatmul.mubr.bf16.gmra.mxu0 %v257
  %v899 = vpop.f32.mrf.mxu0
  %v900 = vadd.f32 %v851, %v899
  %v901 = vpop.f32.mrf.mxu0
  %v902 = vpop.f32.mrf.mxu0
  %v903 = vadd.f32 %v854, %v902
  %v904 = vpop.f32.mrf.mxu0
  %905 = vdwg.mxu0
  %906 = vmatprep.subr.bf16.mxu0 0
  %907 = vmatpush1.bf16.msra.mxu0 %v637
  %908 = vmatprep.subr.bf16.mxu0 0
  %909 = vmatpush1.bf16.msra.mxu0 %v636
  %910 = vmatprep.subr.bf16.mxu0 0
  %911 = vmatpush1.bf16.msra.mxu0 %v635
  %912 = vmatprep.subr.bf16.mxu0 0
  %913 = vmatpush1.bf16.msra.mxu0 %v634
  %914 = vmatprep.subr.bf16.mxu0 0
  %915 = vmatpush1.bf16.msra.mxu0 %v633
  %916 = vmatprep.subr.bf16.mxu0 0
  %917 = vmatpush1.bf16.msra.mxu0 %v632
  %918 = vmatprep.subr.bf16.mxu0 0
  %919 = vmatpush1.bf16.msra.mxu0 %v631
  %920 = vmatprep.subr.bf16.mxu0 0
  %921 = vmatpush1.bf16.msra.mxu0 %v630
  %922 = vmatprep.subr.bf16.mxu0 0
  %923 = vmatpush2.bf16.msra.mxu0 0
  %924 = vmatprep.subr.bf16.mxu0 0
  %925 = vmatpush2.bf16.msra.mxu0 0
  %926 = vmatprep.subr.bf16.mxu0 0
  %927 = vmatpush2.bf16.msra.mxu0 0
  %928 = vmatprep.subr.bf16.mxu0 0
  %929 = vmatpush2.bf16.msra.mxu0 0
  %930 = vmatprep.subr.bf16.mxu0 0
  %931 = vmatpush2.bf16.msra.mxu0 0
  %932 = vmatprep.subr.bf16.mxu0 0
  %933 = vmatpush2.bf16.msra.mxu0 0
  %934 = vmatprep.subr.bf16.mxu0 0
  %935 = vmatpush2.bf16.msra.mxu0 0
  %936 = vmatprep.subr.bf16.mxu0 0
  %937 = vmatpush2.bf16.msra.mxu0 0
  %938 = vmatprep.mubr.bf16.mxu0 0
  %939 = vmatmul.mubr.bf16.gmra.mxu0 %v250
  %v940 = vpop.f32.mrf.mxu0
  %v941 = vadd.f32 %v892, %v940
  %v942 = vpop.f32.mrf.mxu0
  %v943 = vpop.f32.mrf.mxu0
  %v944 = vadd.f32 %v895, %v943
  %v945 = vpop.f32.mrf.mxu0
  %946 = vmatprep.mubr.bf16.mxu0 0
  %947 = vmatmul.mubr.bf16.gmra.mxu0 %v259
  %v948 = vpop.f32.mrf.mxu0
  %v949 = vadd.f32 %v900, %v948
  %v950 = vpop.f32.mrf.mxu0
  %v951 = vpop.f32.mrf.mxu0
  %v952 = vadd.f32 %v903, %v951
  %v953 = vpop.f32.mrf.mxu0
  %954 = vdwg.mxu0
  %vm955 = vcmp.ge.f32.partialorder %v941, 0.0
  %vm956 = vcmp.ge.f32.partialorder %v944, 0.0
  %vm957 = vcmp.ge.f32.partialorder %v949, 0.0
  %vm958 = vcmp.ge.f32.partialorder %v952, 0.0
  %v959 = vmul.f32 %v941, 0.01
  %v960 = vmul.f32 %v944, 0.01
  %v961 = vmul.f32 %v949, 0.01
  %v962 = vmul.f32 %v952, 0.01
  %v963 = vsel %vm955, %v941, %v959
  %v964 = vsel %vm956, %v944, %v960
  %v965 = vsel %vm957, %v949, %v961
  %v966 = vsel %vm958, %v952, %v962
  %v967 = vpack.c.bf16 %v964, %v963
  %v968 = vpack.c.bf16 %v966, %v965
  %v971 = vunpack.c.l.b16 %v967
  %v972 = vunpack.c.h.b16 %v967
  %v973 = vunpack.c.l.b16 %v968
  %v974 = vunpack.c.h.b16 %v968
  %v975 = vpack.c.b16 %v971, %v971
  %v976 = vpack.c.b16 %v972, %v972
  %v977 = vpack.c.b16 %v973, %v973
  %v978 = vpack.c.b16 %v974, %v974
  %983 = vst [vmem:[%s3] sm:$0xf] %v975
  %984 = vst [vmem:[%s3 + $0x4] sm:$0xf] %v976
  %985 = vst [vmem:[%s3 + $0x8] sm:$0xf] %v977
  %986 = vst [vmem:[%s3 + $0xc] sm:$0xf] %v978
  // Predicated region
  $region14: #{gradual_style_block_forward.6} parent=0 // pred_check
    _
  $region15: #{gradual_style_block_forward.6} parent=0 // pred_check_branch
    %988 = sbr.rel (0) target = $region17
  $region16: #{gradual_style_block_forward.6} parent=0 // pred_region
    _
  $region17: #{gradual_style_block_forward.6} parent=0 // pred_fallthru
    _
  // Predicated region
  $region18: #{gradual_style_block_forward.6} parent=0 // pred_check
    _
  $region19: #{gradual_style_block_forward.6} parent=0 // pred_check_branch
    %990 = sbr.rel (0) target = $region21
  $region20: #{gradual_style_block_forward.6} parent=0 // pred_region
    _
  $region21: #{gradual_style_block_forward.6} parent=0 // pred_fallthru
    _

// kernel: gradual_style_block_forward.5
$region0: #{gradual_style_block_forward.5}
  #allocation0 [shape = 'u32[]', space=smem, size = 0x4, offset = 0x4, fixed_abs, tag = 'smem constant byte address 0x4 - core index']
  #allocation1 [shape = 'u32[144,128]{1,0:T(1,128)}', space=vmem, size = 0x12000, scoped, tag = 'internal scratch']
  %s0 = inlined_call_operand.vmem [shape: bf16[128,1152], index: 0, kind: input, shape index: {}]
  %s1 = inlined_call_operand.vmem [shape: bf16[1152,128], index: 1, kind: input, shape index: {}]
  %s2 = inlined_call_operand.vmem [shape: f32[1,128], index: 2, kind: input, shape index: {}]
  %s3 = inlined_call_operand.vmem [shape: bf16[128,128], index: 3, kind: output, shape index: {}]
  %s4 = sld [smem:[#allocation0]]
  $region22: #{gradual_style_block_forward.5} parent=0
    _
  %s6 = ssub.s32 1, %s4
  %s7 = scalar_select 0, %s6, %s4
  // Predicated region
  $region2: #{gradual_style_block_forward.5} parent=0 // pred_check
    _
  $region3: #{gradual_style_block_forward.5} parent=0 // pred_check_branch
    %9 = sbr.rel (0) target = $region5
  $region4: #{gradual_style_block_forward.5} parent=0 // pred_region
    _
  $region5: #{gradual_style_block_forward.5} parent=0 // pred_fallthru
    _
  // Predicated region
  $region6: #{gradual_style_block_forward.5} parent=0 // pred_check
    _
  $region7: #{gradual_style_block_forward.5} parent=0 // pred_check_branch
    %11 = sbr.rel (0) target = $region9
  $region8: #{gradual_style_block_forward.5} parent=0 // pred_region
    _
  $region9: #{gradual_style_block_forward.5} parent=0 // pred_fallthru
    _
  // Predicated region
  $region10: #{gradual_style_block_forward.5} parent=0 // pred_check
    _
  $region11: #{gradual_style_block_forward.5} parent=0 // pred_check_branch
    %13 = sbr.rel (0) target = $region13
  $region12: #{gradual_style_block_forward.5} parent=0 // pred_region
    _
  $region13: #{gradual_style_block_forward.5} parent=0 // pred_fallthru
    _
  %v15 = vld [vmem:[%s0] sm:$0xff]
  %v16 = vld [vmem:[%s0 + $0x8] sm:$0xff]
  %v17 = vld [vmem:[%s0 + $0x10] sm:$0xff]
  %v18 = vld [vmem:[%s0 + $0x18] sm:$0xff]
  %v19 = vld [vmem:[%s0 + $0x20] sm:$0xf]
  %v20 = vld [vmem:[%s0 + $0x24] sm:$0xff]
  %v21 = vld [vmem:[%s0 + $0x2c] sm:$0xff]
  %v22 = vld [vmem:[%s0 + $0x34] sm:$0xff]
  %v23 = vld [vmem:[%s0 + $0x3c] sm:$0xff]
  %v24 = vld [vmem:[%s0 + $0x44] sm:$0xf]
  %v25 = vld [vmem:[%s0 + $0x48] sm:$0xff]
  %v26 = vld [vmem:[%s0 + $0x50] sm:$0xff]
  %v27 = vld [vmem:[%s0 + $0x58] sm:$0xff]
  %v28 = vld [vmem:[%s0 + $0x60] sm:$0xff]
  %v29 = vld [vmem:[%s0 + $0x68] sm:$0xf]
  %v30 = vld [vmem:[%s0 + $0x6c] sm:$0xff]
  %v31 = vld [vmem:[%s0 + $0x74] sm:$0xff]
  %v32 = vld [vmem:[%s0 + $0x7c] sm:$0xff]
  %v33 = vld [vmem:[%s0 + $0x84] sm:$0xff]
  %v34 = vld [vmem:[%s0 + $0x8c] sm:$0xf]
  %v35 = vld [vmem:[%s0 + $0x90] sm:$0xff]
  %v36 = vld [vmem:[%s0 + $0x98] sm:$0xff]
  %v37 = vld [vmem:[%s0 + $0xa0] sm:$0xff]
  %v38 = vld [vmem:[%s0 + $0xa8] sm:$0xff]
  %v39 = vld [vmem:[%s0 + $0xb0] sm:$0xf]
  %v40 = vld [vmem:[%s0 + $0xb4] sm:$0xff]
  %v41 = vld [vmem:[%s0 + $0xbc] sm:$0xff]
  %v42 = vld [vmem:[%s0 + $0xc4] sm:$0xff]
  %v43 = vld [vmem:[%s0 + $0xcc] sm:$0xff]
  %v44 = vld [vmem:[%s0 + $0xd4] sm:$0xf]
  %v45 = vld [vmem:[%s0 + $0xd8] sm:$0xff]
  %v46 = vld [vmem:[%s0 + $0xe0] sm:$0xff]
  %v47 = vld [vmem:[%s0 + $0xe8] sm:$0xff]
  %v48 = vld [vmem:[%s0 + $0xf0] sm:$0xff]
  %v49 = vld [vmem:[%s0 + $0xf8] sm:$0xf]
  %v50 = vld [vmem:[%s0 + $0xfc] sm:$0xff]
  %v51 = vld [vmem:[%s0 + $0x104] sm:$0xff]
  %v52 = vld [vmem:[%s0 + $0x10c] sm:$0xff]
  %v53 = vld [vmem:[%s0 + $0x114] sm:$0xff]
  %v54 = vld [vmem:[%s0 + $0x11c] sm:$0xf]
  %v55 = vld [vmem:[%s0 + $0x120] sm:$0xff]
  %v56 = vld [vmem:[%s0 + $0x128] sm:$0xff]
  %v57 = vld [vmem:[%s0 + $0x130] sm:$0xff]
  %v58 = vld [vmem:[%s0 + $0x138] sm:$0xff]
  %v59 = vld [vmem:[%s0 + $0x140] sm:$0xf]
  %v60 = vld [vmem:[%s0 + $0x144] sm:$0xff]
  %v61 = vld [vmem:[%s0 + $0x14c] sm:$0xff]
  %v62 = vld [vmem:[%s0 + $0x154] sm:$0xff]
  %v63 = vld [vmem:[%s0 + $0x15c] sm:$0xff]
  %v64 = vld [vmem:[%s0 + $0x164] sm:$0xf]
  %v65 = vld [vmem:[%s0 + $0x168] sm:$0xff]
  %v66 = vld [vmem:[%s0 + $0x170] sm:$0xff]
  %v67 = vld [vmem:[%s0 + $0x178] sm:$0xff]
  %v68 = vld [vmem:[%s0 + $0x180] sm:$0xff]
  %v69 = vld [vmem:[%s0 + $0x188] sm:$0xf]
  %v70 = vld [vmem:[%s0 + $0x18c] sm:$0xff]
  %v71 = vld [vmem:[%s0 + $0x194] sm:$0xff]
  %v72 = vld [vmem:[%s0 + $0x19c] sm:$0xff]
  %v73 = vld [vmem:[%s0 + $0x1a4] sm:$0xff]
  %v74 = vld [vmem:[%s0 + $0x1ac] sm:$0xf]
  %v75 = vld [vmem:[%s0 + $0x1b0] sm:$0xff]
  %v76 = vld [vmem:[%s0 + $0x1b8] sm:$0xff]
  %v77 = vld [vmem:[%s0 + $0x1c0] sm:$0xff]
  %v78 = vld [vmem:[%s0 + $0x1c8] sm:$0xff]
  %v79 = vld [vmem:[%s0 + $0x1d0] sm:$0xf]
  %v80 = vld [vmem:[%s0 + $0x1d4] sm:$0xff]
  %v81 = vld [vmem:[%s0 + $0x1dc] sm:$0xff]
  %v82 = vld [vmem:[%s0 + $0x1e4] sm:$0xff]
  %v83 = vld [vmem:[%s0 + $0x1ec] sm:$0xff]
  %v84 = vld [vmem:[%s0 + $0x1f4] sm:$0xf]
  %v85 = vld [vmem:[%s0 + $0x1f8] sm:$0xff]
  %v86 = vld [vmem:[%s0 + $0x200] sm:$0xff]
  %v87 = vld [vmem:[%s0 + $0x208] sm:$0xff]
  %v88 = vld [vmem:[%s0 + $0x210] sm:$0xff]
  %v89 = vld [vmem:[%s0 + $0x218] sm:$0xf]
  %v90 = vld [vmem:[%s0 + $0x21c] sm:$0xff]
  %v91 = vld [vmem:[%s0 + $0x224] sm:$0xff]
  %v92 = vld [vmem:[%s0 + $0x22c] sm:$0xff]
  %v93 = vld [vmem:[%s0 + $0x234] sm:$0xff]
  %v94 = vld [vmem:[%s0 + $0x23c] sm:$0xf]
  %v95 = vld [vmem:[%s1] sm:$0xf]
  %v96 = vld [vmem:[%s1 + $0x4] sm:$0xf]
  %v97 = vld [vmem:[%s1 + $0x8] sm:$0xf]
  %v98 = vld [vmem:[%s1 + $0xc] sm:$0xf]
  %v99 = vld [vmem:[%s1 + $0x10] sm:$0xf]
  %v100 = vld [vmem:[%s1 + $0x14] sm:$0xf]
  %v101 = vld [vmem:[%s1 + $0x18] sm:$0xf]
  %v102 = vld [vmem:[%s1 + $0x1c] sm:$0xf]
  %v103 = vld [vmem:[%s1 + $0x20] sm:$0xf]
  %v104 = vld [vmem:[%s1 + $0x24] sm:$0xf]
  %v105 = vld [vmem:[%s1 + $0x28] sm:$0xf]
  %v106 = vld [vmem:[%s1 + $0x2c] sm:$0xf]
  %v107 = vld [vmem:[%s1 + $0x30] sm:$0xf]
  %v108 = vld [vmem:[%s1 + $0x34] sm:$0xf]
  %v109 = vld [vmem:[%s1 + $0x38] sm:$0xf]
  %v110 = vld [vmem:[%s1 + $0x3c] sm:$0xf]
  %v111 = vld [vmem:[%s1 + $0x40] sm:$0xf]
  %v112 = vld [vmem:[%s1 + $0x44] sm:$0xf]
  %v113 = vld [vmem:[%s1 + $0x48] sm:$0xf]
  %v114 = vld [vmem:[%s1 + $0x4c] sm:$0xf]
  %v115 = vld [vmem:[%s1 + $0x50] sm:$0xf]
  %v116 = vld [vmem:[%s1 + $0x54] sm:$0xf]
  %v117 = vld [vmem:[%s1 + $0x58] sm:$0xf]
  %v118 = vld [vmem:[%s1 + $0x5c] sm:$0xf]
  %v119 = vld [vmem:[%s1 + $0x60] sm:$0xf]
  %v120 = vld [vmem:[%s1 + $0x64] sm:$0xf]
  %v121 = vld [vmem:[%s1 + $0x68] sm:$0xf]
  %v122 = vld [vmem:[%s1 + $0x6c] sm:$0xf]
  %v123 = vld [vmem:[%s1 + $0x70] sm:$0xf]
  %v124 = vld [vmem:[%s1 + $0x74] sm:$0xf]
  %v125 = vld [vmem:[%s1 + $0x78] sm:$0xf]
  %v126 = vld [vmem:[%s1 + $0x7c] sm:$0xf]
  %v127 = vld [vmem:[%s1 + $0x80] sm:$0xf]
  %v128 = vld [vmem:[%s1 + $0x84] sm:$0xf]
  %v129 = vld [vmem:[%s1 + $0x88] sm:$0xf]
  %v130 = vld [vmem:[%s1 + $0x8c] sm:$0xf]
  %v131 = vld [vmem:[%s1 + $0x90] sm:$0xf]
  %v132 = vld [vmem:[%s1 + $0x94] sm:$0xf]
  %v133 = vld [vmem:[%s1 + $0x98] sm:$0xf]
  %v134 = vld [vmem:[%s1 + $0x9c] sm:$0xf]
  %v135 = vld [vmem:[%s1 + $0xa0] sm:$0xf]
  %v136 = vld [vmem:[%s1 + $0xa4] sm:$0xf]
  %v137 = vld [vmem:[%s1 + $0xa8] sm:$0xf]
  %v138 = vld [vmem:[%s1 + $0xac] sm:$0xf]
  %v139 = vld [vmem:[%s1 + $0xb0] sm:$0xf]
  %v140 = vld [vmem:[%s1 + $0xb4] sm:$0xf]
  %v141 = vld [vmem:[%s1 + $0xb8] sm:$0xf]
  %v142 = vld [vmem:[%s1 + $0xbc] sm:$0xf]
  %v143 = vld [vmem:[%s1 + $0xc0] sm:$0xf]
  %v144 = vld [vmem:[%s1 + $0xc4] sm:$0xf]
  %v145 = vld [vmem:[%s1 + $0xc8] sm:$0xf]
  %v146 = vld [vmem:[%s1 + $0xcc] sm:$0xf]
  %v147 = vld [vmem:[%s1 + $0xd0] sm:$0xf]
  %v148 = vld [vmem:[%s1 + $0xd4] sm:$0xf]
  %v149 = vld [vmem:[%s1 + $0xd8] sm:$0xf]
  %v150 = vld [vmem:[%s1 + $0xdc] sm:$0xf]
  %v151 = vld [vmem:[%s1 + $0xe0] sm:$0xf]
  %v152 = vld [vmem:[%s1 + $0xe4] sm:$0xf]
  %v153 = vld [vmem:[%s1 + $0xe8] sm:$0xf]
  %v154 = vld [vmem:[%s1 + $0xec] sm:$0xf]
  %v155 = vld [vmem:[%s1 + $0xf0] sm:$0xf]
  %v156 = vld [vmem:[%s1 + $0xf4] sm:$0xf]
  %v157 = vld [vmem:[%s1 + $0xf8] sm:$0xf]
  %v158 = vld [vmem:[%s1 + $0xfc] sm:$0xf]
  %v159 = vld [vmem:[%s1 + $0x100] sm:$0xf]
  %v160 = vld [vmem:[%s1 + $0x104] sm:$0xf]
  %v161 = vld [vmem:[%s1 + $0x108] sm:$0xf]
  %v162 = vld [vmem:[%s1 + $0x10c] sm:$0xf]
  %v163 = vld [vmem:[%s1 + $0x110] sm:$0xf]
  %v164 = vld [vmem:[%s1 + $0x114] sm:$0xf]
  %v165 = vld [vmem:[%s1 + $0x118] sm:$0xf]
  %v166 = vld [vmem:[%s1 + $0x11c] sm:$0xf]
  %v167 = vld [vmem:[%s1 + $0x120] sm:$0xf]
  %v168 = vld [vmem:[%s1 + $0x124] sm:$0xf]
  %v169 = vld [vmem:[%s1 + $0x128] sm:$0xf]
  %v170 = vld [vmem:[%s1 + $0x12c] sm:$0xf]
  %v171 = vld [vmem:[%s1 + $0x130] sm:$0xf]
  %v172 = vld [vmem:[%s1 + $0x134] sm:$0xf]
  %v173 = vld [vmem:[%s1 + $0x138] sm:$0xf]
  %v174 = vld [vmem:[%s1 + $0x13c] sm:$0xf]
  %v175 = vld [vmem:[%s1 + $0x140] sm:$0xf]
  %v176 = vld [vmem:[%s1 + $0x144] sm:$0xf]
  %v177 = vld [vmem:[%s1 + $0x148] sm:$0xf]
  %v178 = vld [vmem:[%s1 + $0x14c] sm:$0xf]
  %v179 = vld [vmem:[%s1 + $0x150] sm:$0xf]
  %v180 = vld [vmem:[%s1 + $0x154] sm:$0xf]
  %v181 = vld [vmem:[%s1 + $0x158] sm:$0xf]
  %v182 = vld [vmem:[%s1 + $0x15c] sm:$0xf]
  %v183 = vld [vmem:[%s1 + $0x160] sm:$0xf]
  %v184 = vld [vmem:[%s1 + $0x164] sm:$0xf]
  %v185 = vld [vmem:[%s1 + $0x168] sm:$0xf]
  %v186 = vld [vmem:[%s1 + $0x16c] sm:$0xf]
  %v187 = vld [vmem:[%s1 + $0x170] sm:$0xf]
  %v188 = vld [vmem:[%s1 + $0x174] sm:$0xf]
  %v189 = vld [vmem:[%s1 + $0x178] sm:$0xf]
  %v190 = vld [vmem:[%s1 + $0x17c] sm:$0xf]
  %v191 = vld [vmem:[%s1 + $0x180] sm:$0xf]
  %v192 = vld [vmem:[%s1 + $0x184] sm:$0xf]
  %v193 = vld [vmem:[%s1 + $0x188] sm:$0xf]
  %v194 = vld [vmem:[%s1 + $0x18c] sm:$0xf]
  %v195 = vld [vmem:[%s1 + $0x190] sm:$0xf]
  %v196 = vld [vmem:[%s1 + $0x194] sm:$0xf]
  %v197 = vld [vmem:[%s1 + $0x198] sm:$0xf]
  %v198 = vld [vmem:[%s1 + $0x19c] sm:$0xf]
  %v199 = vld [vmem:[%s1 + $0x1a0] sm:$0xf]
  %v200 = vld [vmem:[%s1 + $0x1a4] sm:$0xf]
  %v201 = vld [vmem:[%s1 + $0x1a8] sm:$0xf]
  %v202 = vld [vmem:[%s1 + $0x1ac] sm:$0xf]
  %v203 = vld [vmem:[%s1 + $0x1b0] sm:$0xf]
  %v204 = vld [vmem:[%s1 + $0x1b4] sm:$0xf]
  %v205 = vld [vmem:[%s1 + $0x1b8] sm:$0xf]
  %v206 = vld [vmem:[%s1 + $0x1bc] sm:$0xf]
  %v207 = vld [vmem:[%s1 + $0x1c0] sm:$0xf]
  %v208 = vld [vmem:[%s1 + $0x1c4] sm:$0xf]
  %v209 = vld [vmem:[%s1 + $0x1c8] sm:$0xf]
  %v210 = vld [vmem:[%s1 + $0x1cc] sm:$0xf]
  %v211 = vld [vmem:[%s1 + $0x1d0] sm:$0xf]
  %v212 = vld [vmem:[%s1 + $0x1d4] sm:$0xf]
  %v213 = vld [vmem:[%s1 + $0x1d8] sm:$0xf]
  %v214 = vld [vmem:[%s1 + $0x1dc] sm:$0xf]
  %v215 = vld [vmem:[%s1 + $0x1e0] sm:$0xf]
  %v216 = vld [vmem:[%s1 + $0x1e4] sm:$0xf]
  %v217 = vld [vmem:[%s1 + $0x1e8] sm:$0xf]
  %v218 = vld [vmem:[%s1 + $0x1ec] sm:$0xf]
  %v219 = vld [vmem:[%s1 + $0x1f0] sm:$0xf]
  %v220 = vld [vmem:[%s1 + $0x1f4] sm:$0xf]
  %v221 = vld [vmem:[%s1 + $0x1f8] sm:$0xf]
  %v222 = vld [vmem:[%s1 + $0x1fc] sm:$0xf]
  %v223 = vld [vmem:[%s1 + $0x200] sm:$0xf]
  %v224 = vld [vmem:[%s1 + $0x204] sm:$0xf]
  %v225 = vld [vmem:[%s1 + $0x208] sm:$0xf]
  %v226 = vld [vmem:[%s1 + $0x20c] sm:$0xf]
  %v227 = vld [vmem:[%s1 + $0x210] sm:$0xf]
  %v228 = vld [vmem:[%s1 + $0x214] sm:$0xf]
  %v229 = vld [vmem:[%s1 + $0x218] sm:$0xf]
  %v230 = vld [vmem:[%s1 + $0x21c] sm:$0xf]
  %v231 = vld [vmem:[%s1 + $0x220] sm:$0xf]
  %v232 = vld [vmem:[%s1 + $0x224] sm:$0xf]
  %v233 = vld [vmem:[%s1 + $0x228] sm:$0xf]
  %v234 = vld [vmem:[%s1 + $0x22c] sm:$0xf]
  %v235 = vld [vmem:[%s1 + $0x230] sm:$0xf]
  %v236 = vld [vmem:[%s1 + $0x234] sm:$0xf]
  %v237 = vld [vmem:[%s1 + $0x238] sm:$0xf]
  %v238 = vld [vmem:[%s1 + $0x23c] sm:$0xf]
  %v239 = vld [vmem:[%s2] sm:$0x1]
  %v241 = vlaneseq
  %v242 = vshrl.u32 %v241, 7
  %v243 = vsub.s32 0, %v242
  %v244 = vrot.slane %v239, %v243
  %v326 = vunpack.c.l.b16 %v15
  %v327 = vunpack.c.h.b16 %v15
  %v328 = vunpack.c.l.b16 %v16
  %v329 = vunpack.c.h.b16 %v16
  %v330 = vunpack.c.l.b16 %v17
  %v331 = vunpack.c.h.b16 %v17
  %v332 = vunpack.c.l.b16 %v18
  %v333 = vunpack.c.h.b16 %v18
  %v334 = vunpack.c.l.b16 %v19
  %v335 = vunpack.c.l.b16 %v20
  %v336 = vunpack.c.h.b16 %v20
  %v337 = vunpack.c.l.b16 %v21
  %v338 = vunpack.c.h.b16 %v21
  %v339 = vunpack.c.l.b16 %v22
  %v340 = vunpack.c.h.b16 %v22
  %v341 = vunpack.c.l.b16 %v23
  %v342 = vunpack.c.h.b16 %v23
  %v343 = vunpack.c.l.b16 %v24
  %v344 = vunpack.c.l.b16 %v25
  %v345 = vunpack.c.h.b16 %v25
  %v346 = vunpack.c.l.b16 %v26
  %v347 = vunpack.c.h.b16 %v26
  %v348 = vunpack.c.l.b16 %v27
  %v349 = vunpack.c.h.b16 %v27
  %v350 = vunpack.c.l.b16 %v28
  %v351 = vunpack.c.h.b16 %v28
  %v352 = vunpack.c.l.b16 %v29
  %v353 = vunpack.c.l.b16 %v30
  %v354 = vunpack.c.h.b16 %v30
  %v355 = vunpack.c.l.b16 %v31
  %v356 = vunpack.c.h.b16 %v31
  %v357 = vunpack.c.l.b16 %v32
  %v358 = vunpack.c.h.b16 %v32
  %v359 = vunpack.c.l.b16 %v33
  %v360 = vunpack.c.h.b16 %v33
  %v361 = vunpack.c.l.b16 %v34
  %v362 = vunpack.c.l.b16 %v35
  %v363 = vunpack.c.h.b16 %v35
  %v364 = vunpack.c.l.b16 %v36
  %v365 = vunpack.c.h.b16 %v36
  %v366 = vunpack.c.l.b16 %v37
  %v367 = vunpack.c.h.b16 %v37
  %v368 = vunpack.c.l.b16 %v38
  %v369 = vunpack.c.h.b16 %v38
  %v370 = vunpack.c.l.b16 %v39
  %v371 = vunpack.c.l.b16 %v40
  %v372 = vunpack.c.h.b16 %v40
  %v373 = vunpack.c.l.b16 %v41
  %v374 = vunpack.c.h.b16 %v41
  %v375 = vunpack.c.l.b16 %v42
  %v376 = vunpack.c.h.b16 %v42
  %v377 = vunpack.c.l.b16 %v43
  %v378 = vunpack.c.h.b16 %v43
  %v379 = vunpack.c.l.b16 %v44
  %v380 = vunpack.c.l.b16 %v45
  %v381 = vunpack.c.h.b16 %v45
  %v382 = vunpack.c.l.b16 %v46
  %v383 = vunpack.c.h.b16 %v46
  %v384 = vunpack.c.l.b16 %v47
  %v385 = vunpack.c.h.b16 %v47
  %v386 = vunpack.c.l.b16 %v48
  %v387 = vunpack.c.h.b16 %v48
  %v388 = vunpack.c.l.b16 %v49
  %v389 = vunpack.c.l.b16 %v50
  %v390 = vunpack.c.h.b16 %v50
  %v391 = vunpack.c.l.b16 %v51
  %v392 = vunpack.c.h.b16 %v51
  %v393 = vunpack.c.l.b16 %v52
  %v394 = vunpack.c.h.b16 %v52
  %v395 = vunpack.c.l.b16 %v53
  %v396 = vunpack.c.h.b16 %v53
  %v397 = vunpack.c.l.b16 %v54
  %v398 = vunpack.c.l.b16 %v55
  %v399 = vunpack.c.h.b16 %v55
  %v400 = vunpack.c.l.b16 %v56
  %v401 = vunpack.c.h.b16 %v56
  %v402 = vunpack.c.l.b16 %v57
  %v403 = vunpack.c.h.b16 %v57
  %v404 = vunpack.c.l.b16 %v58
  %v405 = vunpack.c.h.b16 %v58
  %v406 = vunpack.c.l.b16 %v59
  %v407 = vunpack.c.l.b16 %v60
  %v408 = vunpack.c.h.b16 %v60
  %v409 = vunpack.c.l.b16 %v61
  %v410 = vunpack.c.h.b16 %v61
  %v411 = vunpack.c.l.b16 %v62
  %v412 = vunpack.c.h.b16 %v62
  %v413 = vunpack.c.l.b16 %v63
  %v414 = vunpack.c.h.b16 %v63
  %v415 = vunpack.c.l.b16 %v64
  %v416 = vunpack.c.l.b16 %v65
  %v417 = vunpack.c.h.b16 %v65
  %v418 = vunpack.c.l.b16 %v66
  %v419 = vunpack.c.h.b16 %v66
  %v420 = vunpack.c.l.b16 %v67
  %v421 = vunpack.c.h.b16 %v67
  %v422 = vunpack.c.l.b16 %v68
  %v423 = vunpack.c.h.b16 %v68
  %v424 = vunpack.c.l.b16 %v69
  %v425 = vunpack.c.l.b16 %v70
  %v426 = vunpack.c.h.b16 %v70
  %v427 = vunpack.c.l.b16 %v71
  %v428 = vunpack.c.h.b16 %v71
  %v429 = vunpack.c.l.b16 %v72
  %v430 = vunpack.c.h.b16 %v72
  %v431 = vunpack.c.l.b16 %v73
  %v432 = vunpack.c.h.b16 %v73
  %v433 = vunpack.c.l.b16 %v74
  %v434 = vunpack.c.l.b16 %v75
  %v435 = vunpack.c.h.b16 %v75
  %v436 = vunpack.c.l.b16 %v76
  %v437 = vunpack.c.h.b16 %v76
  %v438 = vunpack.c.l.b16 %v77
  %v439 = vunpack.c.h.b16 %v77
  %v440 = vunpack.c.l.b16 %v78
  %v441 = vunpack.c.h.b16 %v78
  %v442 = vunpack.c.l.b16 %v79
  %v443 = vunpack.c.l.b16 %v80
  %v444 = vunpack.c.h.b16 %v80
  %v445 = vunpack.c.l.b16 %v81
  %v446 = vunpack.c.h.b16 %v81
  %v447 = vunpack.c.l.b16 %v82
  %v448 = vunpack.c.h.b16 %v82
  %v449 = vunpack.c.l.b16 %v83
  %v450 = vunpack.c.h.b16 %v83
  %v451 = vunpack.c.l.b16 %v84
  %v452 = vunpack.c.l.b16 %v85
  %v453 = vunpack.c.h.b16 %v85
  %v454 = vunpack.c.l.b16 %v86
  %v455 = vunpack.c.h.b16 %v86
  %v456 = vunpack.c.l.b16 %v87
  %v457 = vunpack.c.h.b16 %v87
  %v458 = vunpack.c.l.b16 %v88
  %v459 = vunpack.c.h.b16 %v88
  %v460 = vunpack.c.l.b16 %v89
  %v461 = vunpack.c.l.b16 %v90
  %v462 = vunpack.c.h.b16 %v90
  %v463 = vunpack.c.l.b16 %v91
  %v464 = vunpack.c.h.b16 %v91
  %v465 = vunpack.c.l.b16 %v92
  %v466 = vunpack.c.h.b16 %v92
  %v467 = vunpack.c.l.b16 %v93
  %v468 = vunpack.c.h.b16 %v93
  %v469 = vunpack.c.l.b16 %v94
  %v470 = vpack.c.b16 %v335, %v326
  %v471 = vpack.c.b16 %v336, %v327
  %v472 = vpack.c.b16 %v337, %v328
  %v473 = vpack.c.b16 %v338, %v329
  %v474 = vpack.c.b16 %v339, %v330
  %v475 = vpack.c.b16 %v340, %v331
  %v476 = vpack.c.b16 %v341, %v332
  %v477 = vpack.c.b16 %v342, %v333
  %v478 = vpack.c.b16 %v343, %v334
  %v479 = vpack.c.b16 %v353, %v344
  %v480 = vpack.c.b16 %v354, %v345
  %v481 = vpack.c.b16 %v355, %v346
  %v482 = vpack.c.b16 %v356, %v347
  %v483 = vpack.c.b16 %v357, %v348
  %v484 = vpack.c.b16 %v358, %v349
  %v485 = vpack.c.b16 %v359, %v350
  %v486 = vpack.c.b16 %v360, %v351
  %v487 = vpack.c.b16 %v361, %v352
  %v488 = vpack.c.b16 %v371, %v362
  %v489 = vpack.c.b16 %v372, %v363
  %v490 = vpack.c.b16 %v373, %v364
  %v491 = vpack.c.b16 %v374, %v365
  %v492 = vpack.c.b16 %v375, %v366
  %v493 = vpack.c.b16 %v376, %v367
  %v494 = vpack.c.b16 %v377, %v368
  %v495 = vpack.c.b16 %v378, %v369
  %v496 = vpack.c.b16 %v379, %v370
  %v497 = vpack.c.b16 %v389, %v380
  %v498 = vpack.c.b16 %v390, %v381
  %v499 = vpack.c.b16 %v391, %v382
  %v500 = vpack.c.b16 %v392, %v383
  %v501 = vpack.c.b16 %v393, %v384
  %v502 = vpack.c.b16 %v394, %v385
  %v503 = vpack.c.b16 %v395, %v386
  %v504 = vpack.c.b16 %v396, %v387
  %v505 = vpack.c.b16 %v397, %v388
  %v506 = vpack.c.b16 %v407, %v398
  %v507 = vpack.c.b16 %v408, %v399
  %v508 = vpack.c.b16 %v409, %v400
  %v509 = vpack.c.b16 %v410, %v401
  %v510 = vpack.c.b16 %v411, %v402
  %v511 = vpack.c.b16 %v412, %v403
  %v512 = vpack.c.b16 %v413, %v404
  %v513 = vpack.c.b16 %v414, %v405
  %v514 = vpack.c.b16 %v415, %v406
  %v515 = vpack.c.b16 %v425, %v416
  %v516 = vpack.c.b16 %v426, %v417
  %v517 = vpack.c.b16 %v427, %v418
  %v518 = vpack.c.b16 %v428, %v419
  %v519 = vpack.c.b16 %v429, %v420
  %v520 = vpack.c.b16 %v430, %v421
  %v521 = vpack.c.b16 %v431, %v422
  %v522 = vpack.c.b16 %v432, %v423
  %v523 = vpack.c.b16 %v433, %v424
  %v524 = vpack.c.b16 %v443, %v434
  %v525 = vpack.c.b16 %v444, %v435
  %v526 = vpack.c.b16 %v445, %v436
  %v527 = vpack.c.b16 %v446, %v437
  %v528 = vpack.c.b16 %v447, %v438
  %v529 = vpack.c.b16 %v448, %v439
  %v530 = vpack.c.b16 %v449, %v440
  %v531 = vpack.c.b16 %v450, %v441
  %v532 = vpack.c.b16 %v451, %v442
  %v533 = vpack.c.b16 %v461, %v452
  %v534 = vpack.c.b16 %v462, %v453
  %v535 = vpack.c.b16 %v463, %v454
  %v536 = vpack.c.b16 %v464, %v455
  %v537 = vpack.c.b16 %v465, %v456
  %v538 = vpack.c.b16 %v466, %v457
  %v539 = vpack.c.b16 %v467, %v458
  %v540 = vpack.c.b16 %v468, %v459
  %v541 = vpack.c.b16 %v469, %v460
  %v758 = vunpack.c.l.b16 %v95
  %v759 = vunpack.c.l.b16 %v96
  %v760 = vunpack.c.l.b16 %v97
  %v761 = vunpack.c.l.b16 %v98
  %v762 = vunpack.c.l.b16 %v99
  %v763 = vunpack.c.l.b16 %v100
  %v764 = vunpack.c.l.b16 %v101
  %v765 = vunpack.c.l.b16 %v102
  %v766 = vunpack.c.l.b16 %v103
  %v767 = vunpack.c.l.b16 %v104
  %v768 = vunpack.c.l.b16 %v105
  %v769 = vunpack.c.l.b16 %v106
  %v770 = vunpack.c.l.b16 %v107
  %v771 = vunpack.c.l.b16 %v108
  %v772 = vunpack.c.l.b16 %v109
  %v773 = vunpack.c.l.b16 %v110
  %v774 = vunpack.c.l.b16 %v111
  %v775 = vunpack.c.l.b16 %v112
  %v776 = vunpack.c.l.b16 %v113
  %v777 = vunpack.c.l.b16 %v114
  %v778 = vunpack.c.l.b16 %v115
  %v779 = vunpack.c.l.b16 %v116
  %v780 = vunpack.c.l.b16 %v117
  %v781 = vunpack.c.l.b16 %v118
  %v782 = vunpack.c.l.b16 %v119
  %v783 = vunpack.c.l.b16 %v120
  %v784 = vunpack.c.l.b16 %v121
  %v785 = vunpack.c.l.b16 %v122
  %v786 = vunpack.c.l.b16 %v123
  %v787 = vunpack.c.l.b16 %v124
  %v788 = vunpack.c.l.b16 %v125
  %v789 = vunpack.c.l.b16 %v126
  %v790 = vunpack.c.l.b16 %v127
  %v791 = vunpack.c.l.b16 %v128
  %v792 = vunpack.c.l.b16 %v129
  %v793 = vunpack.c.l.b16 %v130
  %v794 = vunpack.c.l.b16 %v131
  %v795 = vunpack.c.l.b16 %v132
  %v796 = vunpack.c.l.b16 %v133
  %v797 = vunpack.c.l.b16 %v134
  %v798 = vunpack.c.l.b16 %v135
  %v799 = vunpack.c.l.b16 %v136
  %v800 = vunpack.c.l.b16 %v137
  %v801 = vunpack.c.l.b16 %v138
  %v802 = vunpack.c.l.b16 %v139
  %v803 = vunpack.c.l.b16 %v140
  %v804 = vunpack.c.l.b16 %v141
  %v805 = vunpack.c.l.b16 %v142
  %v806 = vunpack.c.l.b16 %v143
  %v807 = vunpack.c.l.b16 %v144
  %v808 = vunpack.c.l.b16 %v145
  %v809 = vunpack.c.l.b16 %v146
  %v810 = vunpack.c.l.b16 %v147
  %v811 = vunpack.c.l.b16 %v148
  %v812 = vunpack.c.l.b16 %v149
  %v813 = vunpack.c.l.b16 %v150
  %v814 = vunpack.c.l.b16 %v151
  %v815 = vunpack.c.l.b16 %v152
  %v816 = vunpack.c.l.b16 %v153
  %v817 = vunpack.c.l.b16 %v154
  %v818 = vunpack.c.l.b16 %v155
  %v819 = vunpack.c.l.b16 %v156
  %v820 = vunpack.c.l.b16 %v157
  %v821 = vunpack.c.l.b16 %v158
  %v822 = vunpack.c.l.b16 %v159
  %v823 = vunpack.c.l.b16 %v160
  %v824 = vunpack.c.l.b16 %v161
  %v825 = vunpack.c.l.b16 %v162
  %v826 = vunpack.c.l.b16 %v163
  %v827 = vunpack.c.l.b16 %v164
  %v828 = vunpack.c.l.b16 %v165
  %v829 = vunpack.c.l.b16 %v166
  %v830 = vunpack.c.l.b16 %v167
  %v831 = vunpack.c.l.b16 %v168
  %v832 = vunpack.c.l.b16 %v169
  %v833 = vunpack.c.l.b16 %v170
  %v834 = vunpack.c.l.b16 %v171
  %v835 = vunpack.c.l.b16 %v172
  %v836 = vunpack.c.l.b16 %v173
  %v837 = vunpack.c.l.b16 %v174
  %v838 = vunpack.c.l.b16 %v175
  %v839 = vunpack.c.l.b16 %v176
  %v840 = vunpack.c.l.b16 %v177
  %v841 = vunpack.c.l.b16 %v178
  %v842 = vunpack.c.l.b16 %v179
  %v843 = vunpack.c.l.b16 %v180
  %v844 = vunpack.c.l.b16 %v181
  %v845 = vunpack.c.l.b16 %v182
  %v846 = vunpack.c.l.b16 %v183
  %v847 = vunpack.c.l.b16 %v184
  %v848 = vunpack.c.l.b16 %v185
  %v849 = vunpack.c.l.b16 %v186
  %v850 = vunpack.c.l.b16 %v187
  %v851 = vunpack.c.l.b16 %v188
  %v852 = vunpack.c.l.b16 %v189
  %v853 = vunpack.c.l.b16 %v190
  %v854 = vunpack.c.l.b16 %v191
  %v855 = vunpack.c.l.b16 %v192
  %v856 = vunpack.c.l.b16 %v193
  %v857 = vunpack.c.l.b16 %v194
  %v858 = vunpack.c.l.b16 %v195
  %v859 = vunpack.c.l.b16 %v196
  %v860 = vunpack.c.l.b16 %v197
  %v861 = vunpack.c.l.b16 %v198
  %v862 = vunpack.c.l.b16 %v199
  %v863 = vunpack.c.l.b16 %v200
  %v864 = vunpack.c.l.b16 %v201
  %v865 = vunpack.c.l.b16 %v202
  %v866 = vunpack.c.l.b16 %v203
  %v867 = vunpack.c.l.b16 %v204
  %v868 = vunpack.c.l.b16 %v205
  %v869 = vunpack.c.l.b16 %v206
  %v870 = vunpack.c.l.b16 %v207
  %v871 = vunpack.c.l.b16 %v208
  %v872 = vunpack.c.l.b16 %v209
  %v873 = vunpack.c.l.b16 %v210
  %v874 = vunpack.c.l.b16 %v211
  %v875 = vunpack.c.l.b16 %v212
  %v876 = vunpack.c.l.b16 %v213
  %v877 = vunpack.c.l.b16 %v214
  %v878 = vunpack.c.l.b16 %v215
  %v879 = vunpack.c.l.b16 %v216
  %v880 = vunpack.c.l.b16 %v217
  %v881 = vunpack.c.l.b16 %v218
  %v882 = vunpack.c.l.b16 %v219
  %v883 = vunpack.c.l.b16 %v220
  %v884 = vunpack.c.l.b16 %v221
  %v885 = vunpack.c.l.b16 %v222
  %v886 = vunpack.c.l.b16 %v223
  %v887 = vunpack.c.l.b16 %v224
  %v888 = vunpack.c.l.b16 %v225
  %v889 = vunpack.c.l.b16 %v226
  %v890 = vunpack.c.l.b16 %v227
  %v891 = vunpack.c.l.b16 %v228
  %v892 = vunpack.c.l.b16 %v229
  %v893 = vunpack.c.l.b16 %v230
  %v894 = vunpack.c.l.b16 %v231
  %v895 = vunpack.c.l.b16 %v232
  %v896 = vunpack.c.l.b16 %v233
  %v897 = vunpack.c.l.b16 %v234
  %v898 = vunpack.c.l.b16 %v235
  %v899 = vunpack.c.l.b16 %v236
  %v900 = vunpack.c.l.b16 %v237
  %v901 = vunpack.c.l.b16 %v238
  %v902 = vpack.c.b16 %v759, %v758
  %v903 = vpack.c.b16 %v761, %v760
  %v904 = vpack.c.b16 %v763, %v762
  %v905 = vpack.c.b16 %v765, %v764
  %v906 = vpack.c.b16 %v767, %v766
  %v907 = vpack.c.b16 %v769, %v768
  %v908 = vpack.c.b16 %v771, %v770
  %v909 = vpack.c.b16 %v773, %v772
  %v910 = vpack.c.b16 %v775, %v774
  %v911 = vpack.c.b16 %v777, %v776
  %v912 = vpack.c.b16 %v779, %v778
  %v913 = vpack.c.b16 %v781, %v780
  %v914 = vpack.c.b16 %v783, %v782
  %v915 = vpack.c.b16 %v785, %v784
  %v916 = vpack.c.b16 %v787, %v786
  %v917 = vpack.c.b16 %v789, %v788
  %v918 = vpack.c.b16 %v791, %v790
  %v919 = vpack.c.b16 %v793, %v792
  %v920 = vpack.c.b16 %v795, %v794
  %v921 = vpack.c.b16 %v797, %v796
  %v922 = vpack.c.b16 %v799, %v798
  %v923 = vpack.c.b16 %v801, %v800
  %v924 = vpack.c.b16 %v803, %v802
  %v925 = vpack.c.b16 %v805, %v804
  %v926 = vpack.c.b16 %v807, %v806
  %v927 = vpack.c.b16 %v809, %v808
  %v928 = vpack.c.b16 %v811, %v810
  %v929 = vpack.c.b16 %v813, %v812
  %v930 = vpack.c.b16 %v815, %v814
  %v931 = vpack.c.b16 %v817, %v816
  %v932 = vpack.c.b16 %v819, %v818
  %v933 = vpack.c.b16 %v821, %v820
  %v934 = vpack.c.b16 %v823, %v822
  %v935 = vpack.c.b16 %v825, %v824
  %v936 = vpack.c.b16 %v827, %v826
  %v937 = vpack.c.b16 %v829, %v828
  %v938 = vpack.c.b16 %v831, %v830
  %v939 = vpack.c.b16 %v833, %v832
  %v940 = vpack.c.b16 %v835, %v834
  %v941 = vpack.c.b16 %v837, %v836
  %v942 = vpack.c.b16 %v839, %v838
  %v943 = vpack.c.b16 %v841, %v840
  %v944 = vpack.c.b16 %v843, %v842
  %v945 = vpack.c.b16 %v845, %v844
  %v946 = vpack.c.b16 %v847, %v846
  %v947 = vpack.c.b16 %v849, %v848
  %v948 = vpack.c.b16 %v851, %v850
  %v949 = vpack.c.b16 %v853, %v852
  %v950 = vpack.c.b16 %v855, %v854
  %v951 = vpack.c.b16 %v857, %v856
  %v952 = vpack.c.b16 %v859, %v858
  %v953 = vpack.c.b16 %v861, %v860
  %v954 = vpack.c.b16 %v863, %v862
  %v955 = vpack.c.b16 %v865, %v864
  %v956 = vpack.c.b16 %v867, %v866
  %v957 = vpack.c.b16 %v869, %v868
  %v958 = vpack.c.b16 %v871, %v870
  %v959 = vpack.c.b16 %v873, %v872
  %v960 = vpack.c.b16 %v875, %v874
  %v961 = vpack.c.b16 %v877, %v876
  %v962 = vpack.c.b16 %v879, %v878
  %v963 = vpack.c.b16 %v881, %v880
  %v964 = vpack.c.b16 %v883, %v882
  %v965 = vpack.c.b16 %v885, %v884
  %v966 = vpack.c.b16 %v887, %v886
  %v967 = vpack.c.b16 %v889, %v888
  %v968 = vpack.c.b16 %v891, %v890
  %v969 = vpack.c.b16 %v893, %v892
  %v970 = vpack.c.b16 %v895, %v894
  %v971 = vpack.c.b16 %v897, %v896
  %v972 = vpack.c.b16 %v899, %v898
  %v973 = vpack.c.b16 %v901, %v900
  %1046 = vmatprep.subr.bf16.mxu0 0
  %1047 = vmatpush1.bf16.msra.mxu0 %v909
  %1048 = vmatprep.subr.bf16.mxu0 0
  %1049 = vmatpush1.bf16.msra.mxu0 %v908
  %1050 = vmatprep.subr.bf16.mxu0 0
  %1051 = vmatpush1.bf16.msra.mxu0 %v907
  %1052 = vmatprep.subr.bf16.mxu0 0
  %1053 = vmatpush1.bf16.msra.mxu0 %v906
  %1054 = vmatprep.subr.bf16.mxu0 0
  %1055 = vmatpush1.bf16.msra.mxu0 %v905
  %1056 = vmatprep.subr.bf16.mxu0 0
  %1057 = vmatpush1.bf16.msra.mxu0 %v904
  %1058 = vmatprep.subr.bf16.mxu0 0
  %1059 = vmatpush1.bf16.msra.mxu0 %v903
  %1060 = vmatprep.subr.bf16.mxu0 0
  %1061 = vmatpush1.bf16.msra.mxu0 %v902
  %1062 = vmatprep.subr.bf16.mxu0 0
  %1063 = vmatpush2.bf16.msra.mxu0 %v917
  %1064 = vmatprep.subr.bf16.mxu0 0
  %1065 = vmatpush2.bf16.msra.mxu0 %v916
  %1066 = vmatprep.subr.bf16.mxu0 0
  %1067 = vmatpush2.bf16.msra.mxu0 %v915
  %1068 = vmatprep.subr.bf16.mxu0 0
  %1069 = vmatpush2.bf16.msra.mxu0 %v914
  %1070 = vmatprep.subr.bf16.mxu0 0
  %1071 = vmatpush2.bf16.msra.mxu0 %v913
  %1072 = vmatprep.subr.bf16.mxu0 0
  %1073 = vmatpush2.bf16.msra.mxu0 %v912
  %1074 = vmatprep.subr.bf16.mxu0 0
  %1075 = vmatpush2.bf16.msra.mxu0 %v911
  %1076 = vmatprep.subr.bf16.mxu0 0
  %1077 = vmatpush2.bf16.msra.mxu0 %v910
  %1078 = vmatprep.mubr.bf16.mxu0 %v471
  %1079 = vmatmul.mubr.bf16.gmra.mxu0 %v470
  %v1080 = vpop.f32.mrf.mxu0
  %v1081 = vadd.f32 %v244, %v1080
  %v1082 = vpop.f32.mrf.mxu0
  %v1083 = vpop.f32.mrf.mxu0
  %v1084 = vadd.f32 %v244, %v1083
  %v1085 = vpop.f32.mrf.mxu0
  %1086 = vmatprep.mubr.bf16.mxu0 %v480
  %1087 = vmatmul.mubr.bf16.gmra.mxu0 %v479
  %v1088 = vpop.f32.mrf.mxu0
  %v1089 = vadd.f32 %v244, %v1088
  %v1090 = vpop.f32.mrf.mxu0
  %v1091 = vpop.f32.mrf.mxu0
  %v1092 = vadd.f32 %v244, %v1091
  %v1093 = vpop.f32.mrf.mxu0
  %1094 = vmatprep.mubr.bf16.mxu0 %v489
  %1095 = vmatmul.mubr.bf16.gmra.mxu0 %v488
  %v1096 = vpop.f32.mrf.mxu0
  %v1097 = vadd.f32 %v244, %v1096
  %v1098 = vpop.f32.mrf.mxu0
  %v1099 = vpop.f32.mrf.mxu0
  %v1100 = vadd.f32 %v244, %v1099
  %v1101 = vpop.f32.mrf.mxu0
  %1102 = vmatprep.mubr.bf16.mxu0 %v498
  %1103 = vmatmul.mubr.bf16.gmra.mxu0 %v497
  %v1104 = vpop.f32.mrf.mxu0
  %v1105 = vadd.f32 %v244, %v1104
  %v1106 = vpop.f32.mrf.mxu0
  %v1107 = vpop.f32.mrf.mxu0
  %v1108 = vadd.f32 %v244, %v1107
  %v1109 = vpop.f32.mrf.mxu0
  %1110 = vmatprep.mubr.bf16.mxu0 %v507
  %1111 = vmatmul.mubr.bf16.gmra.mxu0 %v506
  %v1112 = vpop.f32.mrf.mxu0
  %v1113 = vadd.f32 %v244, %v1112
  %v1114 = vpop.f32.mrf.mxu0
  %v1115 = vpop.f32.mrf.mxu0
  %v1116 = vadd.f32 %v244, %v1115
  %v1117 = vpop.f32.mrf.mxu0
  %1118 = vmatprep.mubr.bf16.mxu0 %v516
  %1119 = vmatmul.mubr.bf16.gmra.mxu0 %v515
  %v1120 = vpop.f32.mrf.mxu0
  %v1121 = vadd.f32 %v244, %v1120
  %v1122 = vpop.f32.mrf.mxu0
  %v1123 = vpop.f32.mrf.mxu0
  %v1124 = vadd.f32 %v244, %v1123
  %v1125 = vpop.f32.mrf.mxu0
  %1126 = vmatprep.mubr.bf16.mxu0 %v525
  %1127 = vmatmul.mubr.bf16.gmra.mxu0 %v524
  %v1128 = vpop.f32.mrf.mxu0
  %v1129 = vadd.f32 %v244, %v1128
  %v1130 = vpop.f32.mrf.mxu0
  %v1131 = vpop.f32.mrf.mxu0
  %v1132 = vadd.f32 %v244, %v1131
  %v1133 = vpop.f32.mrf.mxu0
  %1134 = vmatprep.mubr.bf16.mxu0 %v534
  %1135 = vmatmul.mubr.bf16.gmra.mxu0 %v533
  %v1136 = vpop.f32.mrf.mxu0
  %v1137 = vadd.f32 %v244, %v1136
  %v1138 = vpop.f32.mrf.mxu0
  %v1139 = vpop.f32.mrf.mxu0
  %v1140 = vadd.f32 %v244, %v1139
  %v1141 = vpop.f32.mrf.mxu0
  %1142 = vdwg.mxu0
  %1143 = vmatprep.subr.bf16.mxu0 0
  %1144 = vmatpush1.bf16.msra.mxu0 %v925
  %1145 = vmatprep.subr.bf16.mxu0 0
  %1146 = vmatpush1.bf16.msra.mxu0 %v924
  %1147 = vmatprep.subr.bf16.mxu0 0
  %1148 = vmatpush1.bf16.msra.mxu0 %v923
  %1149 = vmatprep.subr.bf16.mxu0 0
  %1150 = vmatpush1.bf16.msra.mxu0 %v922
  %1151 = vmatprep.subr.bf16.mxu0 0
  %1152 = vmatpush1.bf16.msra.mxu0 %v921
  %1153 = vmatprep.subr.bf16.mxu0 0
  %1154 = vmatpush1.bf16.msra.mxu0 %v920
  %1155 = vmatprep.subr.bf16.mxu0 0
  %1156 = vmatpush1.bf16.msra.mxu0 %v919
  %1157 = vmatprep.subr.bf16.mxu0 0
  %1158 = vmatpush1.bf16.msra.mxu0 %v918
  %1159 = vmatprep.subr.bf16.mxu0 0
  %1160 = vmatpush2.bf16.msra.mxu0 %v933
  %1161 = vmatprep.subr.bf16.mxu0 0
  %1162 = vmatpush2.bf16.msra.mxu0 %v932
  %1163 = vmatprep.subr.bf16.mxu0 0
  %1164 = vmatpush2.bf16.msra.mxu0 %v931
  %1165 = vmatprep.subr.bf16.mxu0 0
  %1166 = vmatpush2.bf16.msra.mxu0 %v930
  %1167 = vmatprep.subr.bf16.mxu0 0
  %1168 = vmatpush2.bf16.msra.mxu0 %v929
  %1169 = vmatprep.subr.bf16.mxu0 0
  %1170 = vmatpush2.bf16.msra.mxu0 %v928
  %1171 = vmatprep.subr.bf16.mxu0 0
  %1172 = vmatpush2.bf16.msra.mxu0 %v927
  %1173 = vmatprep.subr.bf16.mxu0 0
  %1174 = vmatpush2.bf16.msra.mxu0 %v926
  %1175 = vmatprep.mubr.bf16.mxu0 %v473
  %1176 = vmatmul.mubr.bf16.gmra.mxu0 %v472
  %v1177 = vpop.f32.mrf.mxu0
  %v1178 = vadd.f32 %v1081, %v1177
  %v1179 = vpop.f32.mrf.mxu0
  %v1180 = vpop.f32.mrf.mxu0
  %v1181 = vadd.f32 %v1084, %v1180
  %v1182 = vpop.f32.mrf.mxu0
  %1183 = vmatprep.mubr.bf16.mxu0 %v482
  %1184 = vmatmul.mubr.bf16.gmra.mxu0 %v481
  %v1185 = vpop.f32.mrf.mxu0
  %v1186 = vadd.f32 %v1089, %v1185
  %v1187 = vpop.f32.mrf.mxu0
  %v1188 = vpop.f32.mrf.mxu0
  %v1189 = vadd.f32 %v1092, %v1188
  %v1190 = vpop.f32.mrf.mxu0
  %1191 = vmatprep.mubr.bf16.mxu0 %v491
  %1192 = vmatmul.mubr.bf16.gmra.mxu0 %v490
  %v1193 = vpop.f32.mrf.mxu0
  %v1194 = vadd.f32 %v1097, %v1193
  %v1195 = vpop.f32.mrf.mxu0
  %v1196 = vpop.f32.mrf.mxu0
  %v1197 = vadd.f32 %v1100, %v1196
  %v1198 = vpop.f32.mrf.mxu0
  %1199 = vmatprep.mubr.bf16.mxu0 %v500
  %1200 = vmatmul.mubr.bf16.gmra.mxu0 %v499
  %v1201 = vpop.f32.mrf.mxu0
  %v1202 = vadd.f32 %v1105, %v1201
  %v1203 = vpop.f32.mrf.mxu0
  %v1204 = vpop.f32.mrf.mxu0
  %v1205 = vadd.f32 %v1108, %v1204
  %v1206 = vpop.f32.mrf.mxu0
  %1207 = vmatprep.mubr.bf16.mxu0 %v509
  %1208 = vmatmul.mubr.bf16.gmra.mxu0 %v508
  %v1209 = vpop.f32.mrf.mxu0
  %v1210 = vadd.f32 %v1113, %v1209
  %v1211 = vpop.f32.mrf.mxu0
  %v1212 = vpop.f32.mrf.mxu0
  %v1213 = vadd.f32 %v1116, %v1212
  %v1214 = vpop.f32.mrf.mxu0
  %1215 = vmatprep.mubr.bf16.mxu0 %v518
  %1216 = vmatmul.mubr.bf16.gmra.mxu0 %v517
  %v1217 = vpop.f32.mrf.mxu0
  %v1218 = vadd.f32 %v1121, %v1217
  %v1219 = vpop.f32.mrf.mxu0
  %v1220 = vpop.f32.mrf.mxu0
  %v1221 = vadd.f32 %v1124, %v1220
  %v1222 = vpop.f32.mrf.mxu0
  %1223 = vmatprep.mubr.bf16.mxu0 %v527
  %1224 = vmatmul.mubr.bf16.gmra.mxu0 %v526
  %v1225 = vpop.f32.mrf.mxu0
  %v1226 = vadd.f32 %v1129, %v1225
  %v1227 = vpop.f32.mrf.mxu0
  %v1228 = vpop.f32.mrf.mxu0
  %v1229 = vadd.f32 %v1132, %v1228
  %v1230 = vpop.f32.mrf.mxu0
  %1231 = vmatprep.mubr.bf16.mxu0 %v536
  %1232 = vmatmul.mubr.bf16.gmra.mxu0 %v535
  %v1233 = vpop.f32.mrf.mxu0
  %v1234 = vadd.f32 %v1137, %v1233
  %v1235 = vpop.f32.mrf.mxu0
  %v1236 = vpop.f32.mrf.mxu0
  %v1237 = vadd.f32 %v1140, %v1236
  %v1238 = vpop.f32.mrf.mxu0
  %1239 = vdwg.mxu0
  %1240 = vmatprep.subr.bf16.mxu0 0
  %1241 = vmatpush1.bf16.msra.mxu0 %v941
  %1242 = vmatprep.subr.bf16.mxu0 0
  %1243 = vmatpush1.bf16.msra.mxu0 %v940
  %1244 = vmatprep.subr.bf16.mxu0 0
  %1245 = vmatpush1.bf16.msra.mxu0 %v939
  %1246 = vmatprep.subr.bf16.mxu0 0
  %1247 = vmatpush1.bf16.msra.mxu0 %v938
  %1248 = vmatprep.subr.bf16.mxu0 0
  %1249 = vmatpush1.bf16.msra.mxu0 %v937
  %1250 = vmatprep.subr.bf16.mxu0 0
  %1251 = vmatpush1.bf16.msra.mxu0 %v936
  %1252 = vmatprep.subr.bf16.mxu0 0
  %1253 = vmatpush1.bf16.msra.mxu0 %v935
  %1254 = vmatprep.subr.bf16.mxu0 0
  %1255 = vmatpush1.bf16.msra.mxu0 %v934
  %1256 = vmatprep.subr.bf16.mxu0 0
  %1257 = vmatpush2.bf16.msra.mxu0 %v949
  %1258 = vmatprep.subr.bf16.mxu0 0
  %1259 = vmatpush2.bf16.msra.mxu0 %v948
  %1260 = vmatprep.subr.bf16.mxu0 0
  %1261 = vmatpush2.bf16.msra.mxu0 %v947
  %1262 = vmatprep.subr.bf16.mxu0 0
  %1263 = vmatpush2.bf16.msra.mxu0 %v946
  %1264 = vmatprep.subr.bf16.mxu0 0
  %1265 = vmatpush2.bf16.msra.mxu0 %v945
  %1266 = vmatprep.subr.bf16.mxu0 0
  %1267 = vmatpush2.bf16.msra.mxu0 %v944
  %1268 = vmatprep.subr.bf16.mxu0 0
  %1269 = vmatpush2.bf16.msra.mxu0 %v943
  %1270 = vmatprep.subr.bf16.mxu0 0
  %1271 = vmatpush2.bf16.msra.mxu0 %v942
  %1272 = vmatprep.mubr.bf16.mxu0 %v475
  %1273 = vmatmul.mubr.bf16.gmra.mxu0 %v474
  %v1274 = vpop.f32.mrf.mxu0
  %v1275 = vadd.f32 %v1178, %v1274
  %v1276 = vpop.f32.mrf.mxu0
  %v1277 = vpop.f32.mrf.mxu0
  %v1278 = vadd.f32 %v1181, %v1277
  %v1279 = vpop.f32.mrf.mxu0
  %1280 = vmatprep.mubr.bf16.mxu0 %v484
  %1281 = vmatmul.mubr.bf16.gmra.mxu0 %v483
  %v1282 = vpop.f32.mrf.mxu0
  %v1283 = vadd.f32 %v1186, %v1282
  %v1284 = vpop.f32.mrf.mxu0
  %v1285 = vpop.f32.mrf.mxu0
  %v1286 = vadd.f32 %v1189, %v1285
  %v1287 = vpop.f32.mrf.mxu0
  %1288 = vmatprep.mubr.bf16.mxu0 %v493
  %1289 = vmatmul.mubr.bf16.gmra.mxu0 %v492
  %v1290 = vpop.f32.mrf.mxu0
  %v1291 = vadd.f32 %v1194, %v1290
  %v1292 = vpop.f32.mrf.mxu0
  %v1293 = vpop.f32.mrf.mxu0
  %v1294 = vadd.f32 %v1197, %v1293
  %v1295 = vpop.f32.mrf.mxu0
  %1296 = vmatprep.mubr.bf16.mxu0 %v502
  %1297 = vmatmul.mubr.bf16.gmra.mxu0 %v501
  %v1298 = vpop.f32.mrf.mxu0
  %v1299 = vadd.f32 %v1202, %v1298
  %v1300 = vpop.f32.mrf.mxu0
  %v1301 = vpop.f32.mrf.mxu0
  %v1302 = vadd.f32 %v1205, %v1301
  %v1303 = vpop.f32.mrf.mxu0
  %1304 = vmatprep.mubr.bf16.mxu0 %v511
  %1305 = vmatmul.mubr.bf16.gmra.mxu0 %v510
  %v1306 = vpop.f32.mrf.mxu0
  %v1307 = vadd.f32 %v1210, %v1306
  %v1308 = vpop.f32.mrf.mxu0
  %v1309 = vpop.f32.mrf.mxu0
  %v1310 = vadd.f32 %v1213, %v1309
  %v1311 = vpop.f32.mrf.mxu0
  %1312 = vmatprep.mubr.bf16.mxu0 %v520
  %1313 = vmatmul.mubr.bf16.gmra.mxu0 %v519
  %v1314 = vpop.f32.mrf.mxu0
  %v1315 = vadd.f32 %v1218, %v1314
  %v1316 = vpop.f32.mrf.mxu0
  %v1317 = vpop.f32.mrf.mxu0
  %v1318 = vadd.f32 %v1221, %v1317
  %v1319 = vpop.f32.mrf.mxu0
  %1320 = vmatprep.mubr.bf16.mxu0 %v529
  %1321 = vmatmul.mubr.bf16.gmra.mxu0 %v528
  %v1322 = vpop.f32.mrf.mxu0
  %v1323 = vadd.f32 %v1226, %v1322
  %v1324 = vpop.f32.mrf.mxu0
  %v1325 = vpop.f32.mrf.mxu0
  %v1326 = vadd.f32 %v1229, %v1325
  %v1327 = vpop.f32.mrf.mxu0
  %1328 = vmatprep.mubr.bf16.mxu0 %v538
  %1329 = vmatmul.mubr.bf16.gmra.mxu0 %v537
  %v1330 = vpop.f32.mrf.mxu0
  %v1331 = vadd.f32 %v1234, %v1330
  %v1332 = vpop.f32.mrf.mxu0
  %v1333 = vpop.f32.mrf.mxu0
  %v1334 = vadd.f32 %v1237, %v1333
  %v1335 = vpop.f32.mrf.mxu0
  %1336 = vdwg.mxu0
  %1337 = vmatprep.subr.bf16.mxu0 0
  %1338 = vmatpush1.bf16.msra.mxu0 %v957
  %1339 = vmatprep.subr.bf16.mxu0 0
  %1340 = vmatpush1.bf16.msra.mxu0 %v956
  %1341 = vmatprep.subr.bf16.mxu0 0
  %1342 = vmatpush1.bf16.msra.mxu0 %v955
  %1343 = vmatprep.subr.bf16.mxu0 0
  %1344 = vmatpush1.bf16.msra.mxu0 %v954
  %1345 = vmatprep.subr.bf16.mxu0 0
  %1346 = vmatpush1.bf16.msra.mxu0 %v953
  %1347 = vmatprep.subr.bf16.mxu0 0
  %1348 = vmatpush1.bf16.msra.mxu0 %v952
  %1349 = vmatprep.subr.bf16.mxu0 0
  %1350 = vmatpush1.bf16.msra.mxu0 %v951
  %1351 = vmatprep.subr.bf16.mxu0 0
  %1352 = vmatpush1.bf16.msra.mxu0 %v950
  %1353 = vmatprep.subr.bf16.mxu0 0
  %1354 = vmatpush2.bf16.msra.mxu0 %v965
  %1355 = vmatprep.subr.bf16.mxu0 0
  %1356 = vmatpush2.bf16.msra.mxu0 %v964
  %1357 = vmatprep.subr.bf16.mxu0 0
  %1358 = vmatpush2.bf16.msra.mxu0 %v963
  %1359 = vmatprep.subr.bf16.mxu0 0
  %1360 = vmatpush2.bf16.msra.mxu0 %v962
  %1361 = vmatprep.subr.bf16.mxu0 0
  %1362 = vmatpush2.bf16.msra.mxu0 %v961
  %1363 = vmatprep.subr.bf16.mxu0 0
  %1364 = vmatpush2.bf16.msra.mxu0 %v960
  %1365 = vmatprep.subr.bf16.mxu0 0
  %1366 = vmatpush2.bf16.msra.mxu0 %v959
  %1367 = vmatprep.subr.bf16.mxu0 0
  %1368 = vmatpush2.bf16.msra.mxu0 %v958
  %1369 = vmatprep.mubr.bf16.mxu0 %v477
  %1370 = vmatmul.mubr.bf16.gmra.mxu0 %v476
  %v1371 = vpop.f32.mrf.mxu0
  %v1372 = vadd.f32 %v1275, %v1371
  %v1373 = vpop.f32.mrf.mxu0
  %v1374 = vpop.f32.mrf.mxu0
  %v1375 = vadd.f32 %v1278, %v1374
  %v1376 = vpop.f32.mrf.mxu0
  %1377 = vmatprep.mubr.bf16.mxu0 %v486
  %1378 = vmatmul.mubr.bf16.gmra.mxu0 %v485
  %v1379 = vpop.f32.mrf.mxu0
  %v1380 = vadd.f32 %v1283, %v1379
  %v1381 = vpop.f32.mrf.mxu0
  %v1382 = vpop.f32.mrf.mxu0
  %v1383 = vadd.f32 %v1286, %v1382
  %v1384 = vpop.f32.mrf.mxu0
  %1385 = vmatprep.mubr.bf16.mxu0 %v495
  %1386 = vmatmul.mubr.bf16.gmra.mxu0 %v494
  %v1387 = vpop.f32.mrf.mxu0
  %v1388 = vadd.f32 %v1291, %v1387
  %v1389 = vpop.f32.mrf.mxu0
  %v1390 = vpop.f32.mrf.mxu0
  %v1391 = vadd.f32 %v1294, %v1390
  %v1392 = vpop.f32.mrf.mxu0
  %1393 = vmatprep.mubr.bf16.mxu0 %v504
  %1394 = vmatmul.mubr.bf16.gmra.mxu0 %v503
  %v1395 = vpop.f32.mrf.mxu0
  %v1396 = vadd.f32 %v1299, %v1395
  %v1397 = vpop.f32.mrf.mxu0
  %v1398 = vpop.f32.mrf.mxu0
  %v1399 = vadd.f32 %v1302, %v1398
  %v1400 = vpop.f32.mrf.mxu0
  %1401 = vmatprep.mubr.bf16.mxu0 %v513
  %1402 = vmatmul.mubr.bf16.gmra.mxu0 %v512
  %v1403 = vpop.f32.mrf.mxu0
  %v1404 = vadd.f32 %v1307, %v1403
  %v1405 = vpop.f32.mrf.mxu0
  %v1406 = vpop.f32.mrf.mxu0
  %v1407 = vadd.f32 %v1310, %v1406
  %v1408 = vpop.f32.mrf.mxu0
  %1409 = vmatprep.mubr.bf16.mxu0 %v522
  %1410 = vmatmul.mubr.bf16.gmra.mxu0 %v521
  %v1411 = vpop.f32.mrf.mxu0
  %v1412 = vadd.f32 %v1315, %v1411
  %v1413 = vpop.f32.mrf.mxu0
  %v1414 = vpop.f32.mrf.mxu0
  %v1415 = vadd.f32 %v1318, %v1414
  %v1416 = vpop.f32.mrf.mxu0
  %1417 = vmatprep.mubr.bf16.mxu0 %v531
  %1418 = vmatmul.mubr.bf16.gmra.mxu0 %v530
  %v1419 = vpop.f32.mrf.mxu0
  %v1420 = vadd.f32 %v1323, %v1419
  %v1421 = vpop.f32.mrf.mxu0
  %v1422 = vpop.f32.mrf.mxu0
  %v1423 = vadd.f32 %v1326, %v1422
  %v1424 = vpop.f32.mrf.mxu0
  %1425 = vmatprep.mubr.bf16.mxu0 %v540
  %1426 = vmatmul.mubr.bf16.gmra.mxu0 %v539
  %v1427 = vpop.f32.mrf.mxu0
  %v1428 = vadd.f32 %v1331, %v1427
  %v1429 = vpop.f32.mrf.mxu0
  %v1430 = vpop.f32.mrf.mxu0
  %v1431 = vadd.f32 %v1334, %v1430
  %v1432 = vpop.f32.mrf.mxu0
  %1433 = vdwg.mxu0
  %1434 = vmatprep.subr.bf16.mxu0 0
  %1435 = vmatpush1.bf16.msra.mxu0 %v973
  %1436 = vmatprep.subr.bf16.mxu0 0
  %1437 = vmatpush1.bf16.msra.mxu0 %v972
  %1438 = vmatprep.subr.bf16.mxu0 0
  %1439 = vmatpush1.bf16.msra.mxu0 %v971
  %1440 = vmatprep.subr.bf16.mxu0 0
  %1441 = vmatpush1.bf16.msra.mxu0 %v970
  %1442 = vmatprep.subr.bf16.mxu0 0
  %1443 = vmatpush1.bf16.msra.mxu0 %v969
  %1444 = vmatprep.subr.bf16.mxu0 0
  %1445 = vmatpush1.bf16.msra.mxu0 %v968
  %1446 = vmatprep.subr.bf16.mxu0 0
  %1447 = vmatpush1.bf16.msra.mxu0 %v967
  %1448 = vmatprep.subr.bf16.mxu0 0
  %1449 = vmatpush1.bf16.msra.mxu0 %v966
  %1450 = vmatprep.subr.bf16.mxu0 0
  %1451 = vmatpush2.bf16.msra.mxu0 0
  %1452 = vmatprep.subr.bf16.mxu0 0
  %1453 = vmatpush2.bf16.msra.mxu0 0
  %1454 = vmatprep.subr.bf16.mxu0 0
  %1455 = vmatpush2.bf16.msra.mxu0 0
  %1456 = vmatprep.subr.bf16.mxu0 0
  %1457 = vmatpush2.bf16.msra.mxu0 0
  %1458 = vmatprep.subr.bf16.mxu0 0
  %1459 = vmatpush2.bf16.msra.mxu0 0
  %1460 = vmatprep.subr.bf16.mxu0 0
  %1461 = vmatpush2.bf16.msra.mxu0 0
  %1462 = vmatprep.subr.bf16.mxu0 0
  %1463 = vmatpush2.bf16.msra.mxu0 0
  %1464 = vmatprep.subr.bf16.mxu0 0
  %1465 = vmatpush2.bf16.msra.mxu0 0
  %1466 = vmatprep.mubr.bf16.mxu0 0
  %1467 = vmatmul.mubr.bf16.gmra.mxu0 %v478
  %v1468 = vpop.f32.mrf.mxu0
  %v1469 = vadd.f32 %v1372, %v1468
  %v1470 = vpop.f32.mrf.mxu0
  %v1471 = vpop.f32.mrf.mxu0
  %v1472 = vadd.f32 %v1375, %v1471
  %v1473 = vpop.f32.mrf.mxu0
  %1474 = vmatprep.mubr.bf16.mxu0 0
  %1475 = vmatmul.mubr.bf16.gmra.mxu0 %v487
  %v1476 = vpop.f32.mrf.mxu0
  %v1477 = vadd.f32 %v1380, %v1476
  %v1478 = vpop.f32.mrf.mxu0
  %v1479 = vpop.f32.mrf.mxu0
  %v1480 = vadd.f32 %v1383, %v1479
  %v1481 = vpop.f32.mrf.mxu0
  %1482 = vmatprep.mubr.bf16.mxu0 0
  %1483 = vmatmul.mubr.bf16.gmra.mxu0 %v496
  %v1484 = vpop.f32.mrf.mxu0
  %v1485 = vadd.f32 %v1388, %v1484
  %v1486 = vpop.f32.mrf.mxu0
  %v1487 = vpop.f32.mrf.mxu0
  %v1488 = vadd.f32 %v1391, %v1487
  %v1489 = vpop.f32.mrf.mxu0
  %1490 = vmatprep.mubr.bf16.mxu0 0
  %1491 = vmatmul.mubr.bf16.gmra.mxu0 %v505
  %v1492 = vpop.f32.mrf.mxu0
  %v1493 = vadd.f32 %v1396, %v1492
  %v1494 = vpop.f32.mrf.mxu0
  %v1495 = vpop.f32.mrf.mxu0
  %v1496 = vadd.f32 %v1399, %v1495
  %v1497 = vpop.f32.mrf.mxu0
  %1498 = vmatprep.mubr.bf16.mxu0 0
  %1499 = vmatmul.mubr.bf16.gmra.mxu0 %v514
  %v1500 = vpop.f32.mrf.mxu0
  %v1501 = vadd.f32 %v1404, %v1500
  %v1502 = vpop.f32.mrf.mxu0
  %v1503 = vpop.f32.mrf.mxu0
  %v1504 = vadd.f32 %v1407, %v1503
  %v1505 = vpop.f32.mrf.mxu0
  %1506 = vmatprep.mubr.bf16.mxu0 0
  %1507 = vmatmul.mubr.bf16.gmra.mxu0 %v523
  %v1508 = vpop.f32.mrf.mxu0
  %v1509 = vadd.f32 %v1412, %v1508
  %v1510 = vpop.f32.mrf.mxu0
  %v1511 = vpop.f32.mrf.mxu0
  %v1512 = vadd.f32 %v1415, %v1511
  %v1513 = vpop.f32.mrf.mxu0
  %1514 = vmatprep.mubr.bf16.mxu0 0
  %1515 = vmatmul.mubr.bf16.gmra.mxu0 %v532
  %v1516 = vpop.f32.mrf.mxu0
  %v1517 = vadd.f32 %v1420, %v1516
  %v1518 = vpop.f32.mrf.mxu0
  %v1519 = vpop.f32.mrf.mxu0
  %v1520 = vadd.f32 %v1423, %v1519
  %v1521 = vpop.f32.mrf.mxu0
  %1522 = vmatprep.mubr.bf16.mxu0 0
  %1523 = vmatmul.mubr.bf16.gmra.mxu0 %v541
  %v1524 = vpop.f32.mrf.mxu0
  %v1525 = vadd.f32 %v1428, %v1524
  %v1526 = vpop.f32.mrf.mxu0
  %v1527 = vpop.f32.mrf.mxu0
  %v1528 = vadd.f32 %v1431, %v1527
  %v1529 = vpop.f32.mrf.mxu0
  %1530 = vdwg.mxu0
  %vm1531 = vcmp.ge.f32.partialorder %v1469, 0.0
  %vm1532 = vcmp.ge.f32.partialorder %v1472, 0.0
  %vm1533 = vcmp.ge.f32.partialorder %v1477, 0.0
  %vm1534 = vcmp.ge.f32.partialorder %v1480, 0.0
  %vm1535 = vcmp.ge.f32.partialorder %v1485, 0.0
  %vm1536 = vcmp.ge.f32.partialorder %v1488, 0.0
  %vm1537 = vcmp.ge.f32.partialorder %v1493, 0.0
  %vm1538 = vcmp.ge.f32.partialorder %v1496, 0.0
  %vm1539 = vcmp.ge.f32.partialorder %v1501, 0.0
  %vm1540 = vcmp.ge.f32.partialorder %v1504, 0.0
  %vm1541 = vcmp.ge.f32.partialorder %v1509, 0.0
  %vm1542 = vcmp.ge.f32.partialorder %v1512, 0.0
  %vm1543 = vcmp.ge.f32.partialorder %v1517, 0.0
  %vm1544 = vcmp.ge.f32.partialorder %v1520, 0.0
  %vm1545 = vcmp.ge.f32.partialorder %v1525, 0.0
  %vm1546 = vcmp.ge.f32.partialorder %v1528, 0.0
  %v1547 = vmul.f32 %v1469, 0.01
  %v1548 = vmul.f32 %v1472, 0.01
  %v1549 = vmul.f32 %v1477, 0.01
  %v1550 = vmul.f32 %v1480, 0.01
  %v1551 = vmul.f32 %v1485, 0.01
  %v1552 = vmul.f32 %v1488, 0.01
  %v1553 = vmul.f32 %v1493, 0.01
  %v1554 = vmul.f32 %v1496, 0.01
  %v1555 = vmul.f32 %v1501, 0.01
  %v1556 = vmul.f32 %v1504, 0.01
  %v1557 = vmul.f32 %v1509, 0.01
  %v1558 = vmul.f32 %v1512, 0.01
  %v1559 = vmul.f32 %v1517, 0.01
  %v1560 = vmul.f32 %v1520, 0.01
  %v1561 = vmul.f32 %v1525, 0.01
  %v1562 = vmul.f32 %v1528, 0.01
  %v1563 = vsel %vm1531, %v1469, %v1547
  %v1564 = vsel %vm1532, %v1472, %v1548
  %v1565 = vsel %vm1533, %v1477, %v1549
  %v1566 = vsel %vm1534, %v1480, %v1550
  %v1567 = vsel %vm1535, %v1485, %v1551
  %v1568 = vsel %vm1536, %v1488, %v1552
  %v1569 = vsel %vm1537, %v1493, %v1553
  %v1570 = vsel %vm1538, %v1496, %v1554
  %v1571 = vsel %vm1539, %v1501, %v1555
  %v1572 = vsel %vm1540, %v1504, %v1556
  %v1573 = vsel %vm1541, %v1509, %v1557
  %v1574 = vsel %vm1542, %v1512, %v1558
  %v1575 = vsel %vm1543, %v1517, %v1559
  %v1576 = vsel %vm1544, %v1520, %v1560
  %v1577 = vsel %vm1545, %v1525, %v1561
  %v1578 = vsel %vm1546, %v1528, %v1562
  %v1579 = vpack.c.bf16 %v1564, %v1563
  %v1580 = vpack.c.bf16 %v1566, %v1565
  %v1581 = vpack.c.bf16 %v1568, %v1567
  %v1582 = vpack.c.bf16 %v1570, %v1569
  %v1583 = vpack.c.bf16 %v1572, %v1571
  %v1584 = vpack.c.bf16 %v1574, %v1573
  %v1585 = vpack.c.bf16 %v1576, %v1575
  %v1586 = vpack.c.bf16 %v1578, %v1577
  %v1595 = vunpack.c.l.b16 %v1579
  %v1596 = vunpack.c.h.b16 %v1579
  %v1597 = vunpack.c.l.b16 %v1580
  %v1598 = vunpack.c.h.b16 %v1580
  %v1599 = vunpack.c.l.b16 %v1581
  %v1600 = vunpack.c.h.b16 %v1581
  %v1601 = vunpack.c.l.b16 %v1582
  %v1602 = vunpack.c.h.b16 %v1582
  %v1603 = vunpack.c.l.b16 %v1583
  %v1604 = vunpack.c.h.b16 %v1583
  %v1605 = vunpack.c.l.b16 %v1584
  %v1606 = vunpack.c.h.b16 %v1584
  %v1607 = vunpack.c.l.b16 %v1585
  %v1608 = vunpack.c.h.b16 %v1585
  %v1609 = vunpack.c.l.b16 %v1586
  %v1610 = vunpack.c.h.b16 %v1586
  %v1611 = vpack.c.b16 %v1595, %v1595
  %v1612 = vpack.c.b16 %v1596, %v1596
  %v1613 = vpack.c.b16 %v1597, %v1597
  %v1614 = vpack.c.b16 %v1598, %v1598
  %v1615 = vpack.c.b16 %v1599, %v1599
  %v1616 = vpack.c.b16 %v1600, %v1600
  %v1617 = vpack.c.b16 %v1601, %v1601
  %v1618 = vpack.c.b16 %v1602, %v1602
  %v1619 = vpack.c.b16 %v1603, %v1603
  %v1620 = vpack.c.b16 %v1604, %v1604
  %v1621 = vpack.c.b16 %v1605, %v1605
  %v1622 = vpack.c.b16 %v1606, %v1606
  %v1623 = vpack.c.b16 %v1607, %v1607
  %v1624 = vpack.c.b16 %v1608, %v1608
  %v1625 = vpack.c.b16 %v1609, %v1609
  %v1626 = vpack.c.b16 %v1610, %v1610
  %1643 = vst [vmem:[%s3] sm:$0xf] %v1611
  %1644 = vst [vmem:[%s3 + $0x4] sm:$0xf] %v1612
  %1645 = vst [vmem:[%s3 + $0x8] sm:$0xf] %v1613
  %1646 = vst [vmem:[%s3 + $0xc] sm:$0xf] %v1614
  %1647 = vst [vmem:[%s3 + $0x10] sm:$0xf] %v1615
  %1648 = vst [vmem:[%s3 + $0x14] sm:$0xf] %v1616
  %1649 = vst [vmem:[%s3 + $0x18] sm:$0xf] %v1617
  %1650 = vst [vmem:[%s3 + $0x1c] sm:$0xf] %v1618
  %1651 = vst [vmem:[%s3 + $0x20] sm:$0xf] %v1619
  %1652 = vst [vmem:[%s3 + $0x24] sm:$0xf] %v1620
  %1653 = vst [vmem:[%s3 + $0x28] sm:$0xf] %v1621
  %1654 = vst [vmem:[%s3 + $0x2c] sm:$0xf] %v1622
  %1655 = vst [vmem:[%s3 + $0x30] sm:$0xf] %v1623
  %1656 = vst [vmem:[%s3 + $0x34] sm:$0xf] %v1624
  %1657 = vst [vmem:[%s3 + $0x38] sm:$0xf] %v1625
  %1658 = vst [vmem:[%s3 + $0x3c] sm:$0xf] %v1626
  // Predicated region
  $region14: #{gradual_style_block_forward.5} parent=0 // pred_check
    _
  $region15: #{gradual_style_block_forward.5} parent=0 // pred_check_branch
    %1660 = sbr.rel (0) target = $region17
  $region16: #{gradual_style_block_forward.5} parent=0 // pred_region
    _
  $region17: #{gradual_style_block_forward.5} parent=0 // pred_fallthru
    _
  // Predicated region
  $region18: #{gradual_style_block_forward.5} parent=0 // pred_check
    _
  $region19: #{gradual_style_block_forward.5} parent=0 // pred_check_branch
    %1662 = sbr.rel (0) target = $region21
  $region20: #{gradual_style_block_forward.5} parent=0 // pred_region
    _
  $region21: #{gradual_style_block_forward.5} parent=0 // pred_fallthru
    _

// kernel: gradual_style_block_forward.9
$region0: #{gradual_style_block_forward.9}
  #allocation0 [shape = 'u32[]', space=smem, size = 0x4, offset = 0x4, fixed_abs, tag = 'smem constant byte address 0x4 - core index']
  #allocation1 [shape = 'u32[144,128]{1,0:T(1,128)}', space=vmem, size = 0x12000, scoped, tag = 'internal scratch']
  %s0 = inlined_call_operand.vmem [shape: bf16[16,128], index: 0, kind: input, shape index: {}]
  %s1 = inlined_call_operand.vmem [shape: bf16[128,128], index: 1, kind: input, shape index: {}]
  %s2 = inlined_call_operand.vmem [shape: f32[1,128], index: 2, kind: input, shape index: {}]
  %s3 = inlined_call_operand.vmem [shape: f32[16,128], index: 3, kind: output, shape index: {}]
  %s4 = sld [smem:[#allocation0]]
  $region22: #{gradual_style_block_forward.9} parent=0
    _
  %s6 = ssub.s32 1, %s4
  %s7 = scalar_select 0, %s6, %s4
  // Predicated region
  $region2: #{gradual_style_block_forward.9} parent=0 // pred_check
    _
  $region3: #{gradual_style_block_forward.9} parent=0 // pred_check_branch
    %9 = sbr.rel (0) target = $region5
  $region4: #{gradual_style_block_forward.9} parent=0 // pred_region
    _
  $region5: #{gradual_style_block_forward.9} parent=0 // pred_fallthru
    _
  // Predicated region
  $region6: #{gradual_style_block_forward.9} parent=0 // pred_check
    _
  $region7: #{gradual_style_block_forward.9} parent=0 // pred_check_branch
    %11 = sbr.rel (0) target = $region9
  $region8: #{gradual_style_block_forward.9} parent=0 // pred_region
    _
  $region9: #{gradual_style_block_forward.9} parent=0 // pred_fallthru
    _
  // Predicated region
  $region10: #{gradual_style_block_forward.9} parent=0 // pred_check
    _
  $region11: #{gradual_style_block_forward.9} parent=0 // pred_check_branch
    %13 = sbr.rel (0) target = $region13
  $region12: #{gradual_style_block_forward.9} parent=0 // pred_region
    _
  $region13: #{gradual_style_block_forward.9} parent=0 // pred_fallthru
    _
  %v15 = vld [vmem:[%s0] sm:$0xf]
  %v16 = vld [vmem:[%s0 + $0x4] sm:$0xf]
  %v17 = vld [vmem:[%s1] sm:$0xf]
  %v18 = vld [vmem:[%s1 + $0x4] sm:$0xf]
  %v19 = vld [vmem:[%s1 + $0x8] sm:$0xf]
  %v20 = vld [vmem:[%s1 + $0xc] sm:$0xf]
  %v21 = vld [vmem:[%s1 + $0x10] sm:$0xf]
  %v22 = vld [vmem:[%s1 + $0x14] sm:$0xf]
  %v23 = vld [vmem:[%s1 + $0x18] sm:$0xf]
  %v24 = vld [vmem:[%s1 + $0x1c] sm:$0xf]
  %v25 = vld [vmem:[%s1 + $0x20] sm:$0xf]
  %v26 = vld [vmem:[%s1 + $0x24] sm:$0xf]
  %v27 = vld [vmem:[%s1 + $0x28] sm:$0xf]
  %v28 = vld [vmem:[%s1 + $0x2c] sm:$0xf]
  %v29 = vld [vmem:[%s1 + $0x30] sm:$0xf]
  %v30 = vld [vmem:[%s1 + $0x34] sm:$0xf]
  %v31 = vld [vmem:[%s1 + $0x38] sm:$0xf]
  %v32 = vld [vmem:[%s1 + $0x3c] sm:$0xf]
  %v33 = vld [vmem:[%s2] sm:$0x1]
  %v35 = vlaneseq
  %v36 = vshrl.u32 %v35, 7
  %v37 = vsub.s32 0, %v36
  %v38 = vrot.slane %v33, %v37
  %v42 = vunpack.c.l.b16 %v15
  %v43 = vunpack.c.l.b16 %v16
  %v44 = vpack.c.b16 %v43, %v42
  %v62 = vunpack.c.l.b16 %v17
  %v63 = vunpack.c.l.b16 %v18
  %v64 = vunpack.c.l.b16 %v19
  %v65 = vunpack.c.l.b16 %v20
  %v66 = vunpack.c.l.b16 %v21
  %v67 = vunpack.c.l.b16 %v22
  %v68 = vunpack.c.l.b16 %v23
  %v69 = vunpack.c.l.b16 %v24
  %v70 = vunpack.c.l.b16 %v25
  %v71 = vunpack.c.l.b16 %v26
  %v72 = vunpack.c.l.b16 %v27
  %v73 = vunpack.c.l.b16 %v28
  %v74 = vunpack.c.l.b16 %v29
  %v75 = vunpack.c.l.b16 %v30
  %v76 = vunpack.c.l.b16 %v31
  %v77 = vunpack.c.l.b16 %v32
  %v78 = vpack.c.b16 %v63, %v62
  %v79 = vpack.c.b16 %v65, %v64
  %v80 = vpack.c.b16 %v67, %v66
  %v81 = vpack.c.b16 %v69, %v68
  %v82 = vpack.c.b16 %v71, %v70
  %v83 = vpack.c.b16 %v73, %v72
  %v84 = vpack.c.b16 %v75, %v74
  %v85 = vpack.c.b16 %v77, %v76
  %94 = vmatprep.subr.bf16.mxu0 0
  %95 = vmatpush1.bf16.msra.mxu0 %v85
  %96 = vmatprep.subr.bf16.mxu0 0
  %97 = vmatpush1.bf16.msra.mxu0 %v84
  %98 = vmatprep.subr.bf16.mxu0 0
  %99 = vmatpush1.bf16.msra.mxu0 %v83
  %100 = vmatprep.subr.bf16.mxu0 0
  %101 = vmatpush1.bf16.msra.mxu0 %v82
  %102 = vmatprep.subr.bf16.mxu0 0
  %103 = vmatpush1.bf16.msra.mxu0 %v81
  %104 = vmatprep.subr.bf16.mxu0 0
  %105 = vmatpush1.bf16.msra.mxu0 %v80
  %106 = vmatprep.subr.bf16.mxu0 0
  %107 = vmatpush1.bf16.msra.mxu0 %v79
  %108 = vmatprep.subr.bf16.mxu0 0
  %109 = vmatpush1.bf16.msra.mxu0 %v78
  %110 = vmatprep.subr.bf16.mxu0 0
  %111 = vmatpush2.bf16.msra.mxu0 0
  %112 = vmatprep.subr.bf16.mxu0 0
  %113 = vmatpush2.bf16.msra.mxu0 0
  %114 = vmatprep.subr.bf16.mxu0 0
  %115 = vmatpush2.bf16.msra.mxu0 0
  %116 = vmatprep.subr.bf16.mxu0 0
  %117 = vmatpush2.bf16.msra.mxu0 0
  %118 = vmatprep.subr.bf16.mxu0 0
  %119 = vmatpush2.bf16.msra.mxu0 0
  %120 = vmatprep.subr.bf16.mxu0 0
  %121 = vmatpush2.bf16.msra.mxu0 0
  %122 = vmatprep.subr.bf16.mxu0 0
  %123 = vmatpush2.bf16.msra.mxu0 0
  %124 = vmatprep.subr.bf16.mxu0 0
  %125 = vmatpush2.bf16.msra.mxu0 0
  %126 = vmatprep.mubr.bf16.mxu0 0
  %127 = vmatmul.mubr.bf16.gmra.mxu0 %v44
  %v128 = vpop.f32.mrf.mxu0
  %v129 = vadd.f32 %v38, %v128
  %v130 = vpop.f32.mrf.mxu0
  %v131 = vpop.f32.mrf.mxu0
  %v132 = vadd.f32 %v38, %v131
  %v133 = vpop.f32.mrf.mxu0
  %134 = vdwg.mxu0
  %135 = vst [vmem:[%s3] sm:$0xff] %v129
  %136 = vst [vmem:[%s3 + $0x8] sm:$0xff] %v132
  // Predicated region
  $region14: #{gradual_style_block_forward.9} parent=0 // pred_check
    _
  $region15: #{gradual_style_block_forward.9} parent=0 // pred_check_branch
    %138 = sbr.rel (0) target = $region17
  $region16: #{gradual_style_block_forward.9} parent=0 // pred_region
    _
  $region17: #{gradual_style_block_forward.9} parent=0 // pred_fallthru
    _
  // Predicated region
  $region18: #{gradual_style_block_forward.9} parent=0 // pred_check
    _
  $region19: #{gradual_style_block_forward.9} parent=0 // pred_check_branch
    %140 = sbr.rel (0) target = $region21
  $region20: #{gradual_style_block_forward.9} parent=0 // pred_region
    _
  $region21: #{gradual_style_block_forward.9} parent=0 // pred_fallthru
    _

// kernel: gradual_style_block_forward.7
$region0: #{gradual_style_block_forward.7}
  #allocation0 [shape = 'u32[]', space=smem, size = 0x4, offset = 0x4, fixed_abs, tag = 'smem constant byte address 0x4 - core index']
  #allocation1 [shape = 'u32[144,128]{1,0:T(1,128)}', space=vmem, size = 0x12000, scoped, tag = 'internal scratch']
  %s0 = inlined_call_operand.vmem [shape: bf16[16,1152], index: 0, kind: input, shape index: {}]
  %s1 = inlined_call_operand.vmem [shape: bf16[1152,128], index: 1, kind: input, shape index: {}]
  %s2 = inlined_call_operand.vmem [shape: f32[1,128], index: 2, kind: input, shape index: {}]
  %s3 = inlined_call_operand.vmem [shape: bf16[16,128], index: 3, kind: output, shape index: {}]
  %s4 = sld [smem:[#allocation0]]
  $region22: #{gradual_style_block_forward.7} parent=0
    _
  %s6 = ssub.s32 1, %s4
  %s7 = scalar_select 0, %s6, %s4
  // Predicated region
  $region2: #{gradual_style_block_forward.7} parent=0 // pred_check
    _
  $region3: #{gradual_style_block_forward.7} parent=0 // pred_check_branch
    %9 = sbr.rel (0) target = $region5
  $region4: #{gradual_style_block_forward.7} parent=0 // pred_region
    _
  $region5: #{gradual_style_block_forward.7} parent=0 // pred_fallthru
    _
  // Predicated region
  $region6: #{gradual_style_block_forward.7} parent=0 // pred_check
    _
  $region7: #{gradual_style_block_forward.7} parent=0 // pred_check_branch
    %11 = sbr.rel (0) target = $region9
  $region8: #{gradual_style_block_forward.7} parent=0 // pred_region
    _
  $region9: #{gradual_style_block_forward.7} parent=0 // pred_fallthru
    _
  // Predicated region
  $region10: #{gradual_style_block_forward.7} parent=0 // pred_check
    _
  $region11: #{gradual_style_block_forward.7} parent=0 // pred_check_branch
    %13 = sbr.rel (0) target = $region13
  $region12: #{gradual_style_block_forward.7} parent=0 // pred_region
    _
  $region13: #{gradual_style_block_forward.7} parent=0 // pred_fallthru
    _
  %v15 = vld [vmem:[%s0] sm:$0xff]
  %v16 = vld [vmem:[%s0 + $0x8] sm:$0xff]
  %v17 = vld [vmem:[%s0 + $0x10] sm:$0xff]
  %v18 = vld [vmem:[%s0 + $0x18] sm:$0xff]
  %v19 = vld [vmem:[%s0 + $0x20] sm:$0xf]
  %v20 = vld [vmem:[%s0 + $0x24] sm:$0xff]
  %v21 = vld [vmem:[%s0 + $0x2c] sm:$0xff]
  %v22 = vld [vmem:[%s0 + $0x34] sm:$0xff]
  %v23 = vld [vmem:[%s0 + $0x3c] sm:$0xff]
  %v24 = vld [vmem:[%s0 + $0x44] sm:$0xf]
  %v25 = vld [vmem:[%s1] sm:$0xf]
  %v26 = vld [vmem:[%s1 + $0x4] sm:$0xf]
  %v27 = vld [vmem:[%s1 + $0x8] sm:$0xf]
  %v28 = vld [vmem:[%s1 + $0xc] sm:$0xf]
  %v29 = vld [vmem:[%s1 + $0x10] sm:$0xf]
  %v30 = vld [vmem:[%s1 + $0x14] sm:$0xf]
  %v31 = vld [vmem:[%s1 + $0x18] sm:$0xf]
  %v32 = vld [vmem:[%s1 + $0x1c] sm:$0xf]
  %v33 = vld [vmem:[%s1 + $0x20] sm:$0xf]
  %v34 = vld [vmem:[%s1 + $0x24] sm:$0xf]
  %v35 = vld [vmem:[%s1 + $0x28] sm:$0xf]
  %v36 = vld [vmem:[%s1 + $0x2c] sm:$0xf]
  %v37 = vld [vmem:[%s1 + $0x30] sm:$0xf]
  %v38 = vld [vmem:[%s1 + $0x34] sm:$0xf]
  %v39 = vld [vmem:[%s1 + $0x38] sm:$0xf]
  %v40 = vld [vmem:[%s1 + $0x3c] sm:$0xf]
  %v41 = vld [vmem:[%s1 + $0x40] sm:$0xf]
  %v42 = vld [vmem:[%s1 + $0x44] sm:$0xf]
  %v43 = vld [vmem:[%s1 + $0x48] sm:$0xf]
  %v44 = vld [vmem:[%s1 + $0x4c] sm:$0xf]
  %v45 = vld [vmem:[%s1 + $0x50] sm:$0xf]
  %v46 = vld [vmem:[%s1 + $0x54] sm:$0xf]
  %v47 = vld [vmem:[%s1 + $0x58] sm:$0xf]
  %v48 = vld [vmem:[%s1 + $0x5c] sm:$0xf]
  %v49 = vld [vmem:[%s1 + $0x60] sm:$0xf]
  %v50 = vld [vmem:[%s1 + $0x64] sm:$0xf]
  %v51 = vld [vmem:[%s1 + $0x68] sm:$0xf]
  %v52 = vld [vmem:[%s1 + $0x6c] sm:$0xf]
  %v53 = vld [vmem:[%s1 + $0x70] sm:$0xf]
  %v54 = vld [vmem:[%s1 + $0x74] sm:$0xf]
  %v55 = vld [vmem:[%s1 + $0x78] sm:$0xf]
  %v56 = vld [vmem:[%s1 + $0x7c] sm:$0xf]
  %v57 = vld [vmem:[%s1 + $0x80] sm:$0xf]
  %v58 = vld [vmem:[%s1 + $0x84] sm:$0xf]
  %v59 = vld [vmem:[%s1 + $0x88] sm:$0xf]
  %v60 = vld [vmem:[%s1 + $0x8c] sm:$0xf]
  %v61 = vld [vmem:[%s1 + $0x90] sm:$0xf]
  %v62 = vld [vmem:[%s1 + $0x94] sm:$0xf]
  %v63 = vld [vmem:[%s1 + $0x98] sm:$0xf]
  %v64 = vld [vmem:[%s1 + $0x9c] sm:$0xf]
  %v65 = vld [vmem:[%s1 + $0xa0] sm:$0xf]
  %v66 = vld [vmem:[%s1 + $0xa4] sm:$0xf]
  %v67 = vld [vmem:[%s1 + $0xa8] sm:$0xf]
  %v68 = vld [vmem:[%s1 + $0xac] sm:$0xf]
  %v69 = vld [vmem:[%s1 + $0xb0] sm:$0xf]
  %v70 = vld [vmem:[%s1 + $0xb4] sm:$0xf]
  %v71 = vld [vmem:[%s1 + $0xb8] sm:$0xf]
  %v72 = vld [vmem:[%s1 + $0xbc] sm:$0xf]
  %v73 = vld [vmem:[%s1 + $0xc0] sm:$0xf]
  %v74 = vld [vmem:[%s1 + $0xc4] sm:$0xf]
  %v75 = vld [vmem:[%s1 + $0xc8] sm:$0xf]
  %v76 = vld [vmem:[%s1 + $0xcc] sm:$0xf]
  %v77 = vld [vmem:[%s1 + $0xd0] sm:$0xf]
  %v78 = vld [vmem:[%s1 + $0xd4] sm:$0xf]
  %v79 = vld [vmem:[%s1 + $0xd8] sm:$0xf]
  %v80 = vld [vmem:[%s1 + $0xdc] sm:$0xf]
  %v81 = vld [vmem:[%s1 + $0xe0] sm:$0xf]
  %v82 = vld [vmem:[%s1 + $0xe4] sm:$0xf]
  %v83 = vld [vmem:[%s1 + $0xe8] sm:$0xf]
  %v84 = vld [vmem:[%s1 + $0xec] sm:$0xf]
  %v85 = vld [vmem:[%s1 + $0xf0] sm:$0xf]
  %v86 = vld [vmem:[%s1 + $0xf4] sm:$0xf]
  %v87 = vld [vmem:[%s1 + $0xf8] sm:$0xf]
  %v88 = vld [vmem:[%s1 + $0xfc] sm:$0xf]
  %v89 = vld [vmem:[%s1 + $0x100] sm:$0xf]
  %v90 = vld [vmem:[%s1 + $0x104] sm:$0xf]
  %v91 = vld [vmem:[%s1 + $0x108] sm:$0xf]
  %v92 = vld [vmem:[%s1 + $0x10c] sm:$0xf]
  %v93 = vld [vmem:[%s1 + $0x110] sm:$0xf]
  %v94 = vld [vmem:[%s1 + $0x114] sm:$0xf]
  %v95 = vld [vmem:[%s1 + $0x118] sm:$0xf]
  %v96 = vld [vmem:[%s1 + $0x11c] sm:$0xf]
  %v97 = vld [vmem:[%s1 + $0x120] sm:$0xf]
  %v98 = vld [vmem:[%s1 + $0x124] sm:$0xf]
  %v99 = vld [vmem:[%s1 + $0x128] sm:$0xf]
  %v100 = vld [vmem:[%s1 + $0x12c] sm:$0xf]
  %v101 = vld [vmem:[%s1 + $0x130] sm:$0xf]
  %v102 = vld [vmem:[%s1 + $0x134] sm:$0xf]
  %v103 = vld [vmem:[%s1 + $0x138] sm:$0xf]
  %v104 = vld [vmem:[%s1 + $0x13c] sm:$0xf]
  %v105 = vld [vmem:[%s1 + $0x140] sm:$0xf]
  %v106 = vld [vmem:[%s1 + $0x144] sm:$0xf]
  %v107 = vld [vmem:[%s1 + $0x148] sm:$0xf]
  %v108 = vld [vmem:[%s1 + $0x14c] sm:$0xf]
  %v109 = vld [vmem:[%s1 + $0x150] sm:$0xf]
  %v110 = vld [vmem:[%s1 + $0x154] sm:$0xf]
  %v111 = vld [vmem:[%s1 + $0x158] sm:$0xf]
  %v112 = vld [vmem:[%s1 + $0x15c] sm:$0xf]
  %v113 = vld [vmem:[%s1 + $0x160] sm:$0xf]
  %v114 = vld [vmem:[%s1 + $0x164] sm:$0xf]
  %v115 = vld [vmem:[%s1 + $0x168] sm:$0xf]
  %v116 = vld [vmem:[%s1 + $0x16c] sm:$0xf]
  %v117 = vld [vmem:[%s1 + $0x170] sm:$0xf]
  %v118 = vld [vmem:[%s1 + $0x174] sm:$0xf]
  %v119 = vld [vmem:[%s1 + $0x178] sm:$0xf]
  %v120 = vld [vmem:[%s1 + $0x17c] sm:$0xf]
  %v121 = vld [vmem:[%s1 + $0x180] sm:$0xf]
  %v122 = vld [vmem:[%s1 + $0x184] sm:$0xf]
  %v123 = vld [vmem:[%s1 + $0x188] sm:$0xf]
  %v124 = vld [vmem:[%s1 + $0x18c] sm:$0xf]
  %v125 = vld [vmem:[%s1 + $0x190] sm:$0xf]
  %v126 = vld [vmem:[%s1 + $0x194] sm:$0xf]
  %v127 = vld [vmem:[%s1 + $0x198] sm:$0xf]
  %v128 = vld [vmem:[%s1 + $0x19c] sm:$0xf]
  %v129 = vld [vmem:[%s1 + $0x1a0] sm:$0xf]
  %v130 = vld [vmem:[%s1 + $0x1a4] sm:$0xf]
  %v131 = vld [vmem:[%s1 + $0x1a8] sm:$0xf]
  %v132 = vld [vmem:[%s1 + $0x1ac] sm:$0xf]
  %v133 = vld [vmem:[%s1 + $0x1b0] sm:$0xf]
  %v134 = vld [vmem:[%s1 + $0x1b4] sm:$0xf]
  %v135 = vld [vmem:[%s1 + $0x1b8] sm:$0xf]
  %v136 = vld [vmem:[%s1 + $0x1bc] sm:$0xf]
  %v137 = vld [vmem:[%s1 + $0x1c0] sm:$0xf]
  %v138 = vld [vmem:[%s1 + $0x1c4] sm:$0xf]
  %v139 = vld [vmem:[%s1 + $0x1c8] sm:$0xf]
  %v140 = vld [vmem:[%s1 + $0x1cc] sm:$0xf]
  %v141 = vld [vmem:[%s1 + $0x1d0] sm:$0xf]
  %v142 = vld [vmem:[%s1 + $0x1d4] sm:$0xf]
  %v143 = vld [vmem:[%s1 + $0x1d8] sm:$0xf]
  %v144 = vld [vmem:[%s1 + $0x1dc] sm:$0xf]
  %v145 = vld [vmem:[%s1 + $0x1e0] sm:$0xf]
  %v146 = vld [vmem:[%s1 + $0x1e4] sm:$0xf]
  %v147 = vld [vmem:[%s1 + $0x1e8] sm:$0xf]
  %v148 = vld [vmem:[%s1 + $0x1ec] sm:$0xf]
  %v149 = vld [vmem:[%s1 + $0x1f0] sm:$0xf]
  %v150 = vld [vmem:[%s1 + $0x1f4] sm:$0xf]
  %v151 = vld [vmem:[%s1 + $0x1f8] sm:$0xf]
  %v152 = vld [vmem:[%s1 + $0x1fc] sm:$0xf]
  %v153 = vld [vmem:[%s1 + $0x200] sm:$0xf]
  %v154 = vld [vmem:[%s1 + $0x204] sm:$0xf]
  %v155 = vld [vmem:[%s1 + $0x208] sm:$0xf]
  %v156 = vld [vmem:[%s1 + $0x20c] sm:$0xf]
  %v157 = vld [vmem:[%s1 + $0x210] sm:$0xf]
  %v158 = vld [vmem:[%s1 + $0x214] sm:$0xf]
  %v159 = vld [vmem:[%s1 + $0x218] sm:$0xf]
  %v160 = vld [vmem:[%s1 + $0x21c] sm:$0xf]
  %v161 = vld [vmem:[%s1 + $0x220] sm:$0xf]
  %v162 = vld [vmem:[%s1 + $0x224] sm:$0xf]
  %v163 = vld [vmem:[%s1 + $0x228] sm:$0xf]
  %v164 = vld [vmem:[%s1 + $0x22c] sm:$0xf]
  %v165 = vld [vmem:[%s1 + $0x230] sm:$0xf]
  %v166 = vld [vmem:[%s1 + $0x234] sm:$0xf]
  %v167 = vld [vmem:[%s1 + $0x238] sm:$0xf]
  %v168 = vld [vmem:[%s1 + $0x23c] sm:$0xf]
  %v169 = vld [vmem:[%s2] sm:$0x1]
  %v171 = vlaneseq
  %v172 = vshrl.u32 %v171, 7
  %v173 = vsub.s32 0, %v172
  %v174 = vrot.slane %v169, %v173
  %v186 = vunpack.c.l.b16 %v15
  %v187 = vunpack.c.h.b16 %v15
  %v188 = vunpack.c.l.b16 %v16
  %v189 = vunpack.c.h.b16 %v16
  %v190 = vunpack.c.l.b16 %v17
  %v191 = vunpack.c.h.b16 %v17
  %v192 = vunpack.c.l.b16 %v18
  %v193 = vunpack.c.h.b16 %v18
  %v194 = vunpack.c.l.b16 %v19
  %v195 = vunpack.c.l.b16 %v20
  %v196 = vunpack.c.h.b16 %v20
  %v197 = vunpack.c.l.b16 %v21
  %v198 = vunpack.c.h.b16 %v21
  %v199 = vunpack.c.l.b16 %v22
  %v200 = vunpack.c.h.b16 %v22
  %v201 = vunpack.c.l.b16 %v23
  %v202 = vunpack.c.h.b16 %v23
  %v203 = vunpack.c.l.b16 %v24
  %v204 = vpack.c.b16 %v195, %v186
  %v205 = vpack.c.b16 %v196, %v187
  %v206 = vpack.c.b16 %v197, %v188
  %v207 = vpack.c.b16 %v198, %v189
  %v208 = vpack.c.b16 %v199, %v190
  %v209 = vpack.c.b16 %v200, %v191
  %v210 = vpack.c.b16 %v201, %v192
  %v211 = vpack.c.b16 %v202, %v193
  %v212 = vpack.c.b16 %v203, %v194
  %v366 = vunpack.c.l.b16 %v25
  %v367 = vunpack.c.l.b16 %v26
  %v368 = vunpack.c.l.b16 %v27
  %v369 = vunpack.c.l.b16 %v28
  %v370 = vunpack.c.l.b16 %v29
  %v371 = vunpack.c.l.b16 %v30
  %v372 = vunpack.c.l.b16 %v31
  %v373 = vunpack.c.l.b16 %v32
  %v374 = vunpack.c.l.b16 %v33
  %v375 = vunpack.c.l.b16 %v34
  %v376 = vunpack.c.l.b16 %v35
  %v377 = vunpack.c.l.b16 %v36
  %v378 = vunpack.c.l.b16 %v37
  %v379 = vunpack.c.l.b16 %v38
  %v380 = vunpack.c.l.b16 %v39
  %v381 = vunpack.c.l.b16 %v40
  %v382 = vunpack.c.l.b16 %v41
  %v383 = vunpack.c.l.b16 %v42
  %v384 = vunpack.c.l.b16 %v43
  %v385 = vunpack.c.l.b16 %v44
  %v386 = vunpack.c.l.b16 %v45
  %v387 = vunpack.c.l.b16 %v46
  %v388 = vunpack.c.l.b16 %v47
  %v389 = vunpack.c.l.b16 %v48
  %v390 = vunpack.c.l.b16 %v49
  %v391 = vunpack.c.l.b16 %v50
  %v392 = vunpack.c.l.b16 %v51
  %v393 = vunpack.c.l.b16 %v52
  %v394 = vunpack.c.l.b16 %v53
  %v395 = vunpack.c.l.b16 %v54
  %v396 = vunpack.c.l.b16 %v55
  %v397 = vunpack.c.l.b16 %v56
  %v398 = vunpack.c.l.b16 %v57
  %v399 = vunpack.c.l.b16 %v58
  %v400 = vunpack.c.l.b16 %v59
  %v401 = vunpack.c.l.b16 %v60
  %v402 = vunpack.c.l.b16 %v61
  %v403 = vunpack.c.l.b16 %v62
  %v404 = vunpack.c.l.b16 %v63
  %v405 = vunpack.c.l.b16 %v64
  %v406 = vunpack.c.l.b16 %v65
  %v407 = vunpack.c.l.b16 %v66
  %v408 = vunpack.c.l.b16 %v67
  %v409 = vunpack.c.l.b16 %v68
  %v410 = vunpack.c.l.b16 %v69
  %v411 = vunpack.c.l.b16 %v70
  %v412 = vunpack.c.l.b16 %v71
  %v413 = vunpack.c.l.b16 %v72
  %v414 = vunpack.c.l.b16 %v73
  %v415 = vunpack.c.l.b16 %v74
  %v416 = vunpack.c.l.b16 %v75
  %v417 = vunpack.c.l.b16 %v76
  %v418 = vunpack.c.l.b16 %v77
  %v419 = vunpack.c.l.b16 %v78
  %v420 = vunpack.c.l.b16 %v79
  %v421 = vunpack.c.l.b16 %v80
  %v422 = vunpack.c.l.b16 %v81
  %v423 = vunpack.c.l.b16 %v82
  %v424 = vunpack.c.l.b16 %v83
  %v425 = vunpack.c.l.b16 %v84
  %v426 = vunpack.c.l.b16 %v85
  %v427 = vunpack.c.l.b16 %v86
  %v428 = vunpack.c.l.b16 %v87
  %v429 = vunpack.c.l.b16 %v88
  %v430 = vunpack.c.l.b16 %v89
  %v431 = vunpack.c.l.b16 %v90
  %v432 = vunpack.c.l.b16 %v91
  %v433 = vunpack.c.l.b16 %v92
  %v434 = vunpack.c.l.b16 %v93
  %v435 = vunpack.c.l.b16 %v94
  %v436 = vunpack.c.l.b16 %v95
  %v437 = vunpack.c.l.b16 %v96
  %v438 = vunpack.c.l.b16 %v97
  %v439 = vunpack.c.l.b16 %v98
  %v440 = vunpack.c.l.b16 %v99
  %v441 = vunpack.c.l.b16 %v100
  %v442 = vunpack.c.l.b16 %v101
  %v443 = vunpack.c.l.b16 %v102
  %v444 = vunpack.c.l.b16 %v103
  %v445 = vunpack.c.l.b16 %v104
  %v446 = vunpack.c.l.b16 %v105
  %v447 = vunpack.c.l.b16 %v106
  %v448 = vunpack.c.l.b16 %v107
  %v449 = vunpack.c.l.b16 %v108
  %v450 = vunpack.c.l.b16 %v109
  %v451 = vunpack.c.l.b16 %v110
  %v452 = vunpack.c.l.b16 %v111
  %v453 = vunpack.c.l.b16 %v112
  %v454 = vunpack.c.l.b16 %v113
  %v455 = vunpack.c.l.b16 %v114
  %v456 = vunpack.c.l.b16 %v115
  %v457 = vunpack.c.l.b16 %v116
  %v458 = vunpack.c.l.b16 %v117
  %v459 = vunpack.c.l.b16 %v118
  %v460 = vunpack.c.l.b16 %v119
  %v461 = vunpack.c.l.b16 %v120
  %v462 = vunpack.c.l.b16 %v121
  %v463 = vunpack.c.l.b16 %v122
  %v464 = vunpack.c.l.b16 %v123
  %v465 = vunpack.c.l.b16 %v124
  %v466 = vunpack.c.l.b16 %v125
  %v467 = vunpack.c.l.b16 %v126
  %v468 = vunpack.c.l.b16 %v127
  %v469 = vunpack.c.l.b16 %v128
  %v470 = vunpack.c.l.b16 %v129
  %v471 = vunpack.c.l.b16 %v130
  %v472 = vunpack.c.l.b16 %v131
  %v473 = vunpack.c.l.b16 %v132
  %v474 = vunpack.c.l.b16 %v133
  %v475 = vunpack.c.l.b16 %v134
  %v476 = vunpack.c.l.b16 %v135
  %v477 = vunpack.c.l.b16 %v136
  %v478 = vunpack.c.l.b16 %v137
  %v479 = vunpack.c.l.b16 %v138
  %v480 = vunpack.c.l.b16 %v139
  %v481 = vunpack.c.l.b16 %v140
  %v482 = vunpack.c.l.b16 %v141
  %v483 = vunpack.c.l.b16 %v142
  %v484 = vunpack.c.l.b16 %v143
  %v485 = vunpack.c.l.b16 %v144
  %v486 = vunpack.c.l.b16 %v145
  %v487 = vunpack.c.l.b16 %v146
  %v488 = vunpack.c.l.b16 %v147
  %v489 = vunpack.c.l.b16 %v148
  %v490 = vunpack.c.l.b16 %v149
  %v491 = vunpack.c.l.b16 %v150
  %v492 = vunpack.c.l.b16 %v151
  %v493 = vunpack.c.l.b16 %v152
  %v494 = vunpack.c.l.b16 %v153
  %v495 = vunpack.c.l.b16 %v154
  %v496 = vunpack.c.l.b16 %v155
  %v497 = vunpack.c.l.b16 %v156
  %v498 = vunpack.c.l.b16 %v157
  %v499 = vunpack.c.l.b16 %v158
  %v500 = vunpack.c.l.b16 %v159
  %v501 = vunpack.c.l.b16 %v160
  %v502 = vunpack.c.l.b16 %v161
  %v503 = vunpack.c.l.b16 %v162
  %v504 = vunpack.c.l.b16 %v163
  %v505 = vunpack.c.l.b16 %v164
  %v506 = vunpack.c.l.b16 %v165
  %v507 = vunpack.c.l.b16 %v166
  %v508 = vunpack.c.l.b16 %v167
  %v509 = vunpack.c.l.b16 %v168
  %v510 = vpack.c.b16 %v367, %v366
  %v511 = vpack.c.b16 %v369, %v368
  %v512 = vpack.c.b16 %v371, %v370
  %v513 = vpack.c.b16 %v373, %v372
  %v514 = vpack.c.b16 %v375, %v374
  %v515 = vpack.c.b16 %v377, %v376
  %v516 = vpack.c.b16 %v379, %v378
  %v517 = vpack.c.b16 %v381, %v380
  %v518 = vpack.c.b16 %v383, %v382
  %v519 = vpack.c.b16 %v385, %v384
  %v520 = vpack.c.b16 %v387, %v386
  %v521 = vpack.c.b16 %v389, %v388
  %v522 = vpack.c.b16 %v391, %v390
  %v523 = vpack.c.b16 %v393, %v392
  %v524 = vpack.c.b16 %v395, %v394
  %v525 = vpack.c.b16 %v397, %v396
  %v526 = vpack.c.b16 %v399, %v398
  %v527 = vpack.c.b16 %v401, %v400
  %v528 = vpack.c.b16 %v403, %v402
  %v529 = vpack.c.b16 %v405, %v404
  %v530 = vpack.c.b16 %v407, %v406
  %v531 = vpack.c.b16 %v409, %v408
  %v532 = vpack.c.b16 %v411, %v410
  %v533 = vpack.c.b16 %v413, %v412
  %v534 = vpack.c.b16 %v415, %v414
  %v535 = vpack.c.b16 %v417, %v416
  %v536 = vpack.c.b16 %v419, %v418
  %v537 = vpack.c.b16 %v421, %v420
  %v538 = vpack.c.b16 %v423, %v422
  %v539 = vpack.c.b16 %v425, %v424
  %v540 = vpack.c.b16 %v427, %v426
  %v541 = vpack.c.b16 %v429, %v428
  %v542 = vpack.c.b16 %v431, %v430
  %v543 = vpack.c.b16 %v433, %v432
  %v544 = vpack.c.b16 %v435, %v434
  %v545 = vpack.c.b16 %v437, %v436
  %v546 = vpack.c.b16 %v439, %v438
  %v547 = vpack.c.b16 %v441, %v440
  %v548 = vpack.c.b16 %v443, %v442
  %v549 = vpack.c.b16 %v445, %v444
  %v550 = vpack.c.b16 %v447, %v446
  %v551 = vpack.c.b16 %v449, %v448
  %v552 = vpack.c.b16 %v451, %v450
  %v553 = vpack.c.b16 %v453, %v452
  %v554 = vpack.c.b16 %v455, %v454
  %v555 = vpack.c.b16 %v457, %v456
  %v556 = vpack.c.b16 %v459, %v458
  %v557 = vpack.c.b16 %v461, %v460
  %v558 = vpack.c.b16 %v463, %v462
  %v559 = vpack.c.b16 %v465, %v464
  %v560 = vpack.c.b16 %v467, %v466
  %v561 = vpack.c.b16 %v469, %v468
  %v562 = vpack.c.b16 %v471, %v470
  %v563 = vpack.c.b16 %v473, %v472
  %v564 = vpack.c.b16 %v475, %v474
  %v565 = vpack.c.b16 %v477, %v476
  %v566 = vpack.c.b16 %v479, %v478
  %v567 = vpack.c.b16 %v481, %v480
  %v568 = vpack.c.b16 %v483, %v482
  %v569 = vpack.c.b16 %v485, %v484
  %v570 = vpack.c.b16 %v487, %v486
  %v571 = vpack.c.b16 %v489, %v488
  %v572 = vpack.c.b16 %v491, %v490
  %v573 = vpack.c.b16 %v493, %v492
  %v574 = vpack.c.b16 %v495, %v494
  %v575 = vpack.c.b16 %v497, %v496
  %v576 = vpack.c.b16 %v499, %v498
  %v577 = vpack.c.b16 %v501, %v500
  %v578 = vpack.c.b16 %v503, %v502
  %v579 = vpack.c.b16 %v505, %v504
  %v580 = vpack.c.b16 %v507, %v506
  %v581 = vpack.c.b16 %v509, %v508
  %654 = vmatprep.subr.bf16.mxu0 0
  %655 = vmatpush1.bf16.msra.mxu0 %v517
  %656 = vmatprep.subr.bf16.mxu0 0
  %657 = vmatpush1.bf16.msra.mxu0 %v516
  %658 = vmatprep.subr.bf16.mxu0 0
  %659 = vmatpush1.bf16.msra.mxu0 %v515
  %660 = vmatprep.subr.bf16.mxu0 0
  %661 = vmatpush1.bf16.msra.mxu0 %v514
  %662 = vmatprep.subr.bf16.mxu0 0
  %663 = vmatpush1.bf16.msra.mxu0 %v513
  %664 = vmatprep.subr.bf16.mxu0 0
  %665 = vmatpush1.bf16.msra.mxu0 %v512
  %666 = vmatprep.subr.bf16.mxu0 0
  %667 = vmatpush1.bf16.msra.mxu0 %v511
  %668 = vmatprep.subr.bf16.mxu0 0
  %669 = vmatpush1.bf16.msra.mxu0 %v510
  %670 = vmatprep.subr.bf16.mxu0 0
  %671 = vmatpush2.bf16.msra.mxu0 %v525
  %672 = vmatprep.subr.bf16.mxu0 0
  %673 = vmatpush2.bf16.msra.mxu0 %v524
  %674 = vmatprep.subr.bf16.mxu0 0
  %675 = vmatpush2.bf16.msra.mxu0 %v523
  %676 = vmatprep.subr.bf16.mxu0 0
  %677 = vmatpush2.bf16.msra.mxu0 %v522
  %678 = vmatprep.subr.bf16.mxu0 0
  %679 = vmatpush2.bf16.msra.mxu0 %v521
  %680 = vmatprep.subr.bf16.mxu0 0
  %681 = vmatpush2.bf16.msra.mxu0 %v520
  %682 = vmatprep.subr.bf16.mxu0 0
  %683 = vmatpush2.bf16.msra.mxu0 %v519
  %684 = vmatprep.subr.bf16.mxu0 0
  %685 = vmatpush2.bf16.msra.mxu0 %v518
  %686 = vmatprep.mubr.bf16.mxu0 %v205
  %687 = vmatmul.mubr.bf16.gmra.mxu0 %v204
  %v688 = vpop.f32.mrf.mxu0
  %v689 = vadd.f32 %v174, %v688
  %v690 = vpop.f32.mrf.mxu0
  %v691 = vpop.f32.mrf.mxu0
  %v692 = vadd.f32 %v174, %v691
  %v693 = vpop.f32.mrf.mxu0
  %694 = vdwg.mxu0
  %695 = vmatprep.subr.bf16.mxu0 0
  %696 = vmatpush1.bf16.msra.mxu0 %v533
  %697 = vmatprep.subr.bf16.mxu0 0
  %698 = vmatpush1.bf16.msra.mxu0 %v532
  %699 = vmatprep.subr.bf16.mxu0 0
  %700 = vmatpush1.bf16.msra.mxu0 %v531
  %701 = vmatprep.subr.bf16.mxu0 0
  %702 = vmatpush1.bf16.msra.mxu0 %v530
  %703 = vmatprep.subr.bf16.mxu0 0
  %704 = vmatpush1.bf16.msra.mxu0 %v529
  %705 = vmatprep.subr.bf16.mxu0 0
  %706 = vmatpush1.bf16.msra.mxu0 %v528
  %707 = vmatprep.subr.bf16.mxu0 0
  %708 = vmatpush1.bf16.msra.mxu0 %v527
  %709 = vmatprep.subr.bf16.mxu0 0
  %710 = vmatpush1.bf16.msra.mxu0 %v526
  %711 = vmatprep.subr.bf16.mxu0 0
  %712 = vmatpush2.bf16.msra.mxu0 %v541
  %713 = vmatprep.subr.bf16.mxu0 0
  %714 = vmatpush2.bf16.msra.mxu0 %v540
  %715 = vmatprep.subr.bf16.mxu0 0
  %716 = vmatpush2.bf16.msra.mxu0 %v539
  %717 = vmatprep.subr.bf16.mxu0 0
  %718 = vmatpush2.bf16.msra.mxu0 %v538
  %719 = vmatprep.subr.bf16.mxu0 0
  %720 = vmatpush2.bf16.msra.mxu0 %v537
  %721 = vmatprep.subr.bf16.mxu0 0
  %722 = vmatpush2.bf16.msra.mxu0 %v536
  %723 = vmatprep.subr.bf16.mxu0 0
  %724 = vmatpush2.bf16.msra.mxu0 %v535
  %725 = vmatprep.subr.bf16.mxu0 0
  %726 = vmatpush2.bf16.msra.mxu0 %v534
  %727 = vmatprep.mubr.bf16.mxu0 %v207
  %728 = vmatmul.mubr.bf16.gmra.mxu0 %v206
  %v729 = vpop.f32.mrf.mxu0
  %v730 = vadd.f32 %v689, %v729
  %v731 = vpop.f32.mrf.mxu0
  %v732 = vpop.f32.mrf.mxu0
  %v733 = vadd.f32 %v692, %v732
  %v734 = vpop.f32.mrf.mxu0
  %735 = vdwg.mxu0
  %736 = vmatprep.subr.bf16.mxu0 0
  %737 = vmatpush1.bf16.msra.mxu0 %v549
  %738 = vmatprep.subr.bf16.mxu0 0
  %739 = vmatpush1.bf16.msra.mxu0 %v548
  %740 = vmatprep.subr.bf16.mxu0 0
  %741 = vmatpush1.bf16.msra.mxu0 %v547
  %742 = vmatprep.subr.bf16.mxu0 0
  %743 = vmatpush1.bf16.msra.mxu0 %v546
  %744 = vmatprep.subr.bf16.mxu0 0
  %745 = vmatpush1.bf16.msra.mxu0 %v545
  %746 = vmatprep.subr.bf16.mxu0 0
  %747 = vmatpush1.bf16.msra.mxu0 %v544
  %748 = vmatprep.subr.bf16.mxu0 0
  %749 = vmatpush1.bf16.msra.mxu0 %v543
  %750 = vmatprep.subr.bf16.mxu0 0
  %751 = vmatpush1.bf16.msra.mxu0 %v542
  %752 = vmatprep.subr.bf16.mxu0 0
  %753 = vmatpush2.bf16.msra.mxu0 %v557
  %754 = vmatprep.subr.bf16.mxu0 0
  %755 = vmatpush2.bf16.msra.mxu0 %v556
  %756 = vmatprep.subr.bf16.mxu0 0
  %757 = vmatpush2.bf16.msra.mxu0 %v555
  %758 = vmatprep.subr.bf16.mxu0 0
  %759 = vmatpush2.bf16.msra.mxu0 %v554
  %760 = vmatprep.subr.bf16.mxu0 0
  %761 = vmatpush2.bf16.msra.mxu0 %v553
  %762 = vmatprep.subr.bf16.mxu0 0
  %763 = vmatpush2.bf16.msra.mxu0 %v552
  %764 = vmatprep.subr.bf16.mxu0 0
  %765 = vmatpush2.bf16.msra.mxu0 %v551
  %766 = vmatprep.subr.bf16.mxu0 0
  %767 = vmatpush2.bf16.msra.mxu0 %v550
  %768 = vmatprep.mubr.bf16.mxu0 %v209
  %769 = vmatmul.mubr.bf16.gmra.mxu0 %v208
  %v770 = vpop.f32.mrf.mxu0
  %v771 = vadd.f32 %v730, %v770
  %v772 = vpop.f32.mrf.mxu0
  %v773 = vpop.f32.mrf.mxu0
  %v774 = vadd.f32 %v733, %v773
  %v775 = vpop.f32.mrf.mxu0
  %776 = vdwg.mxu0
  %777 = vmatprep.subr.bf16.mxu0 0
  %778 = vmatpush1.bf16.msra.mxu0 %v565
  %779 = vmatprep.subr.bf16.mxu0 0
  %780 = vmatpush1.bf16.msra.mxu0 %v564
  %781 = vmatprep.subr.bf16.mxu0 0
  %782 = vmatpush1.bf16.msra.mxu0 %v563
  %783 = vmatprep.subr.bf16.mxu0 0
  %784 = vmatpush1.bf16.msra.mxu0 %v562
  %785 = vmatprep.subr.bf16.mxu0 0
  %786 = vmatpush1.bf16.msra.mxu0 %v561
  %787 = vmatprep.subr.bf16.mxu0 0
  %788 = vmatpush1.bf16.msra.mxu0 %v560
  %789 = vmatprep.subr.bf16.mxu0 0
  %790 = vmatpush1.bf16.msra.mxu0 %v559
  %791 = vmatprep.subr.bf16.mxu0 0
  %792 = vmatpush1.bf16.msra.mxu0 %v558
  %793 = vmatprep.subr.bf16.mxu0 0
  %794 = vmatpush2.bf16.msra.mxu0 %v573
  %795 = vmatprep.subr.bf16.mxu0 0
  %796 = vmatpush2.bf16.msra.mxu0 %v572
  %797 = vmatprep.subr.bf16.mxu0 0
  %798 = vmatpush2.bf16.msra.mxu0 %v571
  %799 = vmatprep.subr.bf16.mxu0 0
  %800 = vmatpush2.bf16.msra.mxu0 %v570
  %801 = vmatprep.subr.bf16.mxu0 0
  %802 = vmatpush2.bf16.msra.mxu0 %v569
  %803 = vmatprep.subr.bf16.mxu0 0
  %804 = vmatpush2.bf16.msra.mxu0 %v568
  %805 = vmatprep.subr.bf16.mxu0 0
  %806 = vmatpush2.bf16.msra.mxu0 %v567
  %807 = vmatprep.subr.bf16.mxu0 0
  %808 = vmatpush2.bf16.msra.mxu0 %v566
  %809 = vmatprep.mubr.bf16.mxu0 %v211
  %810 = vmatmul.mubr.bf16.gmra.mxu0 %v210
  %v811 = vpop.f32.mrf.mxu0
  %v812 = vadd.f32 %v771, %v811
  %v813 = vpop.f32.mrf.mxu0
  %v814 = vpop.f32.mrf.mxu0
  %v815 = vadd.f32 %v774, %v814
  %v816 = vpop.f32.mrf.mxu0
  %817 = vdwg.mxu0
  %818 = vmatprep.subr.bf16.mxu0 0
  %819 = vmatpush1.bf16.msra.mxu0 %v581
  %820 = vmatprep.subr.bf16.mxu0 0
  %821 = vmatpush1.bf16.msra.mxu0 %v580
  %822 = vmatprep.subr.bf16.mxu0 0
  %823 = vmatpush1.bf16.msra.mxu0 %v579
  %824 = vmatprep.subr.bf16.mxu0 0
  %825 = vmatpush1.bf16.msra.mxu0 %v578
  %826 = vmatprep.subr.bf16.mxu0 0
  %827 = vmatpush1.bf16.msra.mxu0 %v577
  %828 = vmatprep.subr.bf16.mxu0 0
  %829 = vmatpush1.bf16.msra.mxu0 %v576
  %830 = vmatprep.subr.bf16.mxu0 0
  %831 = vmatpush1.bf16.msra.mxu0 %v575
  %832 = vmatprep.subr.bf16.mxu0 0
  %833 = vmatpush1.bf16.msra.mxu0 %v574
  %834 = vmatprep.subr.bf16.mxu0 0
  %835 = vmatpush2.bf16.msra.mxu0 0
  %836 = vmatprep.subr.bf16.mxu0 0
  %837 = vmatpush2.bf16.msra.mxu0 0
  %838 = vmatprep.subr.bf16.mxu0 0
  %839 = vmatpush2.bf16.msra.mxu0 0
  %840 = vmatprep.subr.bf16.mxu0 0
  %841 = vmatpush2.bf16.msra.mxu0 0
  %842 = vmatprep.subr.bf16.mxu0 0
  %843 = vmatpush2.bf16.msra.mxu0 0
  %844 = vmatprep.subr.bf16.mxu0 0
  %845 = vmatpush2.bf16.msra.mxu0 0
  %846 = vmatprep.subr.bf16.mxu0 0
  %847 = vmatpush2.bf16.msra.mxu0 0
  %848 = vmatprep.subr.bf16.mxu0 0
  %849 = vmatpush2.bf16.msra.mxu0 0
  %850 = vmatprep.mubr.bf16.mxu0 0
  %851 = vmatmul.mubr.bf16.gmra.mxu0 %v212
  %v852 = vpop.f32.mrf.mxu0
  %v853 = vadd.f32 %v812, %v852
  %v854 = vpop.f32.mrf.mxu0
  %v855 = vpop.f32.mrf.mxu0
  %v856 = vadd.f32 %v815, %v855
  %v857 = vpop.f32.mrf.mxu0
  %858 = vdwg.mxu0
  %vm859 = vcmp.ge.f32.partialorder %v853, 0.0
  %vm860 = vcmp.ge.f32.partialorder %v856, 0.0
  %v861 = vmul.f32 %v853, 0.01
  %v862 = vmul.f32 %v856, 0.01
  %v863 = vsel %vm859, %v853, %v861
  %v864 = vsel %vm860, %v856, %v862
  %v865 = vpack.c.bf16 %v864, %v863
  %v867 = vunpack.c.l.b16 %v865
  %v868 = vunpack.c.h.b16 %v865
  %v869 = vpack.c.b16 %v867, %v867
  %v870 = vpack.c.b16 %v868, %v868
  %873 = vst [vmem:[%s3] sm:$0xf] %v869
  %874 = vst [vmem:[%s3 + $0x4] sm:$0xf] %v870
  // Predicated region
  $region14: #{gradual_style_block_forward.7} parent=0 // pred_check
    _
  $region15: #{gradual_style_block_forward.7} parent=0 // pred_check_branch
    %876 = sbr.rel (0) target = $region17
  $region16: #{gradual_style_block_forward.7} parent=0 // pred_region
    _
  $region17: #{gradual_style_block_forward.7} parent=0 // pred_fallthru
    _
  // Predicated region
  $region18: #{gradual_style_block_forward.7} parent=0 // pred_check
    _
  $region19: #{gradual_style_block_forward.7} parent=0 // pred_check_branch
    %878 = sbr.rel (0) target = $region21
  $region20: #{gradual_style_block_forward.7} parent=0 // pred_region
    _
  $region21: #{gradual_style_block_forward.7} parent=0 // pred_fallthru
    _

</llo_original>
